<compile_context>
chip_gen: v7x
topology: tpu7x:2x2x1
jax: 0.10.0
libtpu: 0.0.40
codegen_flags: <defaults>
</compile_context>

<pallas_src>
import functools

import jax
import jax.numpy as jnp
from jax.experimental import pallas as pl
from jax.experimental.pallas import tpu as pltpu


def _round_up(x, m):
    return -(-x // m) * m


def _resblock_kernel(w_ref, b_ref, x_ref, o_ref, *, H, W):
    """Fused 3x3 conv + bias + ReLU + residual for one image.

    w_ref: (9, Cp, Cp)   tap-major weight slab (resident across the grid)
    b_ref: (Cp, 1)       f32 bias column
    x_ref: (1, Cp, Lin)  zero-padded image, lane-flattened, Lin=(H+2)*(W+2)+2
    o_ref: (1, Cp, LW)   output, lane-flattened with row stride W+2, LW=H*(W+2)
    """
    Wp = W + 2
    LW = H * Wp
    xflat = x_ref[0]                               # (Cp, Lin), compute dtype

    conv = None
    resid = None
    for t in range(9):                             # static unroll: 9 taps
        dy, dx = divmod(t, 3)
        start = dy * Wp + dx
        # Contiguous lane slice: column j = h*(W+2)+w of `tap` holds
        # x_padded[:, h+dy, w+dx]; no in-kernel reshape/gather needed.
        tap = xflat[:, start:start + LW]
        part = jnp.dot(w_ref[t], tap, preferred_element_type=jnp.float32)
        conv = part if conv is None else conv + part
        if dy == 1 and dx == 1:
            resid = tap                            # center tap == original x

    y = jnp.maximum(conv + b_ref[...], 0.0)        # bias + ReLU (f32)
    y = y + resid.astype(jnp.float32)              # ResBlock: module(x) + x
    o_ref[...] = y[None].astype(o_ref.dtype)


def resblock_forward(x, w, b, *, compute_dtype=jnp.float32):
    """x: (N, C, H, W); w: (C, C, 3, 3) OIHW; b: (C,). Returns (N, C, H, W)."""
    N, C, H, W = x.shape
    out_dtype = x.dtype
    elt = jnp.dtype(compute_dtype).itemsize
    oelt = jnp.dtype(out_dtype).itemsize

    sub = 8 if elt >= 4 else 16                    # f32 / bf16 sublane multiple
    Cp = _round_up(C, sub)                         # dense vregs + dense MXU rows
    Wp = W + 2
    Lpad = (H + 2) * Wp
    Lin = Lpad + 2                                 # +2 keeps the (dy=2,dx=2) tap slice in bounds
    LW = H * Wp                                    # kernel output cols (2 junk cols per row)

    # --- layout plumbing (plain JAX): ~1x input stream, no 9x im2col ----------
    xc = jnp.pad(x.astype(compute_dtype),
                 ((0, 0), (0, Cp - C), (1, 1), (1, 1)))          # (N, Cp, H+2, W+2)
    xflat = jnp.pad(xc.reshape(N, Cp, Lpad), ((0, 0), (0, 0), (0, Lin - Lpad)))

    # Tap-major weight slab: w_slab[dy*3+dx] == w[:, :, dy, dx] (cross-correlation,
    # same as PyTorch Conv2d with padding=1).
    w_slab = jnp.pad(
        w.astype(compute_dtype).transpose(2, 3, 0, 1).reshape(9, C, C),
        ((0, 0), (0, Cp - C), (0, Cp - C)))
    b_col = jnp.pad(b.astype(jnp.float32).reshape(C, 1), ((0, Cp - C), (0, 0)))

    # --- generation-aware VMEM budget + cost hint -----------------------------
    block_bytes = (2 * Cp * Lin * elt              # double-buffered input block
                   + 2 * Cp * LW * oelt            # double-buffered output block
                   + 2 * (9 * Cp * Cp * elt + 4 * Cp)   # weights + bias
                   + 8 * Cp * LW * 4)              # in-kernel f32 intermediates
    try:
        vmem_cap = pltpu.get_tpu_info().vmem_capacity_bytes
    except Exception:                              # not on TPU / older API
        vmem_cap = 64 * 1024 * 1024                # conservative: v7x per-core VMEM
    vmem_limit = int(min(max(2 * block_bytes, 32 * 1024 * 1024), 0.9 * vmem_cap))

    cost = pl.CostEstimate(
        flops=2 * 9 * Cp * Cp * LW * N,
        transcendentals=0,
        bytes_accessed=N * Cp * (Lin * elt + LW * oelt) + 9 * Cp * Cp * elt + 4 * Cp)

    kernel = functools.partial(_resblock_kernel, H=H, W=W)

    def call(single_buffer_consts):
        # Weight/bias block index is constant across the grid -> one VMEM buffer
        # is enough; saves 9*Cp^2*elt bytes of double-buffer headroom (matters on
        # v7x's 64 MiB VMEM at large C).
        const_kw = dict(pipeline_mode=pl.Buffered(1)) if single_buffer_consts else {}
        return pl.pallas_call(
            kernel,
            out_shape=jax.ShapeDtypeStruct((N, Cp, LW), out_dtype),
            grid_spec=pltpu.PrefetchScalarGridSpec(
                num_scalar_prefetch=0,
                grid=(N,),                                       # >=2 steps -> both v7x TCs
                in_specs=[
                    pl.BlockSpec((9, Cp, Cp), lambda n: (0, 0, 0), **const_kw),
                    pl.BlockSpec((Cp, 1), lambda n: (0, 0), **const_kw),
                    pl.BlockSpec((1, Cp, Lin), lambda n: (n, 0, 0)),
                ],
                out_specs=pl.BlockSpec((1, Cp, LW), lambda n: (n, 0, 0)),
            ),
            compiler_params=pltpu.CompilerParams(
                dimension_semantics=("parallel",),
                vmem_limit_bytes=vmem_limit),
            cost_estimate=cost,
        )(w_slab, b_col, xflat)

    try:
        out_flat = call(True)
        jax.block_until_ready(out_flat)            # surface any failure here
    except Exception:
        out_flat = call(False)                     # fallback: default double-buffering

    # (N, Cp, H*(W+2)) -> (N, C, H, W): drop channel pad + the 2 junk cols/row.
    return out_flat.reshape(N, Cp, H, Wp)[:, :C, :, :W]


def _reference(x, w, b):
    # Pure-JAX reference: Conv2d(pad=1) + bias + ReLU + residual.
    y = jax.lax.conv_general_dilated(
        x, w, window_strides=(1, 1), padding="SAME",
        dimension_numbers=("NCHW", "OIHW", "NCHW"))
    y = y + b.reshape(1, -1, 1, 1)
    return jnp.maximum(y, 0.0) + x


if __name__ == "__main__":
    key = jax.random.PRNGKey(0)
    kx, kw, kb = jax.random.split(key, 3)

    N, C, H, W = 2, 4, 16, 16
    x = jax.random.normal(kx, (N, C, H, W), dtype=jnp.float32)
    # Deterministic synthetic params (Conv2d(C, C, 3, padding=1) shapes).
    fan_in = C * 3 * 3
    w = jax.random.normal(kw, (C, C, 3, 3), dtype=jnp.float32) / jnp.sqrt(fan_in)
    b = 0.01 * jax.random.normal(kb, (C,), dtype=jnp.float32)

    ref = _reference(x, w, b)

    # f32 operand path: tight tolerance.
    out = resblock_forward(x, w, b, compute_dtype=jnp.float32)
    jax.block_until_ready(out)
    assert out.shape == x.shape and out.dtype == x.dtype
    assert jnp.allclose(out, ref, atol=1e-4, rtol=1e-4), "f32 mismatch vs reference"

    # bf16 operand path (halved HBM stream, f32 accumulate): bf16-level tolerance.
    out_bf16 = resblock_forward(x, w, b, compute_dtype=jnp.bfloat16)
    jax.block_until_ready(out_bf16)
    assert jnp.allclose(out_bf16, ref, atol=5e-2, rtol=5e-2), "bf16 mismatch vs reference"

    print("KERNEL_OK")
</pallas_src>

<mosaic_0001>
module attributes {stable_mosaic.version = 11 : i64} {
  func.func @_resblock_kernel(%arg0: i32, %arg1: memref<9x8x8xf32, #tpu.memory_space<vmem>>, %arg2: memref<8x1xf32, #tpu.memory_space<vmem>>, %arg3: memref<1x8x326xf32, #tpu.memory_space<vmem>>, %arg4: memref<1x8x288xf32, #tpu.memory_space<vmem>>) attributes {dimension_semantics = [#tpu.dimension_semantics<parallel>], iteration_bounds = array<i64: 2>, scalar_prefetch = 0 : i64, scratch_operands = 0 : i64, tpu.core_type = #tpu.core_type<tc>, window_params = [{pipeline_mode = #tpu.pipeline_mode<synchronous>, transform_indices = @transform_0, window_bounds = array<i64: 9, 8, 8>}, {pipeline_mode = #tpu.pipeline_mode<synchronous>, transform_indices = @transform_1, window_bounds = array<i64: 8, 1>}, {transform_indices = @transform_2, window_bounds = array<i64: 1, 8, 326>}, {transform_indices = @transform_3, window_bounds = array<i64: 1, 8, 288>}]} {
    %c0 = arith.constant 0 : index
    %c0_0 = arith.constant 0 : index
    %c0_1 = arith.constant 0 : index
    %0 = vector.load %arg3[%c0, %c0_0, %c0_1] : memref<1x8x326xf32, #tpu.memory_space<vmem>>, vector<1x8x326xf32>
    %1 = vector.shape_cast %0 : vector<1x8x326xf32> to vector<8x326xf32>
    %2 = vector.extract_strided_slice %1 {offsets = [0, 0], sizes = [8, 288], strides = [1, 1]} : vector<8x326xf32> to vector<8x288xf32>
    %c0_2 = arith.constant 0 : index
    %c0_3 = arith.constant 0 : index
    %c0_4 = arith.constant 0 : index
    %3 = vector.load %arg1[%c0_2, %c0_3, %c0_4] : memref<9x8x8xf32, #tpu.memory_space<vmem>>, vector<1x8x8xf32>
    %4 = vector.shape_cast %3 : vector<1x8x8xf32> to vector<8x8xf32>
    %cst = arith.constant dense<0.000000e+00> : vector<8x288xf32>
    %5 = tpu.matmul %4, %2, %cst {dimension_numbers = #tpu.dot_dimension_numbers<[1], [0], [0], [1], [0, 0, 1, 1], [], []>} : vector<8x8xf32>, vector<8x288xf32>, vector<8x288xf32> -> vector<8x288xf32>
    %6 = vector.extract_strided_slice %1 {offsets = [0, 1], sizes = [8, 288], strides = [1, 1]} : vector<8x326xf32> to vector<8x288xf32>
    %c1 = arith.constant 1 : index
    %c0_5 = arith.constant 0 : index
    %c0_6 = arith.constant 0 : index
    %7 = vector.load %arg1[%c1, %c0_5, %c0_6] : memref<9x8x8xf32, #tpu.memory_space<vmem>>, vector<1x8x8xf32>
    %8 = vector.shape_cast %7 : vector<1x8x8xf32> to vector<8x8xf32>
    %cst_7 = arith.constant dense<0.000000e+00> : vector<8x288xf32>
    %9 = tpu.matmul %8, %6, %cst_7 {dimension_numbers = #tpu.dot_dimension_numbers<[1], [0], [0], [1], [0, 0, 1, 1], [], []>} : vector<8x8xf32>, vector<8x288xf32>, vector<8x288xf32> -> vector<8x288xf32>
    %10 = arith.addf %5, %9 : vector<8x288xf32>
    %11 = vector.extract_strided_slice %1 {offsets = [0, 2], sizes = [8, 288], strides = [1, 1]} : vector<8x326xf32> to vector<8x288xf32>
    %c2 = arith.constant 2 : index
    %c0_8 = arith.constant 0 : index
    %c0_9 = arith.constant 0 : index
    %12 = vector.load %arg1[%c2, %c0_8, %c0_9] : memref<9x8x8xf32, #tpu.memory_space<vmem>>, vector<1x8x8xf32>
    %13 = vector.shape_cast %12 : vector<1x8x8xf32> to vector<8x8xf32>
    %cst_10 = arith.constant dense<0.000000e+00> : vector<8x288xf32>
    %14 = tpu.matmul %13, %11, %cst_10 {dimension_numbers = #tpu.dot_dimension_numbers<[1], [0], [0], [1], [0, 0, 1, 1], [], []>} : vector<8x8xf32>, vector<8x288xf32>, vector<8x288xf32> -> vector<8x288xf32>
    %15 = arith.addf %10, %14 : vector<8x288xf32>
    %16 = vector.extract_strided_slice %1 {offsets = [0, 18], sizes = [8, 288], strides = [1, 1]} : vector<8x326xf32> to vector<8x288xf32>
    %c3 = arith.constant 3 : index
    %c0_11 = arith.constant 0 : index
    %c0_12 = arith.constant 0 : index
    %17 = vector.load %arg1[%c3, %c0_11, %c0_12] : memref<9x8x8xf32, #tpu.memory_space<vmem>>, vector<1x8x8xf32>
    %18 = vector.shape_cast %17 : vector<1x8x8xf32> to vector<8x8xf32>
    %cst_13 = arith.constant dense<0.000000e+00> : vector<8x288xf32>
    %19 = tpu.matmul %18, %16, %cst_13 {dimension_numbers = #tpu.dot_dimension_numbers<[1], [0], [0], [1], [0, 0, 1, 1], [], []>} : vector<8x8xf32>, vector<8x288xf32>, vector<8x288xf32> -> vector<8x288xf32>
    %20 = arith.addf %15, %19 : vector<8x288xf32>
    %21 = vector.extract_strided_slice %1 {offsets = [0, 19], sizes = [8, 288], strides = [1, 1]} : vector<8x326xf32> to vector<8x288xf32>
    %c4 = arith.constant 4 : index
    %c0_14 = arith.constant 0 : index
    %c0_15 = arith.constant 0 : index
    %22 = vector.load %arg1[%c4, %c0_14, %c0_15] : memref<9x8x8xf32, #tpu.memory_space<vmem>>, vector<1x8x8xf32>
    %23 = vector.shape_cast %22 : vector<1x8x8xf32> to vector<8x8xf32>
    %cst_16 = arith.constant dense<0.000000e+00> : vector<8x288xf32>
    %24 = tpu.matmul %23, %21, %cst_16 {dimension_numbers = #tpu.dot_dimension_numbers<[1], [0], [0], [1], [0, 0, 1, 1], [], []>} : vector<8x8xf32>, vector<8x288xf32>, vector<8x288xf32> -> vector<8x288xf32>
    %25 = arith.addf %20, %24 : vector<8x288xf32>
    %26 = vector.extract_strided_slice %1 {offsets = [0, 20], sizes = [8, 288], strides = [1, 1]} : vector<8x326xf32> to vector<8x288xf32>
    %c5 = arith.constant 5 : index
    %c0_17 = arith.constant 0 : index
    %c0_18 = arith.constant 0 : index
    %27 = vector.load %arg1[%c5, %c0_17, %c0_18] : memref<9x8x8xf32, #tpu.memory_space<vmem>>, vector<1x8x8xf32>
    %28 = vector.shape_cast %27 : vector<1x8x8xf32> to vector<8x8xf32>
    %cst_19 = arith.constant dense<0.000000e+00> : vector<8x288xf32>
    %29 = tpu.matmul %28, %26, %cst_19 {dimension_numbers = #tpu.dot_dimension_numbers<[1], [0], [0], [1], [0, 0, 1, 1], [], []>} : vector<8x8xf32>, vector<8x288xf32>, vector<8x288xf32> -> vector<8x288xf32>
    %30 = arith.addf %25, %29 : vector<8x288xf32>
    %31 = vector.extract_strided_slice %1 {offsets = [0, 36], sizes = [8, 288], strides = [1, 1]} : vector<8x326xf32> to vector<8x288xf32>
    %c6 = arith.constant 6 : index
    %c0_20 = arith.constant 0 : index
    %c0_21 = arith.constant 0 : index
    %32 = vector.load %arg1[%c6, %c0_20, %c0_21] : memref<9x8x8xf32, #tpu.memory_space<vmem>>, vector<1x8x8xf32>
    %33 = vector.shape_cast %32 : vector<1x8x8xf32> to vector<8x8xf32>
    %cst_22 = arith.constant dense<0.000000e+00> : vector<8x288xf32>
    %34 = tpu.matmul %33, %31, %cst_22 {dimension_numbers = #tpu.dot_dimension_numbers<[1], [0], [0], [1], [0, 0, 1, 1], [], []>} : vector<8x8xf32>, vector<8x288xf32>, vector<8x288xf32> -> vector<8x288xf32>
    %35 = arith.addf %30, %34 : vector<8x288xf32>
    %36 = vector.extract_strided_slice %1 {offsets = [0, 37], sizes = [8, 288], strides = [1, 1]} : vector<8x326xf32> to vector<8x288xf32>
    %c7 = arith.constant 7 : index
    %c0_23 = arith.constant 0 : index
    %c0_24 = arith.constant 0 : index
    %37 = vector.load %arg1[%c7, %c0_23, %c0_24] : memref<9x8x8xf32, #tpu.memory_space<vmem>>, vector<1x8x8xf32>
    %38 = vector.shape_cast %37 : vector<1x8x8xf32> to vector<8x8xf32>
    %cst_25 = arith.constant dense<0.000000e+00> : vector<8x288xf32>
    %39 = tpu.matmul %38, %36, %cst_25 {dimension_numbers = #tpu.dot_dimension_numbers<[1], [0], [0], [1], [0, 0, 1, 1], [], []>} : vector<8x8xf32>, vector<8x288xf32>, vector<8x288xf32> -> vector<8x288xf32>
    %40 = arith.addf %35, %39 : vector<8x288xf32>
    %41 = vector.extract_strided_slice %1 {offsets = [0, 38], sizes = [8, 288], strides = [1, 1]} : vector<8x326xf32> to vector<8x288xf32>
    %c8 = arith.constant 8 : index
    %c0_26 = arith.constant 0 : index
    %c0_27 = arith.constant 0 : index
    %42 = vector.load %arg1[%c8, %c0_26, %c0_27] : memref<9x8x8xf32, #tpu.memory_space<vmem>>, vector<1x8x8xf32>
    %43 = vector.shape_cast %42 : vector<1x8x8xf32> to vector<8x8xf32>
    %cst_28 = arith.constant dense<0.000000e+00> : vector<8x288xf32>
    %44 = tpu.matmul %43, %41, %cst_28 {dimension_numbers = #tpu.dot_dimension_numbers<[1], [0], [0], [1], [0, 0, 1, 1], [], []>} : vector<8x8xf32>, vector<8x288xf32>, vector<8x288xf32> -> vector<8x288xf32>
    %45 = arith.addf %40, %44 : vector<8x288xf32>
    %c0_29 = arith.constant 0 : index
    %c0_30 = arith.constant 0 : index
    %46 = vector.load %arg2[%c0_29, %c0_30] : memref<8x1xf32, #tpu.memory_space<vmem>>, vector<8x1xf32>
    %47 = vector.broadcast %46 : vector<8x1xf32> to vector<8x288xf32>
    %48 = arith.addf %45, %47 : vector<8x288xf32>
    %cst_31 = arith.constant 0.000000e+00 : f32
    %49 = vector.broadcast %cst_31 : f32 to vector<8x288xf32>
    %50 = arith.maximumf %48, %49 : vector<8x288xf32>
    %51 = arith.addf %50, %21 : vector<8x288xf32>
    %52 = vector.shape_cast %51 : vector<8x288xf32> to vector<1x8x288xf32>
    %c0_32 = arith.constant 0 : index
    %c0_33 = arith.constant 0 : index
    %c0_34 = arith.constant 0 : index
    %53 = vector.load %arg4[%c0_32, %c0_33, %c0_34] : memref<1x8x288xf32, #tpu.memory_space<vmem>>, vector<1x8x288xf32>
    tpu.vector_store %arg4[%c0_32, %c0_33, %c0_34], %52 {strides = array<i32>} : memref<1x8x288xf32, #tpu.memory_space<vmem>>, vector<1x8x288xf32>,
    return
  }
  func.func @transform_0(%arg0: i32) -> (i32, i32, i32) {
    %c0_i32 = arith.constant 0 : i32
    %c0_i32_0 = arith.constant 0 : i32
    %c0_i32_1 = arith.constant 0 : i32
    %c0_i32_2 = arith.constant 0 : i32
    return %c0_i32, %c0_i32_0, %c0_i32_1 : i32, i32, i32
  }
  func.func @transform_1(%arg0: i32) -> (i32, i32) {
    %c0_i32 = arith.constant 0 : i32
    %c0_i32_0 = arith.constant 0 : i32
    %c0_i32_1 = arith.constant 0 : i32
    return %c0_i32, %c0_i32_0 : i32, i32
  }
  func.func @transform_2(%arg0: i32) -> (i32, i32, i32) {
    %c0_i32 = arith.constant 0 : i32
    %c0_i32_0 = arith.constant 0 : i32
    %c0_i32_1 = arith.constant 0 : i32
    return %arg0, %c0_i32, %c0_i32_0 : i32, i32, i32
  }
  func.func @transform_3(%arg0: i32) -> (i32, i32, i32) {
    %c0_i32 = arith.constant 0 : i32
    %c0_i32_0 = arith.constant 0 : i32
    %c0_i32_1 = arith.constant 0 : i32
    return %arg0, %c0_i32, %c0_i32_0 : i32, i32, i32
  }
}

module attributes {stable_mosaic.version = 11 : i64} {
  func.func @_resblock_kernel(%arg0: i32, %arg1: memref<9x8x8xf32, #tpu.memory_space<vmem>>, %arg2: memref<8x1xf32, #tpu.memory_space<vmem>>, %arg3: memref<1x8x326xf32, #tpu.memory_space<vmem>>, %arg4: memref<1x8x288xf32, #tpu.memory_space<vmem>>) attributes {dimension_semantics = [#tpu.dimension_semantics<parallel>], iteration_bounds = array<i64: 2>, scalar_prefetch = 0 : i64, scratch_operands = 0 : i64, tpu.core_type = #tpu.core_type<tc>, window_params = [{pipeline_mode = #tpu.pipeline_mode<synchronous>, transform_indices = @transform_0, window_bounds = array<i64: 9, 8, 8>}, {pipeline_mode = #tpu.pipeline_mode<synchronous>, transform_indices = @transform_1, window_bounds = array<i64: 8, 1>}, {transform_indices = @transform_2, window_bounds = array<i64: 1, 8, 326>}, {transform_indices = @transform_3, window_bounds = array<i64: 1, 8, 288>}]} {
    %c0 = arith.constant 0 : index
    %c0_0 = arith.constant 0 : index
    %c0_1 = arith.constant 0 : index
    %0 = vector.load %arg3[%c0, %c0_0, %c0_1] : memref<1x8x326xf32, #tpu.memory_space<vmem>>, vector<1x8x326xf32>
    %1 = vector.shape_cast %0 : vector<1x8x326xf32> to vector<8x326xf32>
    %2 = vector.extract_strided_slice %1 {offsets = [0, 0], sizes = [8, 288], strides = [1, 1]} : vector<8x326xf32> to vector<8x288xf32>
    %c0_2 = arith.constant 0 : index
    %c0_3 = arith.constant 0 : index
    %c0_4 = arith.constant 0 : index
    %3 = vector.load %arg1[%c0_2, %c0_3, %c0_4] : memref<9x8x8xf32, #tpu.memory_space<vmem>>, vector<1x8x8xf32>
    %4 = vector.shape_cast %3 : vector<1x8x8xf32> to vector<8x8xf32>
    %cst = arith.constant dense<0.000000e+00> : vector<8x288xf32>
    %5 = tpu.matmul %4, %2, %cst {dimension_numbers = #tpu.dot_dimension_numbers<[1], [0], [0], [1], [0, 0, 1, 1], [], []>} : vector<8x8xf32>, vector<8x288xf32>, vector<8x288xf32> -> vector<8x288xf32>
    %6 = vector.extract_strided_slice %1 {offsets = [0, 1], sizes = [8, 288], strides = [1, 1]} : vector<8x326xf32> to vector<8x288xf32>
    %c1 = arith.constant 1 : index
    %c0_5 = arith.constant 0 : index
    %c0_6 = arith.constant 0 : index
    %7 = vector.load %arg1[%c1, %c0_5, %c0_6] : memref<9x8x8xf32, #tpu.memory_space<vmem>>, vector<1x8x8xf32>
    %8 = vector.shape_cast %7 : vector<1x8x8xf32> to vector<8x8xf32>
    %cst_7 = arith.constant dense<0.000000e+00> : vector<8x288xf32>
    %9 = tpu.matmul %8, %6, %cst_7 {dimension_numbers = #tpu.dot_dimension_numbers<[1], [0], [0], [1], [0, 0, 1, 1], [], []>} : vector<8x8xf32>, vector<8x288xf32>, vector<8x288xf32> -> vector<8x288xf32>
    %10 = arith.addf %5, %9 : vector<8x288xf32>
    %11 = vector.extract_strided_slice %1 {offsets = [0, 2], sizes = [8, 288], strides = [1, 1]} : vector<8x326xf32> to vector<8x288xf32>
    %c2 = arith.constant 2 : index
    %c0_8 = arith.constant 0 : index
    %c0_9 = arith.constant 0 : index
    %12 = vector.load %arg1[%c2, %c0_8, %c0_9] : memref<9x8x8xf32, #tpu.memory_space<vmem>>, vector<1x8x8xf32>
    %13 = vector.shape_cast %12 : vector<1x8x8xf32> to vector<8x8xf32>
    %cst_10 = arith.constant dense<0.000000e+00> : vector<8x288xf32>
    %14 = tpu.matmul %13, %11, %cst_10 {dimension_numbers = #tpu.dot_dimension_numbers<[1], [0], [0], [1], [0, 0, 1, 1], [], []>} : vector<8x8xf32>, vector<8x288xf32>, vector<8x288xf32> -> vector<8x288xf32>
    %15 = arith.addf %10, %14 : vector<8x288xf32>
    %16 = vector.extract_strided_slice %1 {offsets = [0, 18], sizes = [8, 288], strides = [1, 1]} : vector<8x326xf32> to vector<8x288xf32>
    %c3 = arith.constant 3 : index
    %c0_11 = arith.constant 0 : index
    %c0_12 = arith.constant 0 : index
    %17 = vector.load %arg1[%c3, %c0_11, %c0_12] : memref<9x8x8xf32, #tpu.memory_space<vmem>>, vector<1x8x8xf32>
    %18 = vector.shape_cast %17 : vector<1x8x8xf32> to vector<8x8xf32>
    %cst_13 = arith.constant dense<0.000000e+00> : vector<8x288xf32>
    %19 = tpu.matmul %18, %16, %cst_13 {dimension_numbers = #tpu.dot_dimension_numbers<[1], [0], [0], [1], [0, 0, 1, 1], [], []>} : vector<8x8xf32>, vector<8x288xf32>, vector<8x288xf32> -> vector<8x288xf32>
    %20 = arith.addf %15, %19 : vector<8x288xf32>
    %21 = vector.extract_strided_slice %1 {offsets = [0, 19], sizes = [8, 288], strides = [1, 1]} : vector<8x326xf32> to vector<8x288xf32>
    %c4 = arith.constant 4 : index
    %c0_14 = arith.constant 0 : index
    %c0_15 = arith.constant 0 : index
    %22 = vector.load %arg1[%c4, %c0_14, %c0_15] : memref<9x8x8xf32, #tpu.memory_space<vmem>>, vector<1x8x8xf32>
    %23 = vector.shape_cast %22 : vector<1x8x8xf32> to vector<8x8xf32>
    %cst_16 = arith.constant dense<0.000000e+00> : vector<8x288xf32>
    %24 = tpu.matmul %23, %21, %cst_16 {dimension_numbers = #tpu.dot_dimension_numbers<[1], [0], [0], [1], [0, 0, 1, 1], [], []>} : vector<8x8xf32>, vector<8x288xf32>, vector<8x288xf32> -> vector<8x288xf32>
    %25 = arith.addf %20, %24 : vector<8x288xf32>
    %26 = vector.extract_strided_slice %1 {offsets = [0, 20], sizes = [8, 288], strides = [1, 1]} : vector<8x326xf32> to vector<8x288xf32>
    %c5 = arith.constant 5 : index
    %c0_17 = arith.constant 0 : index
    %c0_18 = arith.constant 0 : index
    %27 = vector.load %arg1[%c5, %c0_17, %c0_18] : memref<9x8x8xf32, #tpu.memory_space<vmem>>, vector<1x8x8xf32>
    %28 = vector.shape_cast %27 : vector<1x8x8xf32> to vector<8x8xf32>
    %cst_19 = arith.constant dense<0.000000e+00> : vector<8x288xf32>
    %29 = tpu.matmul %28, %26, %cst_19 {dimension_numbers = #tpu.dot_dimension_numbers<[1], [0], [0], [1], [0, 0, 1, 1], [], []>} : vector<8x8xf32>, vector<8x288xf32>, vector<8x288xf32> -> vector<8x288xf32>
    %30 = arith.addf %25, %29 : vector<8x288xf32>
    %31 = vector.extract_strided_slice %1 {offsets = [0, 36], sizes = [8, 288], strides = [1, 1]} : vector<8x326xf32> to vector<8x288xf32>
    %c6 = arith.constant 6 : index
    %c0_20 = arith.constant 0 : index
    %c0_21 = arith.constant 0 : index
    %32 = vector.load %arg1[%c6, %c0_20, %c0_21] : memref<9x8x8xf32, #tpu.memory_space<vmem>>, vector<1x8x8xf32>
    %33 = vector.shape_cast %32 : vector<1x8x8xf32> to vector<8x8xf32>
    %cst_22 = arith.constant dense<0.000000e+00> : vector<8x288xf32>
    %34 = tpu.matmul %33, %31, %cst_22 {dimension_numbers = #tpu.dot_dimension_numbers<[1], [0], [0], [1], [0, 0, 1, 1], [], []>} : vector<8x8xf32>, vector<8x288xf32>, vector<8x288xf32> -> vector<8x288xf32>
    %35 = arith.addf %30, %34 : vector<8x288xf32>
    %36 = vector.extract_strided_slice %1 {offsets = [0, 37], sizes = [8, 288], strides = [1, 1]} : vector<8x326xf32> to vector<8x288xf32>
    %c7 = arith.constant 7 : index
    %c0_23 = arith.constant 0 : index
    %c0_24 = arith.constant 0 : index
    %37 = vector.load %arg1[%c7, %c0_23, %c0_24] : memref<9x8x8xf32, #tpu.memory_space<vmem>>, vector<1x8x8xf32>
    %38 = vector.shape_cast %37 : vector<1x8x8xf32> to vector<8x8xf32>
    %cst_25 = arith.constant dense<0.000000e+00> : vector<8x288xf32>
    %39 = tpu.matmul %38, %36, %cst_25 {dimension_numbers = #tpu.dot_dimension_numbers<[1], [0], [0], [1], [0, 0, 1, 1], [], []>} : vector<8x8xf32>, vector<8x288xf32>, vector<8x288xf32> -> vector<8x288xf32>
    %40 = arith.addf %35, %39 : vector<8x288xf32>
    %41 = vector.extract_strided_slice %1 {offsets = [0, 38], sizes = [8, 288], strides = [1, 1]} : vector<8x326xf32> to vector<8x288xf32>
    %c8 = arith.constant 8 : index
    %c0_26 = arith.constant 0 : index
    %c0_27 = arith.constant 0 : index
    %42 = vector.load %arg1[%c8, %c0_26, %c0_27] : memref<9x8x8xf32, #tpu.memory_space<vmem>>, vector<1x8x8xf32>
    %43 = vector.shape_cast %42 : vector<1x8x8xf32> to vector<8x8xf32>
    %cst_28 = arith.constant dense<0.000000e+00> : vector<8x288xf32>
    %44 = tpu.matmul %43, %41, %cst_28 {dimension_numbers = #tpu.dot_dimension_numbers<[1], [0], [0], [1], [0, 0, 1, 1], [], []>} : vector<8x8xf32>, vector<8x288xf32>, vector<8x288xf32> -> vector<8x288xf32>
    %45 = arith.addf %40, %44 : vector<8x288xf32>
    %c0_29 = arith.constant 0 : index
    %c0_30 = arith.constant 0 : index
    %46 = vector.load %arg2[%c0_29, %c0_30] : memref<8x1xf32, #tpu.memory_space<vmem>>, vector<8x1xf32>
    %47 = vector.broadcast %46 : vector<8x1xf32> to vector<8x288xf32>
    %48 = arith.addf %45, %47 : vector<8x288xf32>
    %cst_31 = arith.constant 0.000000e+00 : f32
    %49 = vector.broadcast %cst_31 : f32 to vector<8x288xf32>
    %50 = arith.maximumf %48, %49 : vector<8x288xf32>
    %51 = arith.addf %50, %21 : vector<8x288xf32>
    %52 = vector.shape_cast %51 : vector<8x288xf32> to vector<1x8x288xf32>
    %c0_32 = arith.constant 0 : index
    %c0_33 = arith.constant 0 : index
    %c0_34 = arith.constant 0 : index
    %53 = vector.load %arg4[%c0_32, %c0_33, %c0_34] : memref<1x8x288xf32, #tpu.memory_space<vmem>>, vector<1x8x288xf32>
    tpu.vector_store %arg4[%c0_32, %c0_33, %c0_34], %52 {strides = array<i32>} : memref<1x8x288xf32, #tpu.memory_space<vmem>>, vector<1x8x288xf32>,
    return
  }
  func.func @transform_0(%arg0: i32) -> (i32, i32, i32) {
    %c0_i32 = arith.constant 0 : i32
    %c0_i32_0 = arith.constant 0 : i32
    %c0_i32_1 = arith.constant 0 : i32
    %c0_i32_2 = arith.constant 0 : i32
    return %c0_i32, %c0_i32_0, %c0_i32_1 : i32, i32, i32
  }
  func.func @transform_1(%arg0: i32) -> (i32, i32) {
    %c0_i32 = arith.constant 0 : i32
    %c0_i32_0 = arith.constant 0 : i32
    %c0_i32_1 = arith.constant 0 : i32
    return %c0_i32, %c0_i32_0 : i32, i32
  }
  func.func @transform_2(%arg0: i32) -> (i32, i32, i32) {
    %c0_i32 = arith.constant 0 : i32
    %c0_i32_0 = arith.constant 0 : i32
    %c0_i32_1 = arith.constant 0 : i32
    return %arg0, %c0_i32, %c0_i32_0 : i32, i32, i32
  }
  func.func @transform_3(%arg0: i32) -> (i32, i32, i32) {
    %c0_i32 = arith.constant 0 : i32
    %c0_i32_0 = arith.constant 0 : i32
    %c0_i32_1 = arith.constant 0 : i32
    return %arg0, %c0_i32, %c0_i32_0 : i32, i32, i32
  }
}

</mosaic_0001>

<llo_original>
// kernel: tpu_custom_call.1
$region0: #{tpu_custom_call.1}
  #allocation0 [shape = 'u32[]', space=smem, size = 0x4, offset = 0x4, fixed_abs, tag = 'smem constant byte address 0x4 - core index']
  #allocation1 [shape = 'u32[144,128]{1,0:T(1,128)}', space=vmem, size = 0x12000, scoped, tag = 'internal scratch']
  %s0 = inlined_call_operand.vmem [shape: f32[9,8,8], index: 0, kind: input, shape index: {}]
  %s1 = inlined_call_operand.vmem [shape: f32[8,1], index: 1, kind: input, shape index: {}]
  %s2 = inlined_call_operand.vmem [shape: f32[2,8,326], index: 2, kind: input, shape index: {}]
  %s3 = inlined_call_operand.hbm [shape: f32[2,8,288], index: 3, kind: output, shape index: {}]
  %s4 = sld [smem:[#allocation0]]
  $region45: #{tpu_custom_call.1} parent=0
    _
  %s6 = ssub.s32 1, %s4
  %s7 = scalar_select 0, %s6, %s4
  $region1: #{tpu_custom_call.1} parent=0
    #allocation2 [shape = 'u8[24576]{0}', space=vmem, size = 0x6000, scoped, tag = 'output window, operand 0']
    #allocation3 [shape = 's32[2]{0}', space=sflag, size = 0x8, scoped, tag = 'scoped memory for tpu_custom_call.1']
    %8 = vsyncpa [#allocation3], 0
    %s9 = scalar_lea.sflag [#allocation3], 1
    %10 = vsyncpa %s9, 0
    loop: start=0, step=1, limit=4
    $region2: #{tpu_custom_call.1} parent=1 // loop_pre_header
      _
    $region3: #{tpu_custom_call.1} parent=1 // loop_header
      %s12 = sphi 0, %s16
      %p13 = scmp.ge.s32.totalorder %s12, 4
      %s20 = sphi 0, %s20
      %s22 = sphi 0, %s20
      %s23 = sphi 0, %s22
      %s37 = sphi 0, %s23
      %s41 = sphi 0, %s41
      %s43 = sphi 0, %s41
      %s44 = sphi 0, %s43
      %s58 = sphi 0, %s44
      %s64 = sphi 0, %s66
      %s67 = sphi 0, %s64
      %s68 = sphi 0, %s67
      %s84 = sphi 0, %s68
      %s90 = sphi 0, %s92
      %s93 = sphi 0, %s90
      %s94 = sphi 0, %s93
      %s110 = sphi 0, %s94
    $region4: #{tpu_custom_call.1} parent=1 // loop_header_branch
      %15 = sbr.rel (%p13) target = $region8
    $region5: #{tpu_custom_call.1} parent=1 // loop_body
      %s17 = ssub.s32 %s12, 1
      %s18 = ssub.s32 %s12, 2
      %s19 = sadd.s32 %s12, 1
      %s21 = sadd.s32 %s20, 1
      %p24 = scmp.eq.s32.totalorder %s12, 1
      %p25 = scmp.ne.s32.totalorder %s20, %s22
      %p26 = scmp.eq.s32.totalorder %s12, 0
      %p27 = por %p25, %p26
      %p28 = scmp.ne.s32.totalorder %s20, %s22
      %p29 = scmp.eq.s32.totalorder %s17, 1
      %p30 = por %p28, %p29
      %p31 = scmp.ne.s32.totalorder %s22, %s23
      %p32 = scmp.eq.s32.totalorder %s17, 0
      %p33 = por %p31, %p32
      %p34 = scmp.ne.s32.totalorder %s22, %s23
      %p35 = scmp.eq.s32.totalorder %s18, 1
      %p36 = por %p34, %p35
      %p38 = scmp.ne.s32.totalorder %s23, %s37
      %p39 = scmp.eq.s32.totalorder %s18, 0
      %p40 = por %p38, %p39
      %s42 = sadd.s32 %s41, 1
      %p45 = scmp.eq.s32.totalorder %s12, 1
      %p46 = scmp.ne.s32.totalorder %s41, %s43
      %p47 = scmp.eq.s32.totalorder %s12, 0
      %p48 = por %p46, %p47
      %p49 = scmp.ne.s32.totalorder %s41, %s43
      %p50 = scmp.eq.s32.totalorder %s17, 1
      %p51 = por %p49, %p50
      %p52 = scmp.ne.s32.totalorder %s43, %s44
      %p53 = scmp.eq.s32.totalorder %s17, 0
      %p54 = por %p52, %p53
      %p55 = scmp.ne.s32.totalorder %s43, %s44
      %p56 = scmp.eq.s32.totalorder %s18, 1
      %p57 = por %p55, %p56
      %p59 = scmp.ne.s32.totalorder %s44, %s58
      %p60 = scmp.eq.s32.totalorder %s18, 0
      %p61 = por %p59, %p60
      %s62 = ssub.s32 %s12, %s19
      %p63 = scmp.eq.s32.totalorder %s62, 0
      %s65 = sadd.s32 %s64, 1
      %s66 = scalar_select %p63, %s64, %s65
      %p69 = pneg %p63
      %p70 = scmp.eq.s32.totalorder %s12, 1
      %p71 = por %p69, %p70
      %p72 = scmp.ne.s32.totalorder %s64, %s67
      %p73 = scmp.eq.s32.totalorder %s12, 0
      %p74 = por %p72, %p73
      %p75 = scmp.ne.s32.totalorder %s64, %s67
      %p76 = scmp.eq.s32.totalorder %s17, 1
      %p77 = por %p75, %p76
      %p78 = scmp.ne.s32.totalorder %s67, %s68
      %p79 = scmp.eq.s32.totalorder %s17, 0
      %p80 = por %p78, %p79
      %p81 = scmp.ne.s32.totalorder %s67, %s68
      %p82 = scmp.eq.s32.totalorder %s18, 1
      %p83 = por %p81, %p82
      %p85 = scmp.ne.s32.totalorder %s68, %s84
      %p86 = scmp.eq.s32.totalorder %s18, 0
      %p87 = por %p85, %p86
      %s88 = ssub.s32 %s12, %s19
      %p89 = scmp.eq.s32.totalorder %s88, 0
      %s91 = sadd.s32 %s90, 1
      %s92 = scalar_select %p89, %s90, %s91
      %p95 = pneg %p89
      %p96 = scmp.eq.s32.totalorder %s12, 1
      %p97 = por %p95, %p96
      %p98 = scmp.ne.s32.totalorder %s90, %s93
      %p99 = scmp.eq.s32.totalorder %s12, 0
      %p100 = por %p98, %p99
      %p101 = scmp.ne.s32.totalorder %s90, %s93
      %p102 = scmp.eq.s32.totalorder %s17, 1
      %p103 = por %p101, %p102
      %p104 = scmp.ne.s32.totalorder %s93, %s94
      %p105 = scmp.eq.s32.totalorder %s17, 0
      %p106 = por %p104, %p105
      %p107 = scmp.ne.s32.totalorder %s93, %s94
      %p108 = scmp.eq.s32.totalorder %s18, 1
      %p109 = por %p107, %p108
      %p111 = scmp.ne.s32.totalorder %s94, %s110
      %p112 = scmp.eq.s32.totalorder %s18, 0
      %p113 = por %p111, %p112
      %p114 = scmp.le.s32.totalorder 1, %s12
      %p115 = scmp.lt.s32.totalorder %s12, 3
      %p116 = pnand %p114, %p115
      %p117 = pneg %p116
      // Predicated region
      $region9: #{tpu_custom_call.1} parent=5 // pred_check
        _
      $region10: #{tpu_custom_call.1} parent=5 // pred_check_branch
        %119 = sbr.rel (%p116) target = $region12
      $region11: #{tpu_custom_call.1} parent=5 // pred_region
        %s120 = ssub.s32 %s12, 1
        // Predicated region
        $region13: #{tpu_custom_call.1} parent=11 // pred_check
          %p121 = pneg %p33
        $region14: #{tpu_custom_call.1} parent=11 // pred_check_branch
          %123 = sbr.rel (%p121) target = $region16
        $region15: #{tpu_custom_call.1} parent=11 // pred_region
          _
        $region16: #{tpu_custom_call.1} parent=11 // pred_fallthru
          _
        // Predicated region
        $region17: #{tpu_custom_call.1} parent=11 // pred_check
          %p124 = pneg %p54
        $region18: #{tpu_custom_call.1} parent=11 // pred_check_branch
          %126 = sbr.rel (%p124) target = $region20
        $region19: #{tpu_custom_call.1} parent=11 // pred_region
          _
        $region20: #{tpu_custom_call.1} parent=11 // pred_fallthru
          _
      $region12: #{tpu_custom_call.1} parent=5 // pred_fallthru
        _
      %p127 = scmp.lt.s32.totalorder %s12, 2
      // Predicated region
      $region21: #{tpu_custom_call.1} parent=5 // pred_check
        %p128 = pneg %p127
      $region22: #{tpu_custom_call.1} parent=5 // pred_check_branch
        %130 = sbr.rel (%p128) target = $region24
      $region23: #{tpu_custom_call.1} parent=5 // pred_region
        // Predicated region
        $region25: #{tpu_custom_call.1} parent=23 // pred_check
          %p131 = pneg %p74
        $region26: #{tpu_custom_call.1} parent=23 // pred_check_branch
          %133 = sbr.rel (%p131) target = $region28
        $region27: #{tpu_custom_call.1} parent=23 // pred_region
          %p134 = scmp.lt.s32.totalorder %s12, 1
          %s135 = scalar_select %p134, %s12, 1
          %s136 = smul.addr %s135, 3
          %s137 = smul.addr %s136, 8
          %s138 = scalar_lea.vmem %s2, %s137
        $region28: #{tpu_custom_call.1} parent=23 // pred_fallthru
          _
      $region24: #{tpu_custom_call.1} parent=5 // pred_fallthru
        _
      %p139 = scmp.le.s32.totalorder 1, %s12
      %p140 = scmp.lt.s32.totalorder %s12, 3
      %p141 = pnand %p139, %p140
      %p142 = pneg %p141
      // Predicated region
      $region29: #{tpu_custom_call.1} parent=5 // pred_check
        _
      $region30: #{tpu_custom_call.1} parent=5 // pred_check_branch
        %144 = sbr.rel (%p141) target = $region32
      $region31: #{tpu_custom_call.1} parent=5 // pred_region
        %s145 = ssub.s32 %s12, 1
        %p146 = pneg %p33
        %p147 = pneg %p30
        %p148 = pneg %p54
        %p149 = pneg %p51
        %p150 = scmp.lt.s32.totalorder %s17, 1
        %s151 = scalar_select %p150, %s17, 1
        %s152 = smul.addr %s151, 3
        %s153 = smul.addr %s152, 8
        %s154 = scalar_lea.vmem %s2, %s153
        %p155 = pneg %p80
        %p156 = pneg %p77
        %p157 = pneg %p106
        %p158 = pneg %p103
        %s159 = sand.u32 %s93, 1
        %s160 = scalar_lea.sflag [#allocation3], %s159
        %s161 = sand.u32 %s93, 1
        %s162 = smul.addr %s161, 24
        %s163 = scalar_lea.vmem [#allocation2], %s162
        %p164 = scmp.lt.s32.totalorder %s17, 1
        %s165 = scalar_select %p164, %s17, 1
        %s166 = smul.addr %s165, 3
        %s167 = smul.addr %s166, 8
        %s168 = scalar_lea.vmem %s2, %s167
        %v169 = vld [vmem:[%s168] sm:$0xff]
        %v170 = vld [vmem:[%s168 + $0x8] sm:$0xff]
        %v171 = vld [vmem:[%s168 + $0x10] sm:$0xff]
        %v172 = vld [vmem:[%s0] sm:$0xff]
        %s173 = scalar_lea.vmem %s0, 8
        %v174 = vld [vmem:[%s173] sm:$0xff]
        %178 = vrot.lane.b32.xlu0 %v169, 127
        %v179 = vpop.permute.xlu0 %178
        %180 = vrot.lane.b32.xlu0 %v170, 127
        %v181 = vpop.permute.xlu0 %180
        %182 = vrot.lane.b32.xlu0 %v171, 127
        %v183 = vpop.permute.xlu0 %182
        %vm184 = vcmask 1039360
        %v185 = vsel %vm184, %v179, %v181
        %v186 = vsel %vm184, %v181, %v183
        %vm190 = vcmask 64512
        %v192 = vsel %vm190, %v174, 0
        %194 = vmatprep.subr.mxu0 %v186
        %195 = vmatpush1.msra.mxu0 %v185
        %196 = vmatprep.subr.mxu0 0.0
        %197 = vmatpush1.msra.mxu0 0.0
        %198 = vmatprep.subr.mxu0 0.0
        %199 = vmatpush1.msra.mxu0 0.0
        %200 = vmatprep.subr.mxu0 0.0
        %201 = vmatpush1.msra.mxu0 0.0
        %202 = vmatprep.subr.mxu0 0.0
        %203 = vmatpush1.msra.mxu0 0.0
        %204 = vmatprep.subr.mxu0 0.0
        %205 = vmatpush1.msra.mxu0 0.0
        %206 = vmatprep.subr.mxu0 0.0
        %207 = vmatpush1.msra.mxu0 0.0
        %208 = vmatprep.subr.mxu0 0.0
        %209 = vmatpush1.msra.mxu0 0.0
        %210 = vmatprep.subr.mxu0 0.0
        %211 = vmatpush1.msra.mxu0 0.0
        %212 = vmatprep.subr.mxu0 0.0
        %213 = vmatpush1.msra.mxu0 0.0
        %214 = vmatprep.subr.mxu0 0.0
        %215 = vmatpush1.msra.mxu0 0.0
        %216 = vmatprep.subr.mxu0 0.0
        %217 = vmatpush1.msra.mxu0 0.0
        %218 = vmatprep.subr.mxu0 0.0
        %219 = vmatpush1.msra.mxu0 0.0
        %220 = vmatprep.subr.mxu0 0.0
        %221 = vmatpush1.msra.mxu0 0.0
        %222 = vmatprep.subr.mxu0 0.0
        %223 = vmatpush1.msra.mxu0 0.0
        %224 = vmatprep.subr.mxu0 0.0
        %225 = vmatpush1.msra.mxu0 0.0
        %226 = vmatprep.subr.mxu0 0.0
        %227 = vmatpush1.msra.mxu0 0.0
        %228 = vmatprep.subr.mxu0 0.0
        %229 = vmatpush1.msra.mxu0 0.0
        %230 = vmatprep.subr.mxu0 0.0
        %231 = vmatpush1.msra.mxu0 0.0
        %232 = vmatprep.subr.mxu0 0.0
        %233 = vmatpush1.msra.mxu0 0.0
        %234 = vmatprep.subr.mxu0 0.0
        %235 = vmatpush1.msra.mxu0 0.0
        %236 = vmatprep.subr.mxu0 0.0
        %237 = vmatpush1.msra.mxu0 0.0
        %238 = vmatprep.subr.mxu0 0.0
        %239 = vmatpush1.msra.mxu0 0.0
        %240 = vmatprep.subr.mxu0 0.0
        %241 = vmatpush1.msra.mxu0 0.0
        %242 = vmatprep.subr.mxu0 0.0
        %243 = vmatpush1.msra.mxu0 0.0
        %244 = vmatprep.subr.mxu0 0.0
        %245 = vmatpush1.msra.mxu0 0.0
        %246 = vmatprep.subr.mxu0 0.0
        %247 = vmatpush1.msra.mxu0 0.0
        %248 = vmatprep.subr.mxu0 0.0
        %249 = vmatpush1.msra.mxu0 0.0
        %250 = vmatprep.subr.mxu0 0.0
        %251 = vmatpush1.msra.mxu0 0.0
        %252 = vmatprep.subr.mxu0 0.0
        %253 = vmatpush1.msra.mxu0 0.0
        %254 = vmatprep.subr.mxu0 0.0
        %255 = vmatpush1.msra.mxu0 0.0
        %256 = vmatprep.subr.mxu0 0.0
        %257 = vmatpush1.msra.mxu0 0.0
        %258 = vmatprep.mubr.f32.mxu0 0.0
        %259 = vmatmul.mubr.f32.gmra.mrb[0].mxu0 %v192
        %v260 = vpop.f32.mrb[0].mxu0
        %v261 = vadd.f32 0.0, %v260
        %v262 = vpop.f32.mrb[0].mxu0
        %v263 = vadd.f32 0.0, %v262
        %264 = vdwg.mxu0
        %265 = vmatprep.subr.mxu0 0.0
        %266 = vmatpush1.msra.mxu0 %v183
        %267 = vmatprep.subr.mxu0 0.0
        %268 = vmatpush1.msra.mxu0 0.0
        %269 = vmatprep.subr.mxu0 0.0
        %270 = vmatpush1.msra.mxu0 0.0
        %271 = vmatprep.subr.mxu0 0.0
        %272 = vmatpush1.msra.mxu0 0.0
        %273 = vmatprep.subr.mxu0 0.0
        %274 = vmatpush1.msra.mxu0 0.0
        %275 = vmatprep.subr.mxu0 0.0
        %276 = vmatpush1.msra.mxu0 0.0
        %277 = vmatprep.subr.mxu0 0.0
        %278 = vmatpush1.msra.mxu0 0.0
        %279 = vmatprep.subr.mxu0 0.0
        %280 = vmatpush1.msra.mxu0 0.0
        %281 = vmatprep.subr.mxu0 0.0
        %282 = vmatpush1.msra.mxu0 0.0
        %283 = vmatprep.subr.mxu0 0.0
        %284 = vmatpush1.msra.mxu0 0.0
        %285 = vmatprep.subr.mxu0 0.0
        %286 = vmatpush1.msra.mxu0 0.0
        %287 = vmatprep.subr.mxu0 0.0
        %288 = vmatpush1.msra.mxu0 0.0
        %289 = vmatprep.subr.mxu0 0.0
        %290 = vmatpush1.msra.mxu0 0.0
        %291 = vmatprep.subr.mxu0 0.0
        %292 = vmatpush1.msra.mxu0 0.0
        %293 = vmatprep.subr.mxu0 0.0
        %294 = vmatpush1.msra.mxu0 0.0
        %295 = vmatprep.subr.mxu0 0.0
        %296 = vmatpush1.msra.mxu0 0.0
        %297 = vmatprep.subr.mxu0 0.0
        %298 = vmatpush1.msra.mxu0 0.0
        %299 = vmatprep.subr.mxu0 0.0
        %300 = vmatpush1.msra.mxu0 0.0
        %301 = vmatprep.subr.mxu0 0.0
        %302 = vmatpush1.msra.mxu0 0.0
        %303 = vmatprep.subr.mxu0 0.0
        %304 = vmatpush1.msra.mxu0 0.0
        %305 = vmatprep.subr.mxu0 0.0
        %306 = vmatpush1.msra.mxu0 0.0
        %307 = vmatprep.subr.mxu0 0.0
        %308 = vmatpush1.msra.mxu0 0.0
        %309 = vmatprep.subr.mxu0 0.0
        %310 = vmatpush1.msra.mxu0 0.0
        %311 = vmatprep.subr.mxu0 0.0
        %312 = vmatpush1.msra.mxu0 0.0
        %313 = vmatprep.subr.mxu0 0.0
        %314 = vmatpush1.msra.mxu0 0.0
        %315 = vmatprep.subr.mxu0 0.0
        %316 = vmatpush1.msra.mxu0 0.0
        %317 = vmatprep.subr.mxu0 0.0
        %318 = vmatpush1.msra.mxu0 0.0
        %319 = vmatprep.subr.mxu0 0.0
        %320 = vmatpush1.msra.mxu0 0.0
        %321 = vmatprep.subr.mxu0 0.0
        %322 = vmatpush1.msra.mxu0 0.0
        %323 = vmatprep.subr.mxu0 0.0
        %324 = vmatpush1.msra.mxu0 0.0
        %325 = vmatprep.subr.mxu0 0.0
        %326 = vmatpush1.msra.mxu0 0.0
        %327 = vmatprep.subr.mxu0 0.0
        %328 = vmatpush1.msra.mxu0 0.0
        %329 = vmatprep.mubr.f32.mxu0 0.0
        %330 = vmatmul.mubr.f32.gmra.mrb[0].mxu0 %v192
        %v331 = vpop.f32.mrb[0].mxu0
        %v332 = vadd.f32 0.0, %v331
        %v333 = vpop.f32.mrb[0].mxu0
        %334 = vdwg.mxu0
        %v336 = vsel %vm190, %v172, 0
        %338 = vmatprep.subr.mxu0 %v170
        %339 = vmatpush1.msra.mxu0 %v169
        %340 = vmatprep.subr.mxu0 0.0
        %341 = vmatpush1.msra.mxu0 0.0
        %342 = vmatprep.subr.mxu0 0.0
        %343 = vmatpush1.msra.mxu0 0.0
        %344 = vmatprep.subr.mxu0 0.0
        %345 = vmatpush1.msra.mxu0 0.0
        %346 = vmatprep.subr.mxu0 0.0
        %347 = vmatpush1.msra.mxu0 0.0
        %348 = vmatprep.subr.mxu0 0.0
        %349 = vmatpush1.msra.mxu0 0.0
        %350 = vmatprep.subr.mxu0 0.0
        %351 = vmatpush1.msra.mxu0 0.0
        %352 = vmatprep.subr.mxu0 0.0
        %353 = vmatpush1.msra.mxu0 0.0
        %354 = vmatprep.subr.mxu0 0.0
        %355 = vmatpush1.msra.mxu0 0.0
        %356 = vmatprep.subr.mxu0 0.0
        %357 = vmatpush1.msra.mxu0 0.0
        %358 = vmatprep.subr.mxu0 0.0
        %359 = vmatpush1.msra.mxu0 0.0
        %360 = vmatprep.subr.mxu0 0.0
        %361 = vmatpush1.msra.mxu0 0.0
        %362 = vmatprep.subr.mxu0 0.0
        %363 = vmatpush1.msra.mxu0 0.0
        %364 = vmatprep.subr.mxu0 0.0
        %365 = vmatpush1.msra.mxu0 0.0
        %366 = vmatprep.subr.mxu0 0.0
        %367 = vmatpush1.msra.mxu0 0.0
        %368 = vmatprep.subr.mxu0 0.0
        %369 = vmatpush1.msra.mxu0 0.0
        %370 = vmatprep.subr.mxu0 0.0
        %371 = vmatpush1.msra.mxu0 0.0
        %372 = vmatprep.subr.mxu0 0.0
        %373 = vmatpush1.msra.mxu0 0.0
        %374 = vmatprep.subr.mxu0 0.0
        %375 = vmatpush1.msra.mxu0 0.0
        %376 = vmatprep.subr.mxu0 0.0
        %377 = vmatpush1.msra.mxu0 0.0
        %378 = vmatprep.subr.mxu0 0.0
        %379 = vmatpush1.msra.mxu0 0.0
        %380 = vmatprep.subr.mxu0 0.0
        %381 = vmatpush1.msra.mxu0 0.0
        %382 = vmatprep.subr.mxu0 0.0
        %383 = vmatpush1.msra.mxu0 0.0
        %384 = vmatprep.subr.mxu0 0.0
        %385 = vmatpush1.msra.mxu0 0.0
        %386 = vmatprep.subr.mxu0 0.0
        %387 = vmatpush1.msra.mxu0 0.0
        %388 = vmatprep.subr.mxu0 0.0
        %389 = vmatpush1.msra.mxu0 0.0
        %390 = vmatprep.subr.mxu0 0.0
        %391 = vmatpush1.msra.mxu0 0.0
        %392 = vmatprep.subr.mxu0 0.0
        %393 = vmatpush1.msra.mxu0 0.0
        %394 = vmatprep.subr.mxu0 0.0
        %395 = vmatpush1.msra.mxu0 0.0
        %396 = vmatprep.subr.mxu0 0.0
        %397 = vmatpush1.msra.mxu0 0.0
        %398 = vmatprep.subr.mxu0 0.0
        %399 = vmatpush1.msra.mxu0 0.0
        %400 = vmatprep.subr.mxu0 0.0
        %401 = vmatpush1.msra.mxu0 0.0
        %402 = vmatprep.mubr.f32.mxu0 0.0
        %403 = vmatmul.mubr.f32.gmra.mrb[0].mxu0 %v336
        %v404 = vpop.f32.mrb[0].mxu0
        %v405 = vadd.f32 %v261, %v404
        %v406 = vpop.f32.mrb[0].mxu0
        %v407 = vadd.f32 %v263, %v406
        %408 = vdwg.mxu0
        %409 = vmatprep.subr.mxu0 0.0
        %410 = vmatpush1.msra.mxu0 %v171
        %411 = vmatprep.subr.mxu0 0.0
        %412 = vmatpush1.msra.mxu0 0.0
        %413 = vmatprep.subr.mxu0 0.0
        %414 = vmatpush1.msra.mxu0 0.0
        %415 = vmatprep.subr.mxu0 0.0
        %416 = vmatpush1.msra.mxu0 0.0
        %417 = vmatprep.subr.mxu0 0.0
        %418 = vmatpush1.msra.mxu0 0.0
        %419 = vmatprep.subr.mxu0 0.0
        %420 = vmatpush1.msra.mxu0 0.0
        %421 = vmatprep.subr.mxu0 0.0
        %422 = vmatpush1.msra.mxu0 0.0
        %423 = vmatprep.subr.mxu0 0.0
        %424 = vmatpush1.msra.mxu0 0.0
        %425 = vmatprep.subr.mxu0 0.0
        %426 = vmatpush1.msra.mxu0 0.0
        %427 = vmatprep.subr.mxu0 0.0
        %428 = vmatpush1.msra.mxu0 0.0
        %429 = vmatprep.subr.mxu0 0.0
        %430 = vmatpush1.msra.mxu0 0.0
        %431 = vmatprep.subr.mxu0 0.0
        %432 = vmatpush1.msra.mxu0 0.0
        %433 = vmatprep.subr.mxu0 0.0
        %434 = vmatpush1.msra.mxu0 0.0
        %435 = vmatprep.subr.mxu0 0.0
        %436 = vmatpush1.msra.mxu0 0.0
        %437 = vmatprep.subr.mxu0 0.0
        %438 = vmatpush1.msra.mxu0 0.0
        %439 = vmatprep.subr.mxu0 0.0
        %440 = vmatpush1.msra.mxu0 0.0
        %441 = vmatprep.subr.mxu0 0.0
        %442 = vmatpush1.msra.mxu0 0.0
        %443 = vmatprep.subr.mxu0 0.0
        %444 = vmatpush1.msra.mxu0 0.0
        %445 = vmatprep.subr.mxu0 0.0
        %446 = vmatpush1.msra.mxu0 0.0
        %447 = vmatprep.subr.mxu0 0.0
        %448 = vmatpush1.msra.mxu0 0.0
        %449 = vmatprep.subr.mxu0 0.0
        %450 = vmatpush1.msra.mxu0 0.0
        %451 = vmatprep.subr.mxu0 0.0
        %452 = vmatpush1.msra.mxu0 0.0
        %453 = vmatprep.subr.mxu0 0.0
        %454 = vmatpush1.msra.mxu0 0.0
        %455 = vmatprep.subr.mxu0 0.0
        %456 = vmatpush1.msra.mxu0 0.0
        %457 = vmatprep.subr.mxu0 0.0
        %458 = vmatpush1.msra.mxu0 0.0
        %459 = vmatprep.subr.mxu0 0.0
        %460 = vmatpush1.msra.mxu0 0.0
        %461 = vmatprep.subr.mxu0 0.0
        %462 = vmatpush1.msra.mxu0 0.0
        %463 = vmatprep.subr.mxu0 0.0
        %464 = vmatpush1.msra.mxu0 0.0
        %465 = vmatprep.subr.mxu0 0.0
        %466 = vmatpush1.msra.mxu0 0.0
        %467 = vmatprep.subr.mxu0 0.0
        %468 = vmatpush1.msra.mxu0 0.0
        %469 = vmatprep.subr.mxu0 0.0
        %470 = vmatpush1.msra.mxu0 0.0
        %471 = vmatprep.subr.mxu0 0.0
        %472 = vmatpush1.msra.mxu0 0.0
        %473 = vmatprep.mubr.f32.mxu0 0.0
        %474 = vmatmul.mubr.f32.gmra.mrb[0].mxu0 %v336
        %v475 = vpop.f32.mrb[0].mxu0
        %v476 = vadd.f32 %v332, %v475
        %v477 = vpop.f32.mrb[0].mxu0
        %478 = vdwg.mxu0
        %s479 = scalar_lea.vmem %s0, 16
        %v480 = vld [vmem:[%s479] sm:$0xff]
        %481 = vrot.lane.b32.xlu0 %v169, 126
        %v482 = vpop.permute.xlu0 %481
        %483 = vrot.lane.b32.xlu0 %v170, 126
        %v484 = vpop.permute.xlu0 %483
        %485 = vrot.lane.b32.xlu0 %v171, 126
        %v486 = vpop.permute.xlu0 %485
        %vm487 = vcmask 1031168
        %v488 = vsel %vm487, %v482, %v484
        %v489 = vsel %vm487, %v484, %v486
        %v494 = vsel %vm190, %v480, 0
        %496 = vmatprep.subr.mxu0 %v489
        %497 = vmatpush1.msra.mxu0 %v488
        %498 = vmatprep.subr.mxu0 0.0
        %499 = vmatpush1.msra.mxu0 0.0
        %500 = vmatprep.subr.mxu0 0.0
        %501 = vmatpush1.msra.mxu0 0.0
        %502 = vmatprep.subr.mxu0 0.0
        %503 = vmatpush1.msra.mxu0 0.0
        %504 = vmatprep.subr.mxu0 0.0
        %505 = vmatpush1.msra.mxu0 0.0
        %506 = vmatprep.subr.mxu0 0.0
        %507 = vmatpush1.msra.mxu0 0.0
        %508 = vmatprep.subr.mxu0 0.0
        %509 = vmatpush1.msra.mxu0 0.0
        %510 = vmatprep.subr.mxu0 0.0
        %511 = vmatpush1.msra.mxu0 0.0
        %512 = vmatprep.subr.mxu0 0.0
        %513 = vmatpush1.msra.mxu0 0.0
        %514 = vmatprep.subr.mxu0 0.0
        %515 = vmatpush1.msra.mxu0 0.0
        %516 = vmatprep.subr.mxu0 0.0
        %517 = vmatpush1.msra.mxu0 0.0
        %518 = vmatprep.subr.mxu0 0.0
        %519 = vmatpush1.msra.mxu0 0.0
        %520 = vmatprep.subr.mxu0 0.0
        %521 = vmatpush1.msra.mxu0 0.0
        %522 = vmatprep.subr.mxu0 0.0
        %523 = vmatpush1.msra.mxu0 0.0
        %524 = vmatprep.subr.mxu0 0.0
        %525 = vmatpush1.msra.mxu0 0.0
        %526 = vmatprep.subr.mxu0 0.0
        %527 = vmatpush1.msra.mxu0 0.0
        %528 = vmatprep.subr.mxu0 0.0
        %529 = vmatpush1.msra.mxu0 0.0
        %530 = vmatprep.subr.mxu0 0.0
        %531 = vmatpush1.msra.mxu0 0.0
        %532 = vmatprep.subr.mxu0 0.0
        %533 = vmatpush1.msra.mxu0 0.0
        %534 = vmatprep.subr.mxu0 0.0
        %535 = vmatpush1.msra.mxu0 0.0
        %536 = vmatprep.subr.mxu0 0.0
        %537 = vmatpush1.msra.mxu0 0.0
        %538 = vmatprep.subr.mxu0 0.0
        %539 = vmatpush1.msra.mxu0 0.0
        %540 = vmatprep.subr.mxu0 0.0
        %541 = vmatpush1.msra.mxu0 0.0
        %542 = vmatprep.subr.mxu0 0.0
        %543 = vmatpush1.msra.mxu0 0.0
        %544 = vmatprep.subr.mxu0 0.0
        %545 = vmatpush1.msra.mxu0 0.0
        %546 = vmatprep.subr.mxu0 0.0
        %547 = vmatpush1.msra.mxu0 0.0
        %548 = vmatprep.subr.mxu0 0.0
        %549 = vmatpush1.msra.mxu0 0.0
        %550 = vmatprep.subr.mxu0 0.0
        %551 = vmatpush1.msra.mxu0 0.0
        %552 = vmatprep.subr.mxu0 0.0
        %553 = vmatpush1.msra.mxu0 0.0
        %554 = vmatprep.subr.mxu0 0.0
        %555 = vmatpush1.msra.mxu0 0.0
        %556 = vmatprep.subr.mxu0 0.0
        %557 = vmatpush1.msra.mxu0 0.0
        %558 = vmatprep.subr.mxu0 0.0
        %559 = vmatpush1.msra.mxu0 0.0
        %560 = vmatprep.mubr.f32.mxu0 0.0
        %561 = vmatmul.mubr.f32.gmra.mrb[0].mxu0 %v494
        %v562 = vpop.f32.mrb[0].mxu0
        %v563 = vadd.f32 0.0, %v562
        %v564 = vpop.f32.mrb[0].mxu0
        %v565 = vadd.f32 0.0, %v564
        %566 = vdwg.mxu0
        %567 = vmatprep.subr.mxu0 0.0
        %568 = vmatpush1.msra.mxu0 %v486
        %569 = vmatprep.subr.mxu0 0.0
        %570 = vmatpush1.msra.mxu0 0.0
        %571 = vmatprep.subr.mxu0 0.0
        %572 = vmatpush1.msra.mxu0 0.0
        %573 = vmatprep.subr.mxu0 0.0
        %574 = vmatpush1.msra.mxu0 0.0
        %575 = vmatprep.subr.mxu0 0.0
        %576 = vmatpush1.msra.mxu0 0.0
        %577 = vmatprep.subr.mxu0 0.0
        %578 = vmatpush1.msra.mxu0 0.0
        %579 = vmatprep.subr.mxu0 0.0
        %580 = vmatpush1.msra.mxu0 0.0
        %581 = vmatprep.subr.mxu0 0.0
        %582 = vmatpush1.msra.mxu0 0.0
        %583 = vmatprep.subr.mxu0 0.0
        %584 = vmatpush1.msra.mxu0 0.0
        %585 = vmatprep.subr.mxu0 0.0
        %586 = vmatpush1.msra.mxu0 0.0
        %587 = vmatprep.subr.mxu0 0.0
        %588 = vmatpush1.msra.mxu0 0.0
        %589 = vmatprep.subr.mxu0 0.0
        %590 = vmatpush1.msra.mxu0 0.0
        %591 = vmatprep.subr.mxu0 0.0
        %592 = vmatpush1.msra.mxu0 0.0
        %593 = vmatprep.subr.mxu0 0.0
        %594 = vmatpush1.msra.mxu0 0.0
        %595 = vmatprep.subr.mxu0 0.0
        %596 = vmatpush1.msra.mxu0 0.0
        %597 = vmatprep.subr.mxu0 0.0
        %598 = vmatpush1.msra.mxu0 0.0
        %599 = vmatprep.subr.mxu0 0.0
        %600 = vmatpush1.msra.mxu0 0.0
        %601 = vmatprep.subr.mxu0 0.0
        %602 = vmatpush1.msra.mxu0 0.0
        %603 = vmatprep.subr.mxu0 0.0
        %604 = vmatpush1.msra.mxu0 0.0
        %605 = vmatprep.subr.mxu0 0.0
        %606 = vmatpush1.msra.mxu0 0.0
        %607 = vmatprep.subr.mxu0 0.0
        %608 = vmatpush1.msra.mxu0 0.0
        %609 = vmatprep.subr.mxu0 0.0
        %610 = vmatpush1.msra.mxu0 0.0
        %611 = vmatprep.subr.mxu0 0.0
        %612 = vmatpush1.msra.mxu0 0.0
        %613 = vmatprep.subr.mxu0 0.0
        %614 = vmatpush1.msra.mxu0 0.0
        %615 = vmatprep.subr.mxu0 0.0
        %616 = vmatpush1.msra.mxu0 0.0
        %617 = vmatprep.subr.mxu0 0.0
        %618 = vmatpush1.msra.mxu0 0.0
        %619 = vmatprep.subr.mxu0 0.0
        %620 = vmatpush1.msra.mxu0 0.0
        %621 = vmatprep.subr.mxu0 0.0
        %622 = vmatpush1.msra.mxu0 0.0
        %623 = vmatprep.subr.mxu0 0.0
        %624 = vmatpush1.msra.mxu0 0.0
        %625 = vmatprep.subr.mxu0 0.0
        %626 = vmatpush1.msra.mxu0 0.0
        %627 = vmatprep.subr.mxu0 0.0
        %628 = vmatpush1.msra.mxu0 0.0
        %629 = vmatprep.subr.mxu0 0.0
        %630 = vmatpush1.msra.mxu0 0.0
        %631 = vmatprep.mubr.f32.mxu0 0.0
        %632 = vmatmul.mubr.f32.gmra.mrb[0].mxu0 %v494
        %v633 = vpop.f32.mrb[0].mxu0
        %v634 = vadd.f32 0.0, %v633
        %v635 = vpop.f32.mrb[0].mxu0
        %636 = vdwg.mxu0
        %v637 = vadd.f32 %v405, %v563
        %v638 = vadd.f32 %v407, %v565
        %v639 = vadd.f32 %v476, %v634
        %s640 = scalar_lea.vmem %s0, 24
        %v641 = vld [vmem:[%s640] sm:$0xff]
        %642 = vrot.lane.b32.xlu0 %v169, 110
        %v643 = vpop.permute.xlu0 %642
        %644 = vrot.lane.b32.xlu0 %v170, 110
        %v645 = vpop.permute.xlu0 %644
        %646 = vrot.lane.b32.xlu0 %v171, 110
        %v647 = vpop.permute.xlu0 %646
        %vm648 = vcmask 900096
        %v649 = vsel %vm648, %v643, %v645
        %v650 = vsel %vm648, %v645, %v647
        %v655 = vsel %vm190, %v641, 0
        %657 = vmatprep.subr.mxu0 %v650
        %658 = vmatpush1.msra.mxu0 %v649
        %659 = vmatprep.subr.mxu0 0.0
        %660 = vmatpush1.msra.mxu0 0.0
        %661 = vmatprep.subr.mxu0 0.0
        %662 = vmatpush1.msra.mxu0 0.0
        %663 = vmatprep.subr.mxu0 0.0
        %664 = vmatpush1.msra.mxu0 0.0
        %665 = vmatprep.subr.mxu0 0.0
        %666 = vmatpush1.msra.mxu0 0.0
        %667 = vmatprep.subr.mxu0 0.0
        %668 = vmatpush1.msra.mxu0 0.0
        %669 = vmatprep.subr.mxu0 0.0
        %670 = vmatpush1.msra.mxu0 0.0
        %671 = vmatprep.subr.mxu0 0.0
        %672 = vmatpush1.msra.mxu0 0.0
        %673 = vmatprep.subr.mxu0 0.0
        %674 = vmatpush1.msra.mxu0 0.0
        %675 = vmatprep.subr.mxu0 0.0
        %676 = vmatpush1.msra.mxu0 0.0
        %677 = vmatprep.subr.mxu0 0.0
        %678 = vmatpush1.msra.mxu0 0.0
        %679 = vmatprep.subr.mxu0 0.0
        %680 = vmatpush1.msra.mxu0 0.0
        %681 = vmatprep.subr.mxu0 0.0
        %682 = vmatpush1.msra.mxu0 0.0
        %683 = vmatprep.subr.mxu0 0.0
        %684 = vmatpush1.msra.mxu0 0.0
        %685 = vmatprep.subr.mxu0 0.0
        %686 = vmatpush1.msra.mxu0 0.0
        %687 = vmatprep.subr.mxu0 0.0
        %688 = vmatpush1.msra.mxu0 0.0
        %689 = vmatprep.subr.mxu0 0.0
        %690 = vmatpush1.msra.mxu0 0.0
        %691 = vmatprep.subr.mxu0 0.0
        %692 = vmatpush1.msra.mxu0 0.0
        %693 = vmatprep.subr.mxu0 0.0
        %694 = vmatpush1.msra.mxu0 0.0
        %695 = vmatprep.subr.mxu0 0.0
        %696 = vmatpush1.msra.mxu0 0.0
        %697 = vmatprep.subr.mxu0 0.0
        %698 = vmatpush1.msra.mxu0 0.0
        %699 = vmatprep.subr.mxu0 0.0
        %700 = vmatpush1.msra.mxu0 0.0
        %701 = vmatprep.subr.mxu0 0.0
        %702 = vmatpush1.msra.mxu0 0.0
        %703 = vmatprep.subr.mxu0 0.0
        %704 = vmatpush1.msra.mxu0 0.0
        %705 = vmatprep.subr.mxu0 0.0
        %706 = vmatpush1.msra.mxu0 0.0
        %707 = vmatprep.subr.mxu0 0.0
        %708 = vmatpush1.msra.mxu0 0.0
        %709 = vmatprep.subr.mxu0 0.0
        %710 = vmatpush1.msra.mxu0 0.0
        %711 = vmatprep.subr.mxu0 0.0
        %712 = vmatpush1.msra.mxu0 0.0
        %713 = vmatprep.subr.mxu0 0.0
        %714 = vmatpush1.msra.mxu0 0.0
        %715 = vmatprep.subr.mxu0 0.0
        %716 = vmatpush1.msra.mxu0 0.0
        %717 = vmatprep.subr.mxu0 0.0
        %718 = vmatpush1.msra.mxu0 0.0
        %719 = vmatprep.subr.mxu0 0.0
        %720 = vmatpush1.msra.mxu0 0.0
        %721 = vmatprep.mubr.f32.mxu0 0.0
        %722 = vmatmul.mubr.f32.gmra.mrb[0].mxu0 %v655
        %v723 = vpop.f32.mrb[0].mxu0
        %v724 = vadd.f32 0.0, %v723
        %v725 = vpop.f32.mrb[0].mxu0
        %v726 = vadd.f32 0.0, %v725
        %727 = vdwg.mxu0
        %728 = vmatprep.subr.mxu0 0.0
        %729 = vmatpush1.msra.mxu0 %v647
        %730 = vmatprep.subr.mxu0 0.0
        %731 = vmatpush1.msra.mxu0 0.0
        %732 = vmatprep.subr.mxu0 0.0
        %733 = vmatpush1.msra.mxu0 0.0
        %734 = vmatprep.subr.mxu0 0.0
        %735 = vmatpush1.msra.mxu0 0.0
        %736 = vmatprep.subr.mxu0 0.0
        %737 = vmatpush1.msra.mxu0 0.0
        %738 = vmatprep.subr.mxu0 0.0
        %739 = vmatpush1.msra.mxu0 0.0
        %740 = vmatprep.subr.mxu0 0.0
        %741 = vmatpush1.msra.mxu0 0.0
        %742 = vmatprep.subr.mxu0 0.0
        %743 = vmatpush1.msra.mxu0 0.0
        %744 = vmatprep.subr.mxu0 0.0
        %745 = vmatpush1.msra.mxu0 0.0
        %746 = vmatprep.subr.mxu0 0.0
        %747 = vmatpush1.msra.mxu0 0.0
        %748 = vmatprep.subr.mxu0 0.0
        %749 = vmatpush1.msra.mxu0 0.0
        %750 = vmatprep.subr.mxu0 0.0
        %751 = vmatpush1.msra.mxu0 0.0
        %752 = vmatprep.subr.mxu0 0.0
        %753 = vmatpush1.msra.mxu0 0.0
        %754 = vmatprep.subr.mxu0 0.0
        %755 = vmatpush1.msra.mxu0 0.0
        %756 = vmatprep.subr.mxu0 0.0
        %757 = vmatpush1.msra.mxu0 0.0
        %758 = vmatprep.subr.mxu0 0.0
        %759 = vmatpush1.msra.mxu0 0.0
        %760 = vmatprep.subr.mxu0 0.0
        %761 = vmatpush1.msra.mxu0 0.0
        %762 = vmatprep.subr.mxu0 0.0
        %763 = vmatpush1.msra.mxu0 0.0
        %764 = vmatprep.subr.mxu0 0.0
        %765 = vmatpush1.msra.mxu0 0.0
        %766 = vmatprep.subr.mxu0 0.0
        %767 = vmatpush1.msra.mxu0 0.0
        %768 = vmatprep.subr.mxu0 0.0
        %769 = vmatpush1.msra.mxu0 0.0
        %770 = vmatprep.subr.mxu0 0.0
        %771 = vmatpush1.msra.mxu0 0.0
        %772 = vmatprep.subr.mxu0 0.0
        %773 = vmatpush1.msra.mxu0 0.0
        %774 = vmatprep.subr.mxu0 0.0
        %775 = vmatpush1.msra.mxu0 0.0
        %776 = vmatprep.subr.mxu0 0.0
        %777 = vmatpush1.msra.mxu0 0.0
        %778 = vmatprep.subr.mxu0 0.0
        %779 = vmatpush1.msra.mxu0 0.0
        %780 = vmatprep.subr.mxu0 0.0
        %781 = vmatpush1.msra.mxu0 0.0
        %782 = vmatprep.subr.mxu0 0.0
        %783 = vmatpush1.msra.mxu0 0.0
        %784 = vmatprep.subr.mxu0 0.0
        %785 = vmatpush1.msra.mxu0 0.0
        %786 = vmatprep.subr.mxu0 0.0
        %787 = vmatpush1.msra.mxu0 0.0
        %788 = vmatprep.subr.mxu0 0.0
        %789 = vmatpush1.msra.mxu0 0.0
        %790 = vmatprep.subr.mxu0 0.0
        %791 = vmatpush1.msra.mxu0 0.0
        %792 = vmatprep.mubr.f32.mxu0 0.0
        %793 = vmatmul.mubr.f32.gmra.mrb[0].mxu0 %v655
        %v794 = vpop.f32.mrb[0].mxu0
        %v795 = vadd.f32 0.0, %v794
        %v796 = vpop.f32.mrb[0].mxu0
        %797 = vdwg.mxu0
        %v798 = vadd.f32 %v637, %v724
        %v799 = vadd.f32 %v638, %v726
        %v800 = vadd.f32 %v639, %v795
        %s801 = scalar_lea.vmem %s0, 32
        %v802 = vld [vmem:[%s801] sm:$0xff]
        %803 = vrot.lane.b32.xlu0 %v169, 109
        %v804 = vpop.permute.xlu0 %803
        %805 = vrot.lane.b32.xlu0 %v170, 109
        %v806 = vpop.permute.xlu0 %805
        %807 = vrot.lane.b32.xlu0 %v171, 109
        %v808 = vpop.permute.xlu0 %807
        %vm809 = vcmask 891904
        %v810 = vsel %vm809, %v804, %v806
        %v811 = vsel %vm809, %v806, %v808
        %v816 = vsel %vm190, %v802, 0
        %818 = vmatprep.subr.mxu0 %v811
        %819 = vmatpush1.msra.mxu0 %v810
        %820 = vmatprep.subr.mxu0 0.0
        %821 = vmatpush1.msra.mxu0 0.0
        %822 = vmatprep.subr.mxu0 0.0
        %823 = vmatpush1.msra.mxu0 0.0
        %824 = vmatprep.subr.mxu0 0.0
        %825 = vmatpush1.msra.mxu0 0.0
        %826 = vmatprep.subr.mxu0 0.0
        %827 = vmatpush1.msra.mxu0 0.0
        %828 = vmatprep.subr.mxu0 0.0
        %829 = vmatpush1.msra.mxu0 0.0
        %830 = vmatprep.subr.mxu0 0.0
        %831 = vmatpush1.msra.mxu0 0.0
        %832 = vmatprep.subr.mxu0 0.0
        %833 = vmatpush1.msra.mxu0 0.0
        %834 = vmatprep.subr.mxu0 0.0
        %835 = vmatpush1.msra.mxu0 0.0
        %836 = vmatprep.subr.mxu0 0.0
        %837 = vmatpush1.msra.mxu0 0.0
        %838 = vmatprep.subr.mxu0 0.0
        %839 = vmatpush1.msra.mxu0 0.0
        %840 = vmatprep.subr.mxu0 0.0
        %841 = vmatpush1.msra.mxu0 0.0
        %842 = vmatprep.subr.mxu0 0.0
        %843 = vmatpush1.msra.mxu0 0.0
        %844 = vmatprep.subr.mxu0 0.0
        %845 = vmatpush1.msra.mxu0 0.0
        %846 = vmatprep.subr.mxu0 0.0
        %847 = vmatpush1.msra.mxu0 0.0
        %848 = vmatprep.subr.mxu0 0.0
        %849 = vmatpush1.msra.mxu0 0.0
        %850 = vmatprep.subr.mxu0 0.0
        %851 = vmatpush1.msra.mxu0 0.0
        %852 = vmatprep.subr.mxu0 0.0
        %853 = vmatpush1.msra.mxu0 0.0
        %854 = vmatprep.subr.mxu0 0.0
        %855 = vmatpush1.msra.mxu0 0.0
        %856 = vmatprep.subr.mxu0 0.0
        %857 = vmatpush1.msra.mxu0 0.0
        %858 = vmatprep.subr.mxu0 0.0
        %859 = vmatpush1.msra.mxu0 0.0
        %860 = vmatprep.subr.mxu0 0.0
        %861 = vmatpush1.msra.mxu0 0.0
        %862 = vmatprep.subr.mxu0 0.0
        %863 = vmatpush1.msra.mxu0 0.0
        %864 = vmatprep.subr.mxu0 0.0
        %865 = vmatpush1.msra.mxu0 0.0
        %866 = vmatprep.subr.mxu0 0.0
        %867 = vmatpush1.msra.mxu0 0.0
        %868 = vmatprep.subr.mxu0 0.0
        %869 = vmatpush1.msra.mxu0 0.0
        %870 = vmatprep.subr.mxu0 0.0
        %871 = vmatpush1.msra.mxu0 0.0
        %872 = vmatprep.subr.mxu0 0.0
        %873 = vmatpush1.msra.mxu0 0.0
        %874 = vmatprep.subr.mxu0 0.0
        %875 = vmatpush1.msra.mxu0 0.0
        %876 = vmatprep.subr.mxu0 0.0
        %877 = vmatpush1.msra.mxu0 0.0
        %878 = vmatprep.subr.mxu0 0.0
        %879 = vmatpush1.msra.mxu0 0.0
        %880 = vmatprep.subr.mxu0 0.0
        %881 = vmatpush1.msra.mxu0 0.0
        %882 = vmatprep.mubr.f32.mxu0 0.0
        %883 = vmatmul.mubr.f32.gmra.mrb[0].mxu0 %v816
        %v884 = vpop.f32.mrb[0].mxu0
        %v885 = vadd.f32 0.0, %v884
        %v886 = vpop.f32.mrb[0].mxu0
        %v887 = vadd.f32 0.0, %v886
        %888 = vdwg.mxu0
        %889 = vmatprep.subr.mxu0 0.0
        %890 = vmatpush1.msra.mxu0 %v808
        %891 = vmatprep.subr.mxu0 0.0
        %892 = vmatpush1.msra.mxu0 0.0
        %893 = vmatprep.subr.mxu0 0.0
        %894 = vmatpush1.msra.mxu0 0.0
        %895 = vmatprep.subr.mxu0 0.0
        %896 = vmatpush1.msra.mxu0 0.0
        %897 = vmatprep.subr.mxu0 0.0
        %898 = vmatpush1.msra.mxu0 0.0
        %899 = vmatprep.subr.mxu0 0.0
        %900 = vmatpush1.msra.mxu0 0.0
        %901 = vmatprep.subr.mxu0 0.0
        %902 = vmatpush1.msra.mxu0 0.0
        %903 = vmatprep.subr.mxu0 0.0
        %904 = vmatpush1.msra.mxu0 0.0
        %905 = vmatprep.subr.mxu0 0.0
        %906 = vmatpush1.msra.mxu0 0.0
        %907 = vmatprep.subr.mxu0 0.0
        %908 = vmatpush1.msra.mxu0 0.0
        %909 = vmatprep.subr.mxu0 0.0
        %910 = vmatpush1.msra.mxu0 0.0
        %911 = vmatprep.subr.mxu0 0.0
        %912 = vmatpush1.msra.mxu0 0.0
        %913 = vmatprep.subr.mxu0 0.0
        %914 = vmatpush1.msra.mxu0 0.0
        %915 = vmatprep.subr.mxu0 0.0
        %916 = vmatpush1.msra.mxu0 0.0
        %917 = vmatprep.subr.mxu0 0.0
        %918 = vmatpush1.msra.mxu0 0.0
        %919 = vmatprep.subr.mxu0 0.0
        %920 = vmatpush1.msra.mxu0 0.0
        %921 = vmatprep.subr.mxu0 0.0
        %922 = vmatpush1.msra.mxu0 0.0
        %923 = vmatprep.subr.mxu0 0.0
        %924 = vmatpush1.msra.mxu0 0.0
        %925 = vmatprep.subr.mxu0 0.0
        %926 = vmatpush1.msra.mxu0 0.0
        %927 = vmatprep.subr.mxu0 0.0
        %928 = vmatpush1.msra.mxu0 0.0
        %929 = vmatprep.subr.mxu0 0.0
        %930 = vmatpush1.msra.mxu0 0.0
        %931 = vmatprep.subr.mxu0 0.0
        %932 = vmatpush1.msra.mxu0 0.0
        %933 = vmatprep.subr.mxu0 0.0
        %934 = vmatpush1.msra.mxu0 0.0
        %935 = vmatprep.subr.mxu0 0.0
        %936 = vmatpush1.msra.mxu0 0.0
        %937 = vmatprep.subr.mxu0 0.0
        %938 = vmatpush1.msra.mxu0 0.0
        %939 = vmatprep.subr.mxu0 0.0
        %940 = vmatpush1.msra.mxu0 0.0
        %941 = vmatprep.subr.mxu0 0.0
        %942 = vmatpush1.msra.mxu0 0.0
        %943 = vmatprep.subr.mxu0 0.0
        %944 = vmatpush1.msra.mxu0 0.0
        %945 = vmatprep.subr.mxu0 0.0
        %946 = vmatpush1.msra.mxu0 0.0
        %947 = vmatprep.subr.mxu0 0.0
        %948 = vmatpush1.msra.mxu0 0.0
        %949 = vmatprep.subr.mxu0 0.0
        %950 = vmatpush1.msra.mxu0 0.0
        %951 = vmatprep.subr.mxu0 0.0
        %952 = vmatpush1.msra.mxu0 0.0
        %953 = vmatprep.mubr.f32.mxu0 0.0
        %954 = vmatmul.mubr.f32.gmra.mrb[0].mxu0 %v816
        %v955 = vpop.f32.mrb[0].mxu0
        %v956 = vadd.f32 0.0, %v955
        %v957 = vpop.f32.mrb[0].mxu0
        %958 = vdwg.mxu0
        %v959 = vadd.f32 %v798, %v885
        %v960 = vadd.f32 %v799, %v887
        %v961 = vadd.f32 %v800, %v956
        %s962 = scalar_lea.vmem %s0, 40
        %v963 = vld [vmem:[%s962] sm:$0xff]
        %964 = vrot.lane.b32.xlu0 %v169, 108
        %v965 = vpop.permute.xlu0 %964
        %966 = vrot.lane.b32.xlu0 %v170, 108
        %v967 = vpop.permute.xlu0 %966
        %968 = vrot.lane.b32.xlu0 %v171, 108
        %v969 = vpop.permute.xlu0 %968
        %vm970 = vcmask 883712
        %v971 = vsel %vm970, %v965, %v967
        %v972 = vsel %vm970, %v967, %v969
        %v977 = vsel %vm190, %v963, 0
        %979 = vmatprep.subr.mxu0 %v972
        %980 = vmatpush1.msra.mxu0 %v971
        %981 = vmatprep.subr.mxu0 0.0
        %982 = vmatpush1.msra.mxu0 0.0
        %983 = vmatprep.subr.mxu0 0.0
        %984 = vmatpush1.msra.mxu0 0.0
        %985 = vmatprep.subr.mxu0 0.0
        %986 = vmatpush1.msra.mxu0 0.0
        %987 = vmatprep.subr.mxu0 0.0
        %988 = vmatpush1.msra.mxu0 0.0
        %989 = vmatprep.subr.mxu0 0.0
        %990 = vmatpush1.msra.mxu0 0.0
        %991 = vmatprep.subr.mxu0 0.0
        %992 = vmatpush1.msra.mxu0 0.0
        %993 = vmatprep.subr.mxu0 0.0
        %994 = vmatpush1.msra.mxu0 0.0
        %995 = vmatprep.subr.mxu0 0.0
        %996 = vmatpush1.msra.mxu0 0.0
        %997 = vmatprep.subr.mxu0 0.0
        %998 = vmatpush1.msra.mxu0 0.0
        %999 = vmatprep.subr.mxu0 0.0
        %1000 = vmatpush1.msra.mxu0 0.0
        %1001 = vmatprep.subr.mxu0 0.0
        %1002 = vmatpush1.msra.mxu0 0.0
        %1003 = vmatprep.subr.mxu0 0.0
        %1004 = vmatpush1.msra.mxu0 0.0
        %1005 = vmatprep.subr.mxu0 0.0
        %1006 = vmatpush1.msra.mxu0 0.0
        %1007 = vmatprep.subr.mxu0 0.0
        %1008 = vmatpush1.msra.mxu0 0.0
        %1009 = vmatprep.subr.mxu0 0.0
        %1010 = vmatpush1.msra.mxu0 0.0
        %1011 = vmatprep.subr.mxu0 0.0
        %1012 = vmatpush1.msra.mxu0 0.0
        %1013 = vmatprep.subr.mxu0 0.0
        %1014 = vmatpush1.msra.mxu0 0.0
        %1015 = vmatprep.subr.mxu0 0.0
        %1016 = vmatpush1.msra.mxu0 0.0
        %1017 = vmatprep.subr.mxu0 0.0
        %1018 = vmatpush1.msra.mxu0 0.0
        %1019 = vmatprep.subr.mxu0 0.0
        %1020 = vmatpush1.msra.mxu0 0.0
        %1021 = vmatprep.subr.mxu0 0.0
        %1022 = vmatpush1.msra.mxu0 0.0
        %1023 = vmatprep.subr.mxu0 0.0
        %1024 = vmatpush1.msra.mxu0 0.0
        %1025 = vmatprep.subr.mxu0 0.0
        %1026 = vmatpush1.msra.mxu0 0.0
        %1027 = vmatprep.subr.mxu0 0.0
        %1028 = vmatpush1.msra.mxu0 0.0
        %1029 = vmatprep.subr.mxu0 0.0
        %1030 = vmatpush1.msra.mxu0 0.0
        %1031 = vmatprep.subr.mxu0 0.0
        %1032 = vmatpush1.msra.mxu0 0.0
        %1033 = vmatprep.subr.mxu0 0.0
        %1034 = vmatpush1.msra.mxu0 0.0
        %1035 = vmatprep.subr.mxu0 0.0
        %1036 = vmatpush1.msra.mxu0 0.0
        %1037 = vmatprep.subr.mxu0 0.0
        %1038 = vmatpush1.msra.mxu0 0.0
        %1039 = vmatprep.subr.mxu0 0.0
        %1040 = vmatpush1.msra.mxu0 0.0
        %1041 = vmatprep.subr.mxu0 0.0
        %1042 = vmatpush1.msra.mxu0 0.0
        %1043 = vmatprep.mubr.f32.mxu0 0.0
        %1044 = vmatmul.mubr.f32.gmra.mrb[0].mxu0 %v977
        %v1045 = vpop.f32.mrb[0].mxu0
        %v1046 = vadd.f32 0.0, %v1045
        %v1047 = vpop.f32.mrb[0].mxu0
        %v1048 = vadd.f32 0.0, %v1047
        %1049 = vdwg.mxu0
        %1050 = vmatprep.subr.mxu0 0.0
        %1051 = vmatpush1.msra.mxu0 %v969
        %1052 = vmatprep.subr.mxu0 0.0
        %1053 = vmatpush1.msra.mxu0 0.0
        %1054 = vmatprep.subr.mxu0 0.0
        %1055 = vmatpush1.msra.mxu0 0.0
        %1056 = vmatprep.subr.mxu0 0.0
        %1057 = vmatpush1.msra.mxu0 0.0
        %1058 = vmatprep.subr.mxu0 0.0
        %1059 = vmatpush1.msra.mxu0 0.0
        %1060 = vmatprep.subr.mxu0 0.0
        %1061 = vmatpush1.msra.mxu0 0.0
        %1062 = vmatprep.subr.mxu0 0.0
        %1063 = vmatpush1.msra.mxu0 0.0
        %1064 = vmatprep.subr.mxu0 0.0
        %1065 = vmatpush1.msra.mxu0 0.0
        %1066 = vmatprep.subr.mxu0 0.0
        %1067 = vmatpush1.msra.mxu0 0.0
        %1068 = vmatprep.subr.mxu0 0.0
        %1069 = vmatpush1.msra.mxu0 0.0
        %1070 = vmatprep.subr.mxu0 0.0
        %1071 = vmatpush1.msra.mxu0 0.0
        %1072 = vmatprep.subr.mxu0 0.0
        %1073 = vmatpush1.msra.mxu0 0.0
        %1074 = vmatprep.subr.mxu0 0.0
        %1075 = vmatpush1.msra.mxu0 0.0
        %1076 = vmatprep.subr.mxu0 0.0
        %1077 = vmatpush1.msra.mxu0 0.0
        %1078 = vmatprep.subr.mxu0 0.0
        %1079 = vmatpush1.msra.mxu0 0.0
        %1080 = vmatprep.subr.mxu0 0.0
        %1081 = vmatpush1.msra.mxu0 0.0
        %1082 = vmatprep.subr.mxu0 0.0
        %1083 = vmatpush1.msra.mxu0 0.0
        %1084 = vmatprep.subr.mxu0 0.0
        %1085 = vmatpush1.msra.mxu0 0.0
        %1086 = vmatprep.subr.mxu0 0.0
        %1087 = vmatpush1.msra.mxu0 0.0
        %1088 = vmatprep.subr.mxu0 0.0
        %1089 = vmatpush1.msra.mxu0 0.0
        %1090 = vmatprep.subr.mxu0 0.0
        %1091 = vmatpush1.msra.mxu0 0.0
        %1092 = vmatprep.subr.mxu0 0.0
        %1093 = vmatpush1.msra.mxu0 0.0
        %1094 = vmatprep.subr.mxu0 0.0
        %1095 = vmatpush1.msra.mxu0 0.0
        %1096 = vmatprep.subr.mxu0 0.0
        %1097 = vmatpush1.msra.mxu0 0.0
        %1098 = vmatprep.subr.mxu0 0.0
        %1099 = vmatpush1.msra.mxu0 0.0
        %1100 = vmatprep.subr.mxu0 0.0
        %1101 = vmatpush1.msra.mxu0 0.0
        %1102 = vmatprep.subr.mxu0 0.0
        %1103 = vmatpush1.msra.mxu0 0.0
        %1104 = vmatprep.subr.mxu0 0.0
        %1105 = vmatpush1.msra.mxu0 0.0
        %1106 = vmatprep.subr.mxu0 0.0
        %1107 = vmatpush1.msra.mxu0 0.0
        %1108 = vmatprep.subr.mxu0 0.0
        %1109 = vmatpush1.msra.mxu0 0.0
        %1110 = vmatprep.subr.mxu0 0.0
        %1111 = vmatpush1.msra.mxu0 0.0
        %1112 = vmatprep.subr.mxu0 0.0
        %1113 = vmatpush1.msra.mxu0 0.0
        %1114 = vmatprep.mubr.f32.mxu0 0.0
        %1115 = vmatmul.mubr.f32.gmra.mrb[0].mxu0 %v977
        %v1116 = vpop.f32.mrb[0].mxu0
        %v1117 = vadd.f32 0.0, %v1116
        %v1118 = vpop.f32.mrb[0].mxu0
        %1119 = vdwg.mxu0
        %v1120 = vadd.f32 %v959, %v1046
        %v1121 = vadd.f32 %v960, %v1048
        %v1122 = vadd.f32 %v961, %v1117
        %s1123 = scalar_lea.vmem %s0, 48
        %v1124 = vld [vmem:[%s1123] sm:$0xff]
        %1125 = vrot.lane.b32.xlu0 %v169, 92
        %v1126 = vpop.permute.xlu0 %1125
        %1127 = vrot.lane.b32.xlu0 %v170, 92
        %v1128 = vpop.permute.xlu0 %1127
        %1129 = vrot.lane.b32.xlu0 %v171, 92
        %v1130 = vpop.permute.xlu0 %1129
        %vm1131 = vcmask 752640
        %v1132 = vsel %vm1131, %v1126, %v1128
        %v1133 = vsel %vm1131, %v1128, %v1130
        %v1138 = vsel %vm190, %v1124, 0
        %1140 = vmatprep.subr.mxu0 %v1133
        %1141 = vmatpush1.msra.mxu0 %v1132
        %1142 = vmatprep.subr.mxu0 0.0
        %1143 = vmatpush1.msra.mxu0 0.0
        %1144 = vmatprep.subr.mxu0 0.0
        %1145 = vmatpush1.msra.mxu0 0.0
        %1146 = vmatprep.subr.mxu0 0.0
        %1147 = vmatpush1.msra.mxu0 0.0
        %1148 = vmatprep.subr.mxu0 0.0
        %1149 = vmatpush1.msra.mxu0 0.0
        %1150 = vmatprep.subr.mxu0 0.0
        %1151 = vmatpush1.msra.mxu0 0.0
        %1152 = vmatprep.subr.mxu0 0.0
        %1153 = vmatpush1.msra.mxu0 0.0
        %1154 = vmatprep.subr.mxu0 0.0
        %1155 = vmatpush1.msra.mxu0 0.0
        %1156 = vmatprep.subr.mxu0 0.0
        %1157 = vmatpush1.msra.mxu0 0.0
        %1158 = vmatprep.subr.mxu0 0.0
        %1159 = vmatpush1.msra.mxu0 0.0
        %1160 = vmatprep.subr.mxu0 0.0
        %1161 = vmatpush1.msra.mxu0 0.0
        %1162 = vmatprep.subr.mxu0 0.0
        %1163 = vmatpush1.msra.mxu0 0.0
        %1164 = vmatprep.subr.mxu0 0.0
        %1165 = vmatpush1.msra.mxu0 0.0
        %1166 = vmatprep.subr.mxu0 0.0
        %1167 = vmatpush1.msra.mxu0 0.0
        %1168 = vmatprep.subr.mxu0 0.0
        %1169 = vmatpush1.msra.mxu0 0.0
        %1170 = vmatprep.subr.mxu0 0.0
        %1171 = vmatpush1.msra.mxu0 0.0
        %1172 = vmatprep.subr.mxu0 0.0
        %1173 = vmatpush1.msra.mxu0 0.0
        %1174 = vmatprep.subr.mxu0 0.0
        %1175 = vmatpush1.msra.mxu0 0.0
        %1176 = vmatprep.subr.mxu0 0.0
        %1177 = vmatpush1.msra.mxu0 0.0
        %1178 = vmatprep.subr.mxu0 0.0
        %1179 = vmatpush1.msra.mxu0 0.0
        %1180 = vmatprep.subr.mxu0 0.0
        %1181 = vmatpush1.msra.mxu0 0.0
        %1182 = vmatprep.subr.mxu0 0.0
        %1183 = vmatpush1.msra.mxu0 0.0
        %1184 = vmatprep.subr.mxu0 0.0
        %1185 = vmatpush1.msra.mxu0 0.0
        %1186 = vmatprep.subr.mxu0 0.0
        %1187 = vmatpush1.msra.mxu0 0.0
        %1188 = vmatprep.subr.mxu0 0.0
        %1189 = vmatpush1.msra.mxu0 0.0
        %1190 = vmatprep.subr.mxu0 0.0
        %1191 = vmatpush1.msra.mxu0 0.0
        %1192 = vmatprep.subr.mxu0 0.0
        %1193 = vmatpush1.msra.mxu0 0.0
        %1194 = vmatprep.subr.mxu0 0.0
        %1195 = vmatpush1.msra.mxu0 0.0
        %1196 = vmatprep.subr.mxu0 0.0
        %1197 = vmatpush1.msra.mxu0 0.0
        %1198 = vmatprep.subr.mxu0 0.0
        %1199 = vmatpush1.msra.mxu0 0.0
        %1200 = vmatprep.subr.mxu0 0.0
        %1201 = vmatpush1.msra.mxu0 0.0
        %1202 = vmatprep.subr.mxu0 0.0
        %1203 = vmatpush1.msra.mxu0 0.0
        %1204 = vmatprep.mubr.f32.mxu0 0.0
        %1205 = vmatmul.mubr.f32.gmra.mrb[0].mxu0 %v1138
        %v1206 = vpop.f32.mrb[0].mxu0
        %v1207 = vadd.f32 0.0, %v1206
        %v1208 = vpop.f32.mrb[0].mxu0
        %v1209 = vadd.f32 0.0, %v1208
        %1210 = vdwg.mxu0
        %1211 = vmatprep.subr.mxu0 0.0
        %1212 = vmatpush1.msra.mxu0 %v1130
        %1213 = vmatprep.subr.mxu0 0.0
        %1214 = vmatpush1.msra.mxu0 0.0
        %1215 = vmatprep.subr.mxu0 0.0
        %1216 = vmatpush1.msra.mxu0 0.0
        %1217 = vmatprep.subr.mxu0 0.0
        %1218 = vmatpush1.msra.mxu0 0.0
        %1219 = vmatprep.subr.mxu0 0.0
        %1220 = vmatpush1.msra.mxu0 0.0
        %1221 = vmatprep.subr.mxu0 0.0
        %1222 = vmatpush1.msra.mxu0 0.0
        %1223 = vmatprep.subr.mxu0 0.0
        %1224 = vmatpush1.msra.mxu0 0.0
        %1225 = vmatprep.subr.mxu0 0.0
        %1226 = vmatpush1.msra.mxu0 0.0
        %1227 = vmatprep.subr.mxu0 0.0
        %1228 = vmatpush1.msra.mxu0 0.0
        %1229 = vmatprep.subr.mxu0 0.0
        %1230 = vmatpush1.msra.mxu0 0.0
        %1231 = vmatprep.subr.mxu0 0.0
        %1232 = vmatpush1.msra.mxu0 0.0
        %1233 = vmatprep.subr.mxu0 0.0
        %1234 = vmatpush1.msra.mxu0 0.0
        %1235 = vmatprep.subr.mxu0 0.0
        %1236 = vmatpush1.msra.mxu0 0.0
        %1237 = vmatprep.subr.mxu0 0.0
        %1238 = vmatpush1.msra.mxu0 0.0
        %1239 = vmatprep.subr.mxu0 0.0
        %1240 = vmatpush1.msra.mxu0 0.0
        %1241 = vmatprep.subr.mxu0 0.0
        %1242 = vmatpush1.msra.mxu0 0.0
        %1243 = vmatprep.subr.mxu0 0.0
        %1244 = vmatpush1.msra.mxu0 0.0
        %1245 = vmatprep.subr.mxu0 0.0
        %1246 = vmatpush1.msra.mxu0 0.0
        %1247 = vmatprep.subr.mxu0 0.0
        %1248 = vmatpush1.msra.mxu0 0.0
        %1249 = vmatprep.subr.mxu0 0.0
        %1250 = vmatpush1.msra.mxu0 0.0
        %1251 = vmatprep.subr.mxu0 0.0
        %1252 = vmatpush1.msra.mxu0 0.0
        %1253 = vmatprep.subr.mxu0 0.0
        %1254 = vmatpush1.msra.mxu0 0.0
        %1255 = vmatprep.subr.mxu0 0.0
        %1256 = vmatpush1.msra.mxu0 0.0
        %1257 = vmatprep.subr.mxu0 0.0
        %1258 = vmatpush1.msra.mxu0 0.0
        %1259 = vmatprep.subr.mxu0 0.0
        %1260 = vmatpush1.msra.mxu0 0.0
        %1261 = vmatprep.subr.mxu0 0.0
        %1262 = vmatpush1.msra.mxu0 0.0
        %1263 = vmatprep.subr.mxu0 0.0
        %1264 = vmatpush1.msra.mxu0 0.0
        %1265 = vmatprep.subr.mxu0 0.0
        %1266 = vmatpush1.msra.mxu0 0.0
        %1267 = vmatprep.subr.mxu0 0.0
        %1268 = vmatpush1.msra.mxu0 0.0
        %1269 = vmatprep.subr.mxu0 0.0
        %1270 = vmatpush1.msra.mxu0 0.0
        %1271 = vmatprep.subr.mxu0 0.0
        %1272 = vmatpush1.msra.mxu0 0.0
        %1273 = vmatprep.subr.mxu0 0.0
        %1274 = vmatpush1.msra.mxu0 0.0
        %1275 = vmatprep.mubr.f32.mxu0 0.0
        %1276 = vmatmul.mubr.f32.gmra.mrb[0].mxu0 %v1138
        %v1277 = vpop.f32.mrb[0].mxu0
        %v1278 = vadd.f32 0.0, %v1277
        %v1279 = vpop.f32.mrb[0].mxu0
        %1280 = vdwg.mxu0
        %v1281 = vadd.f32 %v1120, %v1207
        %v1282 = vadd.f32 %v1121, %v1209
        %v1283 = vadd.f32 %v1122, %v1278
        %s1284 = scalar_lea.vmem %s0, 56
        %v1285 = vld [vmem:[%s1284] sm:$0xff]
        %1286 = vrot.lane.b32.xlu0 %v169, 91
        %v1287 = vpop.permute.xlu0 %1286
        %1288 = vrot.lane.b32.xlu0 %v170, 91
        %v1289 = vpop.permute.xlu0 %1288
        %1290 = vrot.lane.b32.xlu0 %v171, 91
        %v1291 = vpop.permute.xlu0 %1290
        %vm1292 = vcmask 744448
        %v1293 = vsel %vm1292, %v1287, %v1289
        %v1294 = vsel %vm1292, %v1289, %v1291
        %v1299 = vsel %vm190, %v1285, 0
        %1301 = vmatprep.subr.mxu0 %v1294
        %1302 = vmatpush1.msra.mxu0 %v1293
        %1303 = vmatprep.subr.mxu0 0.0
        %1304 = vmatpush1.msra.mxu0 0.0
        %1305 = vmatprep.subr.mxu0 0.0
        %1306 = vmatpush1.msra.mxu0 0.0
        %1307 = vmatprep.subr.mxu0 0.0
        %1308 = vmatpush1.msra.mxu0 0.0
        %1309 = vmatprep.subr.mxu0 0.0
        %1310 = vmatpush1.msra.mxu0 0.0
        %1311 = vmatprep.subr.mxu0 0.0
        %1312 = vmatpush1.msra.mxu0 0.0
        %1313 = vmatprep.subr.mxu0 0.0
        %1314 = vmatpush1.msra.mxu0 0.0
        %1315 = vmatprep.subr.mxu0 0.0
        %1316 = vmatpush1.msra.mxu0 0.0
        %1317 = vmatprep.subr.mxu0 0.0
        %1318 = vmatpush1.msra.mxu0 0.0
        %1319 = vmatprep.subr.mxu0 0.0
        %1320 = vmatpush1.msra.mxu0 0.0
        %1321 = vmatprep.subr.mxu0 0.0
        %1322 = vmatpush1.msra.mxu0 0.0
        %1323 = vmatprep.subr.mxu0 0.0
        %1324 = vmatpush1.msra.mxu0 0.0
        %1325 = vmatprep.subr.mxu0 0.0
        %1326 = vmatpush1.msra.mxu0 0.0
        %1327 = vmatprep.subr.mxu0 0.0
        %1328 = vmatpush1.msra.mxu0 0.0
        %1329 = vmatprep.subr.mxu0 0.0
        %1330 = vmatpush1.msra.mxu0 0.0
        %1331 = vmatprep.subr.mxu0 0.0
        %1332 = vmatpush1.msra.mxu0 0.0
        %1333 = vmatprep.subr.mxu0 0.0
        %1334 = vmatpush1.msra.mxu0 0.0
        %1335 = vmatprep.subr.mxu0 0.0
        %1336 = vmatpush1.msra.mxu0 0.0
        %1337 = vmatprep.subr.mxu0 0.0
        %1338 = vmatpush1.msra.mxu0 0.0
        %1339 = vmatprep.subr.mxu0 0.0
        %1340 = vmatpush1.msra.mxu0 0.0
        %1341 = vmatprep.subr.mxu0 0.0
        %1342 = vmatpush1.msra.mxu0 0.0
        %1343 = vmatprep.subr.mxu0 0.0
        %1344 = vmatpush1.msra.mxu0 0.0
        %1345 = vmatprep.subr.mxu0 0.0
        %1346 = vmatpush1.msra.mxu0 0.0
        %1347 = vmatprep.subr.mxu0 0.0
        %1348 = vmatpush1.msra.mxu0 0.0
        %1349 = vmatprep.subr.mxu0 0.0
        %1350 = vmatpush1.msra.mxu0 0.0
        %1351 = vmatprep.subr.mxu0 0.0
        %1352 = vmatpush1.msra.mxu0 0.0
        %1353 = vmatprep.subr.mxu0 0.0
        %1354 = vmatpush1.msra.mxu0 0.0
        %1355 = vmatprep.subr.mxu0 0.0
        %1356 = vmatpush1.msra.mxu0 0.0
        %1357 = vmatprep.subr.mxu0 0.0
        %1358 = vmatpush1.msra.mxu0 0.0
        %1359 = vmatprep.subr.mxu0 0.0
        %1360 = vmatpush1.msra.mxu0 0.0
        %1361 = vmatprep.subr.mxu0 0.0
        %1362 = vmatpush1.msra.mxu0 0.0
        %1363 = vmatprep.subr.mxu0 0.0
        %1364 = vmatpush1.msra.mxu0 0.0
        %1365 = vmatprep.mubr.f32.mxu0 0.0
        %1366 = vmatmul.mubr.f32.gmra.mrb[0].mxu0 %v1299
        %v1367 = vpop.f32.mrb[0].mxu0
        %v1368 = vadd.f32 0.0, %v1367
        %v1369 = vpop.f32.mrb[0].mxu0
        %v1370 = vadd.f32 0.0, %v1369
        %1371 = vdwg.mxu0
        %1372 = vmatprep.subr.mxu0 0.0
        %1373 = vmatpush1.msra.mxu0 %v1291
        %1374 = vmatprep.subr.mxu0 0.0
        %1375 = vmatpush1.msra.mxu0 0.0
        %1376 = vmatprep.subr.mxu0 0.0
        %1377 = vmatpush1.msra.mxu0 0.0
        %1378 = vmatprep.subr.mxu0 0.0
        %1379 = vmatpush1.msra.mxu0 0.0
        %1380 = vmatprep.subr.mxu0 0.0
        %1381 = vmatpush1.msra.mxu0 0.0
        %1382 = vmatprep.subr.mxu0 0.0
        %1383 = vmatpush1.msra.mxu0 0.0
        %1384 = vmatprep.subr.mxu0 0.0
        %1385 = vmatpush1.msra.mxu0 0.0
        %1386 = vmatprep.subr.mxu0 0.0
        %1387 = vmatpush1.msra.mxu0 0.0
        %1388 = vmatprep.subr.mxu0 0.0
        %1389 = vmatpush1.msra.mxu0 0.0
        %1390 = vmatprep.subr.mxu0 0.0
        %1391 = vmatpush1.msra.mxu0 0.0
        %1392 = vmatprep.subr.mxu0 0.0
        %1393 = vmatpush1.msra.mxu0 0.0
        %1394 = vmatprep.subr.mxu0 0.0
        %1395 = vmatpush1.msra.mxu0 0.0
        %1396 = vmatprep.subr.mxu0 0.0
        %1397 = vmatpush1.msra.mxu0 0.0
        %1398 = vmatprep.subr.mxu0 0.0
        %1399 = vmatpush1.msra.mxu0 0.0
        %1400 = vmatprep.subr.mxu0 0.0
        %1401 = vmatpush1.msra.mxu0 0.0
        %1402 = vmatprep.subr.mxu0 0.0
        %1403 = vmatpush1.msra.mxu0 0.0
        %1404 = vmatprep.subr.mxu0 0.0
        %1405 = vmatpush1.msra.mxu0 0.0
        %1406 = vmatprep.subr.mxu0 0.0
        %1407 = vmatpush1.msra.mxu0 0.0
        %1408 = vmatprep.subr.mxu0 0.0
        %1409 = vmatpush1.msra.mxu0 0.0
        %1410 = vmatprep.subr.mxu0 0.0
        %1411 = vmatpush1.msra.mxu0 0.0
        %1412 = vmatprep.subr.mxu0 0.0
        %1413 = vmatpush1.msra.mxu0 0.0
        %1414 = vmatprep.subr.mxu0 0.0
        %1415 = vmatpush1.msra.mxu0 0.0
        %1416 = vmatprep.subr.mxu0 0.0
        %1417 = vmatpush1.msra.mxu0 0.0
        %1418 = vmatprep.subr.mxu0 0.0
        %1419 = vmatpush1.msra.mxu0 0.0
        %1420 = vmatprep.subr.mxu0 0.0
        %1421 = vmatpush1.msra.mxu0 0.0
        %1422 = vmatprep.subr.mxu0 0.0
        %1423 = vmatpush1.msra.mxu0 0.0
        %1424 = vmatprep.subr.mxu0 0.0
        %1425 = vmatpush1.msra.mxu0 0.0
        %1426 = vmatprep.subr.mxu0 0.0
        %1427 = vmatpush1.msra.mxu0 0.0
        %1428 = vmatprep.subr.mxu0 0.0
        %1429 = vmatpush1.msra.mxu0 0.0
        %1430 = vmatprep.subr.mxu0 0.0
        %1431 = vmatpush1.msra.mxu0 0.0
        %1432 = vmatprep.subr.mxu0 0.0
        %1433 = vmatpush1.msra.mxu0 0.0
        %1434 = vmatprep.subr.mxu0 0.0
        %1435 = vmatpush1.msra.mxu0 0.0
        %1436 = vmatprep.mubr.f32.mxu0 0.0
        %1437 = vmatmul.mubr.f32.gmra.mrb[0].mxu0 %v1299
        %v1438 = vpop.f32.mrb[0].mxu0
        %v1439 = vadd.f32 0.0, %v1438
        %v1440 = vpop.f32.mrb[0].mxu0
        %1441 = vdwg.mxu0
        %v1442 = vadd.f32 %v1281, %v1368
        %v1443 = vadd.f32 %v1282, %v1370
        %v1444 = vadd.f32 %v1283, %v1439
        %s1445 = scalar_lea.vmem %s0, 64
        %v1446 = vld [vmem:[%s1445] sm:$0xff]
        %1447 = vrot.lane.b32.xlu0 %v169, 90
        %v1448 = vpop.permute.xlu0 %1447
        %1449 = vrot.lane.b32.xlu0 %v170, 90
        %v1450 = vpop.permute.xlu0 %1449
        %1451 = vrot.lane.b32.xlu0 %v171, 90
        %v1452 = vpop.permute.xlu0 %1451
        %vm1453 = vcmask 736256
        %v1454 = vsel %vm1453, %v1448, %v1450
        %v1455 = vsel %vm1453, %v1450, %v1452
        %v1460 = vsel %vm190, %v1446, 0
        %1462 = vmatprep.subr.mxu0 %v1455
        %1463 = vmatpush1.msra.mxu0 %v1454
        %1464 = vmatprep.subr.mxu0 0.0
        %1465 = vmatpush1.msra.mxu0 0.0
        %1466 = vmatprep.subr.mxu0 0.0
        %1467 = vmatpush1.msra.mxu0 0.0
        %1468 = vmatprep.subr.mxu0 0.0
        %1469 = vmatpush1.msra.mxu0 0.0
        %1470 = vmatprep.subr.mxu0 0.0
        %1471 = vmatpush1.msra.mxu0 0.0
        %1472 = vmatprep.subr.mxu0 0.0
        %1473 = vmatpush1.msra.mxu0 0.0
        %1474 = vmatprep.subr.mxu0 0.0
        %1475 = vmatpush1.msra.mxu0 0.0
        %1476 = vmatprep.subr.mxu0 0.0
        %1477 = vmatpush1.msra.mxu0 0.0
        %1478 = vmatprep.subr.mxu0 0.0
        %1479 = vmatpush1.msra.mxu0 0.0
        %1480 = vmatprep.subr.mxu0 0.0
        %1481 = vmatpush1.msra.mxu0 0.0
        %1482 = vmatprep.subr.mxu0 0.0
        %1483 = vmatpush1.msra.mxu0 0.0
        %1484 = vmatprep.subr.mxu0 0.0
        %1485 = vmatpush1.msra.mxu0 0.0
        %1486 = vmatprep.subr.mxu0 0.0
        %1487 = vmatpush1.msra.mxu0 0.0
        %1488 = vmatprep.subr.mxu0 0.0
        %1489 = vmatpush1.msra.mxu0 0.0
        %1490 = vmatprep.subr.mxu0 0.0
        %1491 = vmatpush1.msra.mxu0 0.0
        %1492 = vmatprep.subr.mxu0 0.0
        %1493 = vmatpush1.msra.mxu0 0.0
        %1494 = vmatprep.subr.mxu0 0.0
        %1495 = vmatpush1.msra.mxu0 0.0
        %1496 = vmatprep.subr.mxu0 0.0
        %1497 = vmatpush1.msra.mxu0 0.0
        %1498 = vmatprep.subr.mxu0 0.0
        %1499 = vmatpush1.msra.mxu0 0.0
        %1500 = vmatprep.subr.mxu0 0.0
        %1501 = vmatpush1.msra.mxu0 0.0
        %1502 = vmatprep.subr.mxu0 0.0
        %1503 = vmatpush1.msra.mxu0 0.0
        %1504 = vmatprep.subr.mxu0 0.0
        %1505 = vmatpush1.msra.mxu0 0.0
        %1506 = vmatprep.subr.mxu0 0.0
        %1507 = vmatpush1.msra.mxu0 0.0
        %1508 = vmatprep.subr.mxu0 0.0
        %1509 = vmatpush1.msra.mxu0 0.0
        %1510 = vmatprep.subr.mxu0 0.0
        %1511 = vmatpush1.msra.mxu0 0.0
        %1512 = vmatprep.subr.mxu0 0.0
        %1513 = vmatpush1.msra.mxu0 0.0
        %1514 = vmatprep.subr.mxu0 0.0
        %1515 = vmatpush1.msra.mxu0 0.0
        %1516 = vmatprep.subr.mxu0 0.0
        %1517 = vmatpush1.msra.mxu0 0.0
        %1518 = vmatprep.subr.mxu0 0.0
        %1519 = vmatpush1.msra.mxu0 0.0
        %1520 = vmatprep.subr.mxu0 0.0
        %1521 = vmatpush1.msra.mxu0 0.0
        %1522 = vmatprep.subr.mxu0 0.0
        %1523 = vmatpush1.msra.mxu0 0.0
        %1524 = vmatprep.subr.mxu0 0.0
        %1525 = vmatpush1.msra.mxu0 0.0
        %1526 = vmatprep.mubr.f32.mxu0 0.0
        %1527 = vmatmul.mubr.f32.gmra.mrb[0].mxu0 %v1460
        %v1528 = vpop.f32.mrb[0].mxu0
        %v1529 = vadd.f32 0.0, %v1528
        %v1530 = vpop.f32.mrb[0].mxu0
        %v1531 = vadd.f32 0.0, %v1530
        %1532 = vdwg.mxu0
        %1533 = vmatprep.subr.mxu0 0.0
        %1534 = vmatpush1.msra.mxu0 %v1452
        %1535 = vmatprep.subr.mxu0 0.0
        %1536 = vmatpush1.msra.mxu0 0.0
        %1537 = vmatprep.subr.mxu0 0.0
        %1538 = vmatpush1.msra.mxu0 0.0
        %1539 = vmatprep.subr.mxu0 0.0
        %1540 = vmatpush1.msra.mxu0 0.0
        %1541 = vmatprep.subr.mxu0 0.0
        %1542 = vmatpush1.msra.mxu0 0.0
        %1543 = vmatprep.subr.mxu0 0.0
        %1544 = vmatpush1.msra.mxu0 0.0
        %1545 = vmatprep.subr.mxu0 0.0
        %1546 = vmatpush1.msra.mxu0 0.0
        %1547 = vmatprep.subr.mxu0 0.0
        %1548 = vmatpush1.msra.mxu0 0.0
        %1549 = vmatprep.subr.mxu0 0.0
        %1550 = vmatpush1.msra.mxu0 0.0
        %1551 = vmatprep.subr.mxu0 0.0
        %1552 = vmatpush1.msra.mxu0 0.0
        %1553 = vmatprep.subr.mxu0 0.0
        %1554 = vmatpush1.msra.mxu0 0.0
        %1555 = vmatprep.subr.mxu0 0.0
        %1556 = vmatpush1.msra.mxu0 0.0
        %1557 = vmatprep.subr.mxu0 0.0
        %1558 = vmatpush1.msra.mxu0 0.0
        %1559 = vmatprep.subr.mxu0 0.0
        %1560 = vmatpush1.msra.mxu0 0.0
        %1561 = vmatprep.subr.mxu0 0.0
        %1562 = vmatpush1.msra.mxu0 0.0
        %1563 = vmatprep.subr.mxu0 0.0
        %1564 = vmatpush1.msra.mxu0 0.0
        %1565 = vmatprep.subr.mxu0 0.0
        %1566 = vmatpush1.msra.mxu0 0.0
        %1567 = vmatprep.subr.mxu0 0.0
        %1568 = vmatpush1.msra.mxu0 0.0
        %1569 = vmatprep.subr.mxu0 0.0
        %1570 = vmatpush1.msra.mxu0 0.0
        %1571 = vmatprep.subr.mxu0 0.0
        %1572 = vmatpush1.msra.mxu0 0.0
        %1573 = vmatprep.subr.mxu0 0.0
        %1574 = vmatpush1.msra.mxu0 0.0
        %1575 = vmatprep.subr.mxu0 0.0
        %1576 = vmatpush1.msra.mxu0 0.0
        %1577 = vmatprep.subr.mxu0 0.0
        %1578 = vmatpush1.msra.mxu0 0.0
        %1579 = vmatprep.subr.mxu0 0.0
        %1580 = vmatpush1.msra.mxu0 0.0
        %1581 = vmatprep.subr.mxu0 0.0
        %1582 = vmatpush1.msra.mxu0 0.0
        %1583 = vmatprep.subr.mxu0 0.0
        %1584 = vmatpush1.msra.mxu0 0.0
        %1585 = vmatprep.subr.mxu0 0.0
        %1586 = vmatpush1.msra.mxu0 0.0
        %1587 = vmatprep.subr.mxu0 0.0
        %1588 = vmatpush1.msra.mxu0 0.0
        %1589 = vmatprep.subr.mxu0 0.0
        %1590 = vmatpush1.msra.mxu0 0.0
        %1591 = vmatprep.subr.mxu0 0.0
        %1592 = vmatpush1.msra.mxu0 0.0
        %1593 = vmatprep.subr.mxu0 0.0
        %1594 = vmatpush1.msra.mxu0 0.0
        %1595 = vmatprep.subr.mxu0 0.0
        %1596 = vmatpush1.msra.mxu0 0.0
        %1597 = vmatprep.mubr.f32.mxu0 0.0
        %1598 = vmatmul.mubr.f32.gmra.mrb[0].mxu0 %v1460
        %v1599 = vpop.f32.mrb[0].mxu0
        %v1600 = vadd.f32 0.0, %v1599
        %v1601 = vpop.f32.mrb[0].mxu0
        %1602 = vdwg.mxu0
        %v1603 = vadd.f32 %v1442, %v1529
        %v1604 = vadd.f32 %v1443, %v1531
        %v1605 = vadd.f32 %v1444, %v1600
        %v1606 = vld [vmem:[%s1] sm:$0xff]
        %1608 = vset.pattern.permute.xlu0 0
        %1609 = vperm.xlu0 %1608, %v1606
        %v1610 = vpop.permute.xlu0 %1609
        %v1612 = vadd.f32 %v1603, %v1610
        %v1613 = vadd.f32 %v1604, %v1610
        %v1614 = vadd.f32 %v1605, %v1610
        %v1615 = vmax.f32 %v1612, 0.0
        %v1616 = vmax.f32 %v1613, 0.0
        %v1617 = vmax.f32 %v1614, 0.0
        %v1618 = vadd.f32 %v1615, %v810
        %v1619 = vadd.f32 %v1616, %v811
        %v1620 = vadd.f32 %v1617, %v808
        %1621 = vst [vmem:[%s163] sm:$0xff] %v1618
        %1622 = vst [vmem:[%s163 + $0x8] sm:$0xff] %v1619
        %vm1623 = vcmask 261120
        %1624 = vst.msk [vmem:[%s163 + $0x10] sm:$0xff] %vm1623, %v1620
        %s1625 = sand.u32 %s93, 1
        %s1626 = scalar_lea.sflag [#allocation3], %s1625
        %s1627 = sand.u32 %s93, 1
        %s1628 = smul.addr %s1627, 24
        %s1629 = scalar_lea.vmem [#allocation2], %s1628
        // Predicated region
        $region33: #{tpu_custom_call.1} parent=31 // pred_check
          %p1630 = pneg %p103
        $region34: #{tpu_custom_call.1} parent=31 // pred_check_branch
          %1632 = sbr.rel (%p1630) target = $region36
        $region35: #{tpu_custom_call.1} parent=31 // pred_region
          %s1634 = ssub.s32 384, 384
          %1635 = vsyncadd %s1626, %s1634
          %s1636 = smul.addr %s17, 3
          %s1637 = smul.addr %s1636, 128
          %s1638 = scalar_lea.hbm %s3, %s1637
          %s1640 = sshll.u32 %s1629, 4
          %s1641 = int_to_ptr.vmem [resolvable:$true] %s1640
          %1643 = dma.vmem_to_hbm [thread:$0]  %s1641, 384, %s1638, %s1626
        $region36: #{tpu_custom_call.1} parent=31 // pred_fallthru
          _
      $region32: #{tpu_custom_call.1} parent=5 // pred_fallthru
        _
      %p1644 = scmp.le.s32.totalorder 2, %s12
      // Predicated region
      $region37: #{tpu_custom_call.1} parent=5 // pred_check
        %p1645 = pneg %p1644
      $region38: #{tpu_custom_call.1} parent=5 // pred_check_branch
        %1647 = sbr.rel (%p1645) target = $region40
      $region39: #{tpu_custom_call.1} parent=5 // pred_region
        %s1648 = ssub.s32 %s12, 2
        // Predicated region
        $region41: #{tpu_custom_call.1} parent=39 // pred_check
          %p1649 = pneg %p109
        $region42: #{tpu_custom_call.1} parent=39 // pred_check_branch
          %1651 = sbr.rel (%p1649) target = $region44
        $region43: #{tpu_custom_call.1} parent=39 // pred_region
          %s1652 = sand.u32 %s94, 1
          %s1653 = scalar_lea.sflag [#allocation3], %s1652
          %s1654 = sand.u32 %s94, 1
          %s1655 = smul.addr %s1654, 24
          %s1656 = scalar_lea.vmem [#allocation2], %s1655
          %1657 = dma.done %s1653, 384
        $region44: #{tpu_custom_call.1} parent=39 // pred_fallthru
          _
      $region40: #{tpu_custom_call.1} parent=5 // pred_fallthru
        _
    $region6: #{tpu_custom_call.1} parent=1 // loop_footer
      %s16 = sadd.s32 1, %s12
    $region7: #{tpu_custom_call.1} parent=1 // loop_footer_branch
      %11 = sbr.rel target = $region3
    $region8: #{tpu_custom_call.1} parent=1 // loop_exit
      _
    %1658 = vsyncpa [#allocation3], 1
    %s1659 = scalar_lea.sflag [#allocation3], 1
    %1660 = vsyncpa %s1659, 1

// kernel: tpu_custom_call.1
$region0: #{tpu_custom_call.1}
  #allocation0 [shape = 'u32[]', space=smem, size = 0x4, offset = 0x4, fixed_abs, tag = 'smem constant byte address 0x4 - core index']
  #allocation1 [shape = 'u32[144,128]{1,0:T(1,128)}', space=vmem, size = 0x12000, scoped, tag = 'internal scratch']
  %s0 = inlined_call_operand.vmem [shape: f32[9,8,8], index: 0, kind: input, shape index: {}]
  %s1 = inlined_call_operand.vmem [shape: f32[8,1], index: 1, kind: input, shape index: {}]
  %s2 = inlined_call_operand.vmem [shape: f32[2,8,326], index: 2, kind: input, shape index: {}]
  %s3 = inlined_call_operand.hbm [shape: f32[2,8,288], index: 3, kind: output, shape index: {}]
  %s4 = sld [smem:[#allocation0]]
  $region45: #{tpu_custom_call.1} parent=0
    _
  %s6 = ssub.s32 1, %s4
  %s7 = scalar_select 0, %s6, %s4
  $region1: #{tpu_custom_call.1} parent=0
    #allocation2 [shape = 'u8[24576]{0}', space=vmem, size = 0x6000, scoped, tag = 'output window, operand 0']
    #allocation3 [shape = 's32[2]{0}', space=sflag, size = 0x8, scoped, tag = 'scoped memory for tpu_custom_call.1']
    %8 = vsyncpa [#allocation3], 0
    %s9 = scalar_lea.sflag [#allocation3], 1
    %10 = vsyncpa %s9, 0
    loop: start=0, step=1, limit=4
    $region2: #{tpu_custom_call.1} parent=1 // loop_pre_header
      _
    $region3: #{tpu_custom_call.1} parent=1 // loop_header
      %s12 = sphi 0, %s16
      %p13 = scmp.ge.s32.totalorder %s12, 4
      %s20 = sphi 0, %s20
      %s22 = sphi 0, %s20
      %s23 = sphi 0, %s22
      %s37 = sphi 0, %s23
      %s41 = sphi 0, %s41
      %s43 = sphi 0, %s41
      %s44 = sphi 0, %s43
      %s58 = sphi 0, %s44
      %s64 = sphi 0, %s66
      %s67 = sphi 0, %s64
      %s68 = sphi 0, %s67
      %s84 = sphi 0, %s68
      %s90 = sphi 0, %s92
      %s93 = sphi 0, %s90
      %s94 = sphi 0, %s93
      %s110 = sphi 0, %s94
    $region4: #{tpu_custom_call.1} parent=1 // loop_header_branch
      %15 = sbr.rel (%p13) target = $region8
    $region5: #{tpu_custom_call.1} parent=1 // loop_body
      %s17 = ssub.s32 %s12, 1
      %s18 = ssub.s32 %s12, 2
      %s19 = sadd.s32 %s12, 1
      %s21 = sadd.s32 %s20, 1
      %p24 = scmp.eq.s32.totalorder %s12, 1
      %p25 = scmp.ne.s32.totalorder %s20, %s22
      %p26 = scmp.eq.s32.totalorder %s12, 0
      %p27 = por %p25, %p26
      %p28 = scmp.ne.s32.totalorder %s20, %s22
      %p29 = scmp.eq.s32.totalorder %s17, 1
      %p30 = por %p28, %p29
      %p31 = scmp.ne.s32.totalorder %s22, %s23
      %p32 = scmp.eq.s32.totalorder %s17, 0
      %p33 = por %p31, %p32
      %p34 = scmp.ne.s32.totalorder %s22, %s23
      %p35 = scmp.eq.s32.totalorder %s18, 1
      %p36 = por %p34, %p35
      %p38 = scmp.ne.s32.totalorder %s23, %s37
      %p39 = scmp.eq.s32.totalorder %s18, 0
      %p40 = por %p38, %p39
      %s42 = sadd.s32 %s41, 1
      %p45 = scmp.eq.s32.totalorder %s12, 1
      %p46 = scmp.ne.s32.totalorder %s41, %s43
      %p47 = scmp.eq.s32.totalorder %s12, 0
      %p48 = por %p46, %p47
      %p49 = scmp.ne.s32.totalorder %s41, %s43
      %p50 = scmp.eq.s32.totalorder %s17, 1
      %p51 = por %p49, %p50
      %p52 = scmp.ne.s32.totalorder %s43, %s44
      %p53 = scmp.eq.s32.totalorder %s17, 0
      %p54 = por %p52, %p53
      %p55 = scmp.ne.s32.totalorder %s43, %s44
      %p56 = scmp.eq.s32.totalorder %s18, 1
      %p57 = por %p55, %p56
      %p59 = scmp.ne.s32.totalorder %s44, %s58
      %p60 = scmp.eq.s32.totalorder %s18, 0
      %p61 = por %p59, %p60
      %s62 = ssub.s32 %s12, %s19
      %p63 = scmp.eq.s32.totalorder %s62, 0
      %s65 = sadd.s32 %s64, 1
      %s66 = scalar_select %p63, %s64, %s65
      %p69 = pneg %p63
      %p70 = scmp.eq.s32.totalorder %s12, 1
      %p71 = por %p69, %p70
      %p72 = scmp.ne.s32.totalorder %s64, %s67
      %p73 = scmp.eq.s32.totalorder %s12, 0
      %p74 = por %p72, %p73
      %p75 = scmp.ne.s32.totalorder %s64, %s67
      %p76 = scmp.eq.s32.totalorder %s17, 1
      %p77 = por %p75, %p76
      %p78 = scmp.ne.s32.totalorder %s67, %s68
      %p79 = scmp.eq.s32.totalorder %s17, 0
      %p80 = por %p78, %p79
      %p81 = scmp.ne.s32.totalorder %s67, %s68
      %p82 = scmp.eq.s32.totalorder %s18, 1
      %p83 = por %p81, %p82
      %p85 = scmp.ne.s32.totalorder %s68, %s84
      %p86 = scmp.eq.s32.totalorder %s18, 0
      %p87 = por %p85, %p86
      %s88 = ssub.s32 %s12, %s19
      %p89 = scmp.eq.s32.totalorder %s88, 0
      %s91 = sadd.s32 %s90, 1
      %s92 = scalar_select %p89, %s90, %s91
      %p95 = pneg %p89
      %p96 = scmp.eq.s32.totalorder %s12, 1
      %p97 = por %p95, %p96
      %p98 = scmp.ne.s32.totalorder %s90, %s93
      %p99 = scmp.eq.s32.totalorder %s12, 0
      %p100 = por %p98, %p99
      %p101 = scmp.ne.s32.totalorder %s90, %s93
      %p102 = scmp.eq.s32.totalorder %s17, 1
      %p103 = por %p101, %p102
      %p104 = scmp.ne.s32.totalorder %s93, %s94
      %p105 = scmp.eq.s32.totalorder %s17, 0
      %p106 = por %p104, %p105
      %p107 = scmp.ne.s32.totalorder %s93, %s94
      %p108 = scmp.eq.s32.totalorder %s18, 1
      %p109 = por %p107, %p108
      %p111 = scmp.ne.s32.totalorder %s94, %s110
      %p112 = scmp.eq.s32.totalorder %s18, 0
      %p113 = por %p111, %p112
      %p114 = scmp.le.s32.totalorder 1, %s12
      %p115 = scmp.lt.s32.totalorder %s12, 3
      %p116 = pnand %p114, %p115
      %p117 = pneg %p116
      // Predicated region
      $region9: #{tpu_custom_call.1} parent=5 // pred_check
        _
      $region10: #{tpu_custom_call.1} parent=5 // pred_check_branch
        %119 = sbr.rel (%p116) target = $region12
      $region11: #{tpu_custom_call.1} parent=5 // pred_region
        %s120 = ssub.s32 %s12, 1
        // Predicated region
        $region13: #{tpu_custom_call.1} parent=11 // pred_check
          %p121 = pneg %p33
        $region14: #{tpu_custom_call.1} parent=11 // pred_check_branch
          %123 = sbr.rel (%p121) target = $region16
        $region15: #{tpu_custom_call.1} parent=11 // pred_region
          _
        $region16: #{tpu_custom_call.1} parent=11 // pred_fallthru
          _
        // Predicated region
        $region17: #{tpu_custom_call.1} parent=11 // pred_check
          %p124 = pneg %p54
        $region18: #{tpu_custom_call.1} parent=11 // pred_check_branch
          %126 = sbr.rel (%p124) target = $region20
        $region19: #{tpu_custom_call.1} parent=11 // pred_region
          _
        $region20: #{tpu_custom_call.1} parent=11 // pred_fallthru
          _
      $region12: #{tpu_custom_call.1} parent=5 // pred_fallthru
        _
      %p127 = scmp.lt.s32.totalorder %s12, 2
      // Predicated region
      $region21: #{tpu_custom_call.1} parent=5 // pred_check
        %p128 = pneg %p127
      $region22: #{tpu_custom_call.1} parent=5 // pred_check_branch
        %130 = sbr.rel (%p128) target = $region24
      $region23: #{tpu_custom_call.1} parent=5 // pred_region
        // Predicated region
        $region25: #{tpu_custom_call.1} parent=23 // pred_check
          %p131 = pneg %p74
        $region26: #{tpu_custom_call.1} parent=23 // pred_check_branch
          %133 = sbr.rel (%p131) target = $region28
        $region27: #{tpu_custom_call.1} parent=23 // pred_region
          %p134 = scmp.lt.s32.totalorder %s12, 1
          %s135 = scalar_select %p134, %s12, 1
          %s136 = smul.addr %s135, 3
          %s137 = smul.addr %s136, 8
          %s138 = scalar_lea.vmem %s2, %s137
        $region28: #{tpu_custom_call.1} parent=23 // pred_fallthru
          _
      $region24: #{tpu_custom_call.1} parent=5 // pred_fallthru
        _
      %p139 = scmp.le.s32.totalorder 1, %s12
      %p140 = scmp.lt.s32.totalorder %s12, 3
      %p141 = pnand %p139, %p140
      %p142 = pneg %p141
      // Predicated region
      $region29: #{tpu_custom_call.1} parent=5 // pred_check
        _
      $region30: #{tpu_custom_call.1} parent=5 // pred_check_branch
        %144 = sbr.rel (%p141) target = $region32
      $region31: #{tpu_custom_call.1} parent=5 // pred_region
        %s145 = ssub.s32 %s12, 1
        %p146 = pneg %p33
        %p147 = pneg %p30
        %p148 = pneg %p54
        %p149 = pneg %p51
        %p150 = scmp.lt.s32.totalorder %s17, 1
        %s151 = scalar_select %p150, %s17, 1
        %s152 = smul.addr %s151, 3
        %s153 = smul.addr %s152, 8
        %s154 = scalar_lea.vmem %s2, %s153
        %p155 = pneg %p80
        %p156 = pneg %p77
        %p157 = pneg %p106
        %p158 = pneg %p103
        %s159 = sand.u32 %s93, 1
        %s160 = scalar_lea.sflag [#allocation3], %s159
        %s161 = sand.u32 %s93, 1
        %s162 = smul.addr %s161, 24
        %s163 = scalar_lea.vmem [#allocation2], %s162
        %p164 = scmp.lt.s32.totalorder %s17, 1
        %s165 = scalar_select %p164, %s17, 1
        %s166 = smul.addr %s165, 3
        %s167 = smul.addr %s166, 8
        %s168 = scalar_lea.vmem %s2, %s167
        %v169 = vld [vmem:[%s168] sm:$0xff]
        %v170 = vld [vmem:[%s168 + $0x8] sm:$0xff]
        %v171 = vld [vmem:[%s168 + $0x10] sm:$0xff]
        %v172 = vld [vmem:[%s0] sm:$0xff]
        %s173 = scalar_lea.vmem %s0, 8
        %v174 = vld [vmem:[%s173] sm:$0xff]
        %178 = vrot.lane.b32.xlu0 %v169, 127
        %v179 = vpop.permute.xlu0 %178
        %180 = vrot.lane.b32.xlu0 %v170, 127
        %v181 = vpop.permute.xlu0 %180
        %182 = vrot.lane.b32.xlu0 %v171, 127
        %v183 = vpop.permute.xlu0 %182
        %vm184 = vcmask 1039360
        %v185 = vsel %vm184, %v179, %v181
        %v186 = vsel %vm184, %v181, %v183
        %vm190 = vcmask 64512
        %v192 = vsel %vm190, %v174, 0
        %194 = vmatprep.subr.mxu0 %v186
        %195 = vmatpush1.msra.mxu0 %v185
        %196 = vmatprep.subr.mxu0 0.0
        %197 = vmatpush1.msra.mxu0 0.0
        %198 = vmatprep.subr.mxu0 0.0
        %199 = vmatpush1.msra.mxu0 0.0
        %200 = vmatprep.subr.mxu0 0.0
        %201 = vmatpush1.msra.mxu0 0.0
        %202 = vmatprep.subr.mxu0 0.0
        %203 = vmatpush1.msra.mxu0 0.0
        %204 = vmatprep.subr.mxu0 0.0
        %205 = vmatpush1.msra.mxu0 0.0
        %206 = vmatprep.subr.mxu0 0.0
        %207 = vmatpush1.msra.mxu0 0.0
        %208 = vmatprep.subr.mxu0 0.0
        %209 = vmatpush1.msra.mxu0 0.0
        %210 = vmatprep.subr.mxu0 0.0
        %211 = vmatpush1.msra.mxu0 0.0
        %212 = vmatprep.subr.mxu0 0.0
        %213 = vmatpush1.msra.mxu0 0.0
        %214 = vmatprep.subr.mxu0 0.0
        %215 = vmatpush1.msra.mxu0 0.0
        %216 = vmatprep.subr.mxu0 0.0
        %217 = vmatpush1.msra.mxu0 0.0
        %218 = vmatprep.subr.mxu0 0.0
        %219 = vmatpush1.msra.mxu0 0.0
        %220 = vmatprep.subr.mxu0 0.0
        %221 = vmatpush1.msra.mxu0 0.0
        %222 = vmatprep.subr.mxu0 0.0
        %223 = vmatpush1.msra.mxu0 0.0
        %224 = vmatprep.subr.mxu0 0.0
        %225 = vmatpush1.msra.mxu0 0.0
        %226 = vmatprep.subr.mxu0 0.0
        %227 = vmatpush1.msra.mxu0 0.0
        %228 = vmatprep.subr.mxu0 0.0
        %229 = vmatpush1.msra.mxu0 0.0
        %230 = vmatprep.subr.mxu0 0.0
        %231 = vmatpush1.msra.mxu0 0.0
        %232 = vmatprep.subr.mxu0 0.0
        %233 = vmatpush1.msra.mxu0 0.0
        %234 = vmatprep.subr.mxu0 0.0
        %235 = vmatpush1.msra.mxu0 0.0
        %236 = vmatprep.subr.mxu0 0.0
        %237 = vmatpush1.msra.mxu0 0.0
        %238 = vmatprep.subr.mxu0 0.0
        %239 = vmatpush1.msra.mxu0 0.0
        %240 = vmatprep.subr.mxu0 0.0
        %241 = vmatpush1.msra.mxu0 0.0
        %242 = vmatprep.subr.mxu0 0.0
        %243 = vmatpush1.msra.mxu0 0.0
        %244 = vmatprep.subr.mxu0 0.0
        %245 = vmatpush1.msra.mxu0 0.0
        %246 = vmatprep.subr.mxu0 0.0
        %247 = vmatpush1.msra.mxu0 0.0
        %248 = vmatprep.subr.mxu0 0.0
        %249 = vmatpush1.msra.mxu0 0.0
        %250 = vmatprep.subr.mxu0 0.0
        %251 = vmatpush1.msra.mxu0 0.0
        %252 = vmatprep.subr.mxu0 0.0
        %253 = vmatpush1.msra.mxu0 0.0
        %254 = vmatprep.subr.mxu0 0.0
        %255 = vmatpush1.msra.mxu0 0.0
        %256 = vmatprep.subr.mxu0 0.0
        %257 = vmatpush1.msra.mxu0 0.0
        %258 = vmatprep.mubr.f32.mxu0 0.0
        %259 = vmatmul.mubr.f32.gmra.mrb[0].mxu0 %v192
        %v260 = vpop.f32.mrb[0].mxu0
        %v261 = vadd.f32 0.0, %v260
        %v262 = vpop.f32.mrb[0].mxu0
        %v263 = vadd.f32 0.0, %v262
        %264 = vdwg.mxu0
        %265 = vmatprep.subr.mxu0 0.0
        %266 = vmatpush1.msra.mxu0 %v183
        %267 = vmatprep.subr.mxu0 0.0
        %268 = vmatpush1.msra.mxu0 0.0
        %269 = vmatprep.subr.mxu0 0.0
        %270 = vmatpush1.msra.mxu0 0.0
        %271 = vmatprep.subr.mxu0 0.0
        %272 = vmatpush1.msra.mxu0 0.0
        %273 = vmatprep.subr.mxu0 0.0
        %274 = vmatpush1.msra.mxu0 0.0
        %275 = vmatprep.subr.mxu0 0.0
        %276 = vmatpush1.msra.mxu0 0.0
        %277 = vmatprep.subr.mxu0 0.0
        %278 = vmatpush1.msra.mxu0 0.0
        %279 = vmatprep.subr.mxu0 0.0
        %280 = vmatpush1.msra.mxu0 0.0
        %281 = vmatprep.subr.mxu0 0.0
        %282 = vmatpush1.msra.mxu0 0.0
        %283 = vmatprep.subr.mxu0 0.0
        %284 = vmatpush1.msra.mxu0 0.0
        %285 = vmatprep.subr.mxu0 0.0
        %286 = vmatpush1.msra.mxu0 0.0
        %287 = vmatprep.subr.mxu0 0.0
        %288 = vmatpush1.msra.mxu0 0.0
        %289 = vmatprep.subr.mxu0 0.0
        %290 = vmatpush1.msra.mxu0 0.0
        %291 = vmatprep.subr.mxu0 0.0
        %292 = vmatpush1.msra.mxu0 0.0
        %293 = vmatprep.subr.mxu0 0.0
        %294 = vmatpush1.msra.mxu0 0.0
        %295 = vmatprep.subr.mxu0 0.0
        %296 = vmatpush1.msra.mxu0 0.0
        %297 = vmatprep.subr.mxu0 0.0
        %298 = vmatpush1.msra.mxu0 0.0
        %299 = vmatprep.subr.mxu0 0.0
        %300 = vmatpush1.msra.mxu0 0.0
        %301 = vmatprep.subr.mxu0 0.0
        %302 = vmatpush1.msra.mxu0 0.0
        %303 = vmatprep.subr.mxu0 0.0
        %304 = vmatpush1.msra.mxu0 0.0
        %305 = vmatprep.subr.mxu0 0.0
        %306 = vmatpush1.msra.mxu0 0.0
        %307 = vmatprep.subr.mxu0 0.0
        %308 = vmatpush1.msra.mxu0 0.0
        %309 = vmatprep.subr.mxu0 0.0
        %310 = vmatpush1.msra.mxu0 0.0
        %311 = vmatprep.subr.mxu0 0.0
        %312 = vmatpush1.msra.mxu0 0.0
        %313 = vmatprep.subr.mxu0 0.0
        %314 = vmatpush1.msra.mxu0 0.0
        %315 = vmatprep.subr.mxu0 0.0
        %316 = vmatpush1.msra.mxu0 0.0
        %317 = vmatprep.subr.mxu0 0.0
        %318 = vmatpush1.msra.mxu0 0.0
        %319 = vmatprep.subr.mxu0 0.0
        %320 = vmatpush1.msra.mxu0 0.0
        %321 = vmatprep.subr.mxu0 0.0
        %322 = vmatpush1.msra.mxu0 0.0
        %323 = vmatprep.subr.mxu0 0.0
        %324 = vmatpush1.msra.mxu0 0.0
        %325 = vmatprep.subr.mxu0 0.0
        %326 = vmatpush1.msra.mxu0 0.0
        %327 = vmatprep.subr.mxu0 0.0
        %328 = vmatpush1.msra.mxu0 0.0
        %329 = vmatprep.mubr.f32.mxu0 0.0
        %330 = vmatmul.mubr.f32.gmra.mrb[0].mxu0 %v192
        %v331 = vpop.f32.mrb[0].mxu0
        %v332 = vadd.f32 0.0, %v331
        %v333 = vpop.f32.mrb[0].mxu0
        %334 = vdwg.mxu0
        %v336 = vsel %vm190, %v172, 0
        %338 = vmatprep.subr.mxu0 %v170
        %339 = vmatpush1.msra.mxu0 %v169
        %340 = vmatprep.subr.mxu0 0.0
        %341 = vmatpush1.msra.mxu0 0.0
        %342 = vmatprep.subr.mxu0 0.0
        %343 = vmatpush1.msra.mxu0 0.0
        %344 = vmatprep.subr.mxu0 0.0
        %345 = vmatpush1.msra.mxu0 0.0
        %346 = vmatprep.subr.mxu0 0.0
        %347 = vmatpush1.msra.mxu0 0.0
        %348 = vmatprep.subr.mxu0 0.0
        %349 = vmatpush1.msra.mxu0 0.0
        %350 = vmatprep.subr.mxu0 0.0
        %351 = vmatpush1.msra.mxu0 0.0
        %352 = vmatprep.subr.mxu0 0.0
        %353 = vmatpush1.msra.mxu0 0.0
        %354 = vmatprep.subr.mxu0 0.0
        %355 = vmatpush1.msra.mxu0 0.0
        %356 = vmatprep.subr.mxu0 0.0
        %357 = vmatpush1.msra.mxu0 0.0
        %358 = vmatprep.subr.mxu0 0.0
        %359 = vmatpush1.msra.mxu0 0.0
        %360 = vmatprep.subr.mxu0 0.0
        %361 = vmatpush1.msra.mxu0 0.0
        %362 = vmatprep.subr.mxu0 0.0
        %363 = vmatpush1.msra.mxu0 0.0
        %364 = vmatprep.subr.mxu0 0.0
        %365 = vmatpush1.msra.mxu0 0.0
        %366 = vmatprep.subr.mxu0 0.0
        %367 = vmatpush1.msra.mxu0 0.0
        %368 = vmatprep.subr.mxu0 0.0
        %369 = vmatpush1.msra.mxu0 0.0
        %370 = vmatprep.subr.mxu0 0.0
        %371 = vmatpush1.msra.mxu0 0.0
        %372 = vmatprep.subr.mxu0 0.0
        %373 = vmatpush1.msra.mxu0 0.0
        %374 = vmatprep.subr.mxu0 0.0
        %375 = vmatpush1.msra.mxu0 0.0
        %376 = vmatprep.subr.mxu0 0.0
        %377 = vmatpush1.msra.mxu0 0.0
        %378 = vmatprep.subr.mxu0 0.0
        %379 = vmatpush1.msra.mxu0 0.0
        %380 = vmatprep.subr.mxu0 0.0
        %381 = vmatpush1.msra.mxu0 0.0
        %382 = vmatprep.subr.mxu0 0.0
        %383 = vmatpush1.msra.mxu0 0.0
        %384 = vmatprep.subr.mxu0 0.0
        %385 = vmatpush1.msra.mxu0 0.0
        %386 = vmatprep.subr.mxu0 0.0
        %387 = vmatpush1.msra.mxu0 0.0
        %388 = vmatprep.subr.mxu0 0.0
        %389 = vmatpush1.msra.mxu0 0.0
        %390 = vmatprep.subr.mxu0 0.0
        %391 = vmatpush1.msra.mxu0 0.0
        %392 = vmatprep.subr.mxu0 0.0
        %393 = vmatpush1.msra.mxu0 0.0
        %394 = vmatprep.subr.mxu0 0.0
        %395 = vmatpush1.msra.mxu0 0.0
        %396 = vmatprep.subr.mxu0 0.0
        %397 = vmatpush1.msra.mxu0 0.0
        %398 = vmatprep.subr.mxu0 0.0
        %399 = vmatpush1.msra.mxu0 0.0
        %400 = vmatprep.subr.mxu0 0.0
        %401 = vmatpush1.msra.mxu0 0.0
        %402 = vmatprep.mubr.f32.mxu0 0.0
        %403 = vmatmul.mubr.f32.gmra.mrb[0].mxu0 %v336
        %v404 = vpop.f32.mrb[0].mxu0
        %v405 = vadd.f32 %v261, %v404
        %v406 = vpop.f32.mrb[0].mxu0
        %v407 = vadd.f32 %v263, %v406
        %408 = vdwg.mxu0
        %409 = vmatprep.subr.mxu0 0.0
        %410 = vmatpush1.msra.mxu0 %v171
        %411 = vmatprep.subr.mxu0 0.0
        %412 = vmatpush1.msra.mxu0 0.0
        %413 = vmatprep.subr.mxu0 0.0
        %414 = vmatpush1.msra.mxu0 0.0
        %415 = vmatprep.subr.mxu0 0.0
        %416 = vmatpush1.msra.mxu0 0.0
        %417 = vmatprep.subr.mxu0 0.0
        %418 = vmatpush1.msra.mxu0 0.0
        %419 = vmatprep.subr.mxu0 0.0
        %420 = vmatpush1.msra.mxu0 0.0
        %421 = vmatprep.subr.mxu0 0.0
        %422 = vmatpush1.msra.mxu0 0.0
        %423 = vmatprep.subr.mxu0 0.0
        %424 = vmatpush1.msra.mxu0 0.0
        %425 = vmatprep.subr.mxu0 0.0
        %426 = vmatpush1.msra.mxu0 0.0
        %427 = vmatprep.subr.mxu0 0.0
        %428 = vmatpush1.msra.mxu0 0.0
        %429 = vmatprep.subr.mxu0 0.0
        %430 = vmatpush1.msra.mxu0 0.0
        %431 = vmatprep.subr.mxu0 0.0
        %432 = vmatpush1.msra.mxu0 0.0
        %433 = vmatprep.subr.mxu0 0.0
        %434 = vmatpush1.msra.mxu0 0.0
        %435 = vmatprep.subr.mxu0 0.0
        %436 = vmatpush1.msra.mxu0 0.0
        %437 = vmatprep.subr.mxu0 0.0
        %438 = vmatpush1.msra.mxu0 0.0
        %439 = vmatprep.subr.mxu0 0.0
        %440 = vmatpush1.msra.mxu0 0.0
        %441 = vmatprep.subr.mxu0 0.0
        %442 = vmatpush1.msra.mxu0 0.0
        %443 = vmatprep.subr.mxu0 0.0
        %444 = vmatpush1.msra.mxu0 0.0
        %445 = vmatprep.subr.mxu0 0.0
        %446 = vmatpush1.msra.mxu0 0.0
        %447 = vmatprep.subr.mxu0 0.0
        %448 = vmatpush1.msra.mxu0 0.0
        %449 = vmatprep.subr.mxu0 0.0
        %450 = vmatpush1.msra.mxu0 0.0
        %451 = vmatprep.subr.mxu0 0.0
        %452 = vmatpush1.msra.mxu0 0.0
        %453 = vmatprep.subr.mxu0 0.0
        %454 = vmatpush1.msra.mxu0 0.0
        %455 = vmatprep.subr.mxu0 0.0
        %456 = vmatpush1.msra.mxu0 0.0
        %457 = vmatprep.subr.mxu0 0.0
        %458 = vmatpush1.msra.mxu0 0.0
        %459 = vmatprep.subr.mxu0 0.0
        %460 = vmatpush1.msra.mxu0 0.0
        %461 = vmatprep.subr.mxu0 0.0
        %462 = vmatpush1.msra.mxu0 0.0
        %463 = vmatprep.subr.mxu0 0.0
        %464 = vmatpush1.msra.mxu0 0.0
        %465 = vmatprep.subr.mxu0 0.0
        %466 = vmatpush1.msra.mxu0 0.0
        %467 = vmatprep.subr.mxu0 0.0
        %468 = vmatpush1.msra.mxu0 0.0
        %469 = vmatprep.subr.mxu0 0.0
        %470 = vmatpush1.msra.mxu0 0.0
        %471 = vmatprep.subr.mxu0 0.0
        %472 = vmatpush1.msra.mxu0 0.0
        %473 = vmatprep.mubr.f32.mxu0 0.0
        %474 = vmatmul.mubr.f32.gmra.mrb[0].mxu0 %v336
        %v475 = vpop.f32.mrb[0].mxu0
        %v476 = vadd.f32 %v332, %v475
        %v477 = vpop.f32.mrb[0].mxu0
        %478 = vdwg.mxu0
        %s479 = scalar_lea.vmem %s0, 16
        %v480 = vld [vmem:[%s479] sm:$0xff]
        %481 = vrot.lane.b32.xlu0 %v169, 126
        %v482 = vpop.permute.xlu0 %481
        %483 = vrot.lane.b32.xlu0 %v170, 126
        %v484 = vpop.permute.xlu0 %483
        %485 = vrot.lane.b32.xlu0 %v171, 126
        %v486 = vpop.permute.xlu0 %485
        %vm487 = vcmask 1031168
        %v488 = vsel %vm487, %v482, %v484
        %v489 = vsel %vm487, %v484, %v486
        %v494 = vsel %vm190, %v480, 0
        %496 = vmatprep.subr.mxu0 %v489
        %497 = vmatpush1.msra.mxu0 %v488
        %498 = vmatprep.subr.mxu0 0.0
        %499 = vmatpush1.msra.mxu0 0.0
        %500 = vmatprep.subr.mxu0 0.0
        %501 = vmatpush1.msra.mxu0 0.0
        %502 = vmatprep.subr.mxu0 0.0
        %503 = vmatpush1.msra.mxu0 0.0
        %504 = vmatprep.subr.mxu0 0.0
        %505 = vmatpush1.msra.mxu0 0.0
        %506 = vmatprep.subr.mxu0 0.0
        %507 = vmatpush1.msra.mxu0 0.0
        %508 = vmatprep.subr.mxu0 0.0
        %509 = vmatpush1.msra.mxu0 0.0
        %510 = vmatprep.subr.mxu0 0.0
        %511 = vmatpush1.msra.mxu0 0.0
        %512 = vmatprep.subr.mxu0 0.0
        %513 = vmatpush1.msra.mxu0 0.0
        %514 = vmatprep.subr.mxu0 0.0
        %515 = vmatpush1.msra.mxu0 0.0
        %516 = vmatprep.subr.mxu0 0.0
        %517 = vmatpush1.msra.mxu0 0.0
        %518 = vmatprep.subr.mxu0 0.0
        %519 = vmatpush1.msra.mxu0 0.0
        %520 = vmatprep.subr.mxu0 0.0
        %521 = vmatpush1.msra.mxu0 0.0
        %522 = vmatprep.subr.mxu0 0.0
        %523 = vmatpush1.msra.mxu0 0.0
        %524 = vmatprep.subr.mxu0 0.0
        %525 = vmatpush1.msra.mxu0 0.0
        %526 = vmatprep.subr.mxu0 0.0
        %527 = vmatpush1.msra.mxu0 0.0
        %528 = vmatprep.subr.mxu0 0.0
        %529 = vmatpush1.msra.mxu0 0.0
        %530 = vmatprep.subr.mxu0 0.0
        %531 = vmatpush1.msra.mxu0 0.0
        %532 = vmatprep.subr.mxu0 0.0
        %533 = vmatpush1.msra.mxu0 0.0
        %534 = vmatprep.subr.mxu0 0.0
        %535 = vmatpush1.msra.mxu0 0.0
        %536 = vmatprep.subr.mxu0 0.0
        %537 = vmatpush1.msra.mxu0 0.0
        %538 = vmatprep.subr.mxu0 0.0
        %539 = vmatpush1.msra.mxu0 0.0
        %540 = vmatprep.subr.mxu0 0.0
        %541 = vmatpush1.msra.mxu0 0.0
        %542 = vmatprep.subr.mxu0 0.0
        %543 = vmatpush1.msra.mxu0 0.0
        %544 = vmatprep.subr.mxu0 0.0
        %545 = vmatpush1.msra.mxu0 0.0
        %546 = vmatprep.subr.mxu0 0.0
        %547 = vmatpush1.msra.mxu0 0.0
        %548 = vmatprep.subr.mxu0 0.0
        %549 = vmatpush1.msra.mxu0 0.0
        %550 = vmatprep.subr.mxu0 0.0
        %551 = vmatpush1.msra.mxu0 0.0
        %552 = vmatprep.subr.mxu0 0.0
        %553 = vmatpush1.msra.mxu0 0.0
        %554 = vmatprep.subr.mxu0 0.0
        %555 = vmatpush1.msra.mxu0 0.0
        %556 = vmatprep.subr.mxu0 0.0
        %557 = vmatpush1.msra.mxu0 0.0
        %558 = vmatprep.subr.mxu0 0.0
        %559 = vmatpush1.msra.mxu0 0.0
        %560 = vmatprep.mubr.f32.mxu0 0.0
        %561 = vmatmul.mubr.f32.gmra.mrb[0].mxu0 %v494
        %v562 = vpop.f32.mrb[0].mxu0
        %v563 = vadd.f32 0.0, %v562
        %v564 = vpop.f32.mrb[0].mxu0
        %v565 = vadd.f32 0.0, %v564
        %566 = vdwg.mxu0
        %567 = vmatprep.subr.mxu0 0.0
        %568 = vmatpush1.msra.mxu0 %v486
        %569 = vmatprep.subr.mxu0 0.0
        %570 = vmatpush1.msra.mxu0 0.0
        %571 = vmatprep.subr.mxu0 0.0
        %572 = vmatpush1.msra.mxu0 0.0
        %573 = vmatprep.subr.mxu0 0.0
        %574 = vmatpush1.msra.mxu0 0.0
        %575 = vmatprep.subr.mxu0 0.0
        %576 = vmatpush1.msra.mxu0 0.0
        %577 = vmatprep.subr.mxu0 0.0
        %578 = vmatpush1.msra.mxu0 0.0
        %579 = vmatprep.subr.mxu0 0.0
        %580 = vmatpush1.msra.mxu0 0.0
        %581 = vmatprep.subr.mxu0 0.0
        %582 = vmatpush1.msra.mxu0 0.0
        %583 = vmatprep.subr.mxu0 0.0
        %584 = vmatpush1.msra.mxu0 0.0
        %585 = vmatprep.subr.mxu0 0.0
        %586 = vmatpush1.msra.mxu0 0.0
        %587 = vmatprep.subr.mxu0 0.0
        %588 = vmatpush1.msra.mxu0 0.0
        %589 = vmatprep.subr.mxu0 0.0
        %590 = vmatpush1.msra.mxu0 0.0
        %591 = vmatprep.subr.mxu0 0.0
        %592 = vmatpush1.msra.mxu0 0.0
        %593 = vmatprep.subr.mxu0 0.0
        %594 = vmatpush1.msra.mxu0 0.0
        %595 = vmatprep.subr.mxu0 0.0
        %596 = vmatpush1.msra.mxu0 0.0
        %597 = vmatprep.subr.mxu0 0.0
        %598 = vmatpush1.msra.mxu0 0.0
        %599 = vmatprep.subr.mxu0 0.0
        %600 = vmatpush1.msra.mxu0 0.0
        %601 = vmatprep.subr.mxu0 0.0
        %602 = vmatpush1.msra.mxu0 0.0
        %603 = vmatprep.subr.mxu0 0.0
        %604 = vmatpush1.msra.mxu0 0.0
        %605 = vmatprep.subr.mxu0 0.0
        %606 = vmatpush1.msra.mxu0 0.0
        %607 = vmatprep.subr.mxu0 0.0
        %608 = vmatpush1.msra.mxu0 0.0
        %609 = vmatprep.subr.mxu0 0.0
        %610 = vmatpush1.msra.mxu0 0.0
        %611 = vmatprep.subr.mxu0 0.0
        %612 = vmatpush1.msra.mxu0 0.0
        %613 = vmatprep.subr.mxu0 0.0
        %614 = vmatpush1.msra.mxu0 0.0
        %615 = vmatprep.subr.mxu0 0.0
        %616 = vmatpush1.msra.mxu0 0.0
        %617 = vmatprep.subr.mxu0 0.0
        %618 = vmatpush1.msra.mxu0 0.0
        %619 = vmatprep.subr.mxu0 0.0
        %620 = vmatpush1.msra.mxu0 0.0
        %621 = vmatprep.subr.mxu0 0.0
        %622 = vmatpush1.msra.mxu0 0.0
        %623 = vmatprep.subr.mxu0 0.0
        %624 = vmatpush1.msra.mxu0 0.0
        %625 = vmatprep.subr.mxu0 0.0
        %626 = vmatpush1.msra.mxu0 0.0
        %627 = vmatprep.subr.mxu0 0.0
        %628 = vmatpush1.msra.mxu0 0.0
        %629 = vmatprep.subr.mxu0 0.0
        %630 = vmatpush1.msra.mxu0 0.0
        %631 = vmatprep.mubr.f32.mxu0 0.0
        %632 = vmatmul.mubr.f32.gmra.mrb[0].mxu0 %v494
        %v633 = vpop.f32.mrb[0].mxu0
        %v634 = vadd.f32 0.0, %v633
        %v635 = vpop.f32.mrb[0].mxu0
        %636 = vdwg.mxu0
        %v637 = vadd.f32 %v405, %v563
        %v638 = vadd.f32 %v407, %v565
        %v639 = vadd.f32 %v476, %v634
        %s640 = scalar_lea.vmem %s0, 24
        %v641 = vld [vmem:[%s640] sm:$0xff]
        %642 = vrot.lane.b32.xlu0 %v169, 110
        %v643 = vpop.permute.xlu0 %642
        %644 = vrot.lane.b32.xlu0 %v170, 110
        %v645 = vpop.permute.xlu0 %644
        %646 = vrot.lane.b32.xlu0 %v171, 110
        %v647 = vpop.permute.xlu0 %646
        %vm648 = vcmask 900096
        %v649 = vsel %vm648, %v643, %v645
        %v650 = vsel %vm648, %v645, %v647
        %v655 = vsel %vm190, %v641, 0
        %657 = vmatprep.subr.mxu0 %v650
        %658 = vmatpush1.msra.mxu0 %v649
        %659 = vmatprep.subr.mxu0 0.0
        %660 = vmatpush1.msra.mxu0 0.0
        %661 = vmatprep.subr.mxu0 0.0
        %662 = vmatpush1.msra.mxu0 0.0
        %663 = vmatprep.subr.mxu0 0.0
        %664 = vmatpush1.msra.mxu0 0.0
        %665 = vmatprep.subr.mxu0 0.0
        %666 = vmatpush1.msra.mxu0 0.0
        %667 = vmatprep.subr.mxu0 0.0
        %668 = vmatpush1.msra.mxu0 0.0
        %669 = vmatprep.subr.mxu0 0.0
        %670 = vmatpush1.msra.mxu0 0.0
        %671 = vmatprep.subr.mxu0 0.0
        %672 = vmatpush1.msra.mxu0 0.0
        %673 = vmatprep.subr.mxu0 0.0
        %674 = vmatpush1.msra.mxu0 0.0
        %675 = vmatprep.subr.mxu0 0.0
        %676 = vmatpush1.msra.mxu0 0.0
        %677 = vmatprep.subr.mxu0 0.0
        %678 = vmatpush1.msra.mxu0 0.0
        %679 = vmatprep.subr.mxu0 0.0
        %680 = vmatpush1.msra.mxu0 0.0
        %681 = vmatprep.subr.mxu0 0.0
        %682 = vmatpush1.msra.mxu0 0.0
        %683 = vmatprep.subr.mxu0 0.0
        %684 = vmatpush1.msra.mxu0 0.0
        %685 = vmatprep.subr.mxu0 0.0
        %686 = vmatpush1.msra.mxu0 0.0
        %687 = vmatprep.subr.mxu0 0.0
        %688 = vmatpush1.msra.mxu0 0.0
        %689 = vmatprep.subr.mxu0 0.0
        %690 = vmatpush1.msra.mxu0 0.0
        %691 = vmatprep.subr.mxu0 0.0
        %692 = vmatpush1.msra.mxu0 0.0
        %693 = vmatprep.subr.mxu0 0.0
        %694 = vmatpush1.msra.mxu0 0.0
        %695 = vmatprep.subr.mxu0 0.0
        %696 = vmatpush1.msra.mxu0 0.0
        %697 = vmatprep.subr.mxu0 0.0
        %698 = vmatpush1.msra.mxu0 0.0
        %699 = vmatprep.subr.mxu0 0.0
        %700 = vmatpush1.msra.mxu0 0.0
        %701 = vmatprep.subr.mxu0 0.0
        %702 = vmatpush1.msra.mxu0 0.0
        %703 = vmatprep.subr.mxu0 0.0
        %704 = vmatpush1.msra.mxu0 0.0
        %705 = vmatprep.subr.mxu0 0.0
        %706 = vmatpush1.msra.mxu0 0.0
        %707 = vmatprep.subr.mxu0 0.0
        %708 = vmatpush1.msra.mxu0 0.0
        %709 = vmatprep.subr.mxu0 0.0
        %710 = vmatpush1.msra.mxu0 0.0
        %711 = vmatprep.subr.mxu0 0.0
        %712 = vmatpush1.msra.mxu0 0.0
        %713 = vmatprep.subr.mxu0 0.0
        %714 = vmatpush1.msra.mxu0 0.0
        %715 = vmatprep.subr.mxu0 0.0
        %716 = vmatpush1.msra.mxu0 0.0
        %717 = vmatprep.subr.mxu0 0.0
        %718 = vmatpush1.msra.mxu0 0.0
        %719 = vmatprep.subr.mxu0 0.0
        %720 = vmatpush1.msra.mxu0 0.0
        %721 = vmatprep.mubr.f32.mxu0 0.0
        %722 = vmatmul.mubr.f32.gmra.mrb[0].mxu0 %v655
        %v723 = vpop.f32.mrb[0].mxu0
        %v724 = vadd.f32 0.0, %v723
        %v725 = vpop.f32.mrb[0].mxu0
        %v726 = vadd.f32 0.0, %v725
        %727 = vdwg.mxu0
        %728 = vmatprep.subr.mxu0 0.0
        %729 = vmatpush1.msra.mxu0 %v647
        %730 = vmatprep.subr.mxu0 0.0
        %731 = vmatpush1.msra.mxu0 0.0
        %732 = vmatprep.subr.mxu0 0.0
        %733 = vmatpush1.msra.mxu0 0.0
        %734 = vmatprep.subr.mxu0 0.0
        %735 = vmatpush1.msra.mxu0 0.0
        %736 = vmatprep.subr.mxu0 0.0
        %737 = vmatpush1.msra.mxu0 0.0
        %738 = vmatprep.subr.mxu0 0.0
        %739 = vmatpush1.msra.mxu0 0.0
        %740 = vmatprep.subr.mxu0 0.0
        %741 = vmatpush1.msra.mxu0 0.0
        %742 = vmatprep.subr.mxu0 0.0
        %743 = vmatpush1.msra.mxu0 0.0
        %744 = vmatprep.subr.mxu0 0.0
        %745 = vmatpush1.msra.mxu0 0.0
        %746 = vmatprep.subr.mxu0 0.0
        %747 = vmatpush1.msra.mxu0 0.0
        %748 = vmatprep.subr.mxu0 0.0
        %749 = vmatpush1.msra.mxu0 0.0
        %750 = vmatprep.subr.mxu0 0.0
        %751 = vmatpush1.msra.mxu0 0.0
        %752 = vmatprep.subr.mxu0 0.0
        %753 = vmatpush1.msra.mxu0 0.0
        %754 = vmatprep.subr.mxu0 0.0
        %755 = vmatpush1.msra.mxu0 0.0
        %756 = vmatprep.subr.mxu0 0.0
        %757 = vmatpush1.msra.mxu0 0.0
        %758 = vmatprep.subr.mxu0 0.0
        %759 = vmatpush1.msra.mxu0 0.0
        %760 = vmatprep.subr.mxu0 0.0
        %761 = vmatpush1.msra.mxu0 0.0
        %762 = vmatprep.subr.mxu0 0.0
        %763 = vmatpush1.msra.mxu0 0.0
        %764 = vmatprep.subr.mxu0 0.0
        %765 = vmatpush1.msra.mxu0 0.0
        %766 = vmatprep.subr.mxu0 0.0
        %767 = vmatpush1.msra.mxu0 0.0
        %768 = vmatprep.subr.mxu0 0.0
        %769 = vmatpush1.msra.mxu0 0.0
        %770 = vmatprep.subr.mxu0 0.0
        %771 = vmatpush1.msra.mxu0 0.0
        %772 = vmatprep.subr.mxu0 0.0
        %773 = vmatpush1.msra.mxu0 0.0
        %774 = vmatprep.subr.mxu0 0.0
        %775 = vmatpush1.msra.mxu0 0.0
        %776 = vmatprep.subr.mxu0 0.0
        %777 = vmatpush1.msra.mxu0 0.0
        %778 = vmatprep.subr.mxu0 0.0
        %779 = vmatpush1.msra.mxu0 0.0
        %780 = vmatprep.subr.mxu0 0.0
        %781 = vmatpush1.msra.mxu0 0.0
        %782 = vmatprep.subr.mxu0 0.0
        %783 = vmatpush1.msra.mxu0 0.0
        %784 = vmatprep.subr.mxu0 0.0
        %785 = vmatpush1.msra.mxu0 0.0
        %786 = vmatprep.subr.mxu0 0.0
        %787 = vmatpush1.msra.mxu0 0.0
        %788 = vmatprep.subr.mxu0 0.0
        %789 = vmatpush1.msra.mxu0 0.0
        %790 = vmatprep.subr.mxu0 0.0
        %791 = vmatpush1.msra.mxu0 0.0
        %792 = vmatprep.mubr.f32.mxu0 0.0
        %793 = vmatmul.mubr.f32.gmra.mrb[0].mxu0 %v655
        %v794 = vpop.f32.mrb[0].mxu0
        %v795 = vadd.f32 0.0, %v794
        %v796 = vpop.f32.mrb[0].mxu0
        %797 = vdwg.mxu0
        %v798 = vadd.f32 %v637, %v724
        %v799 = vadd.f32 %v638, %v726
        %v800 = vadd.f32 %v639, %v795
        %s801 = scalar_lea.vmem %s0, 32
        %v802 = vld [vmem:[%s801] sm:$0xff]
        %803 = vrot.lane.b32.xlu0 %v169, 109
        %v804 = vpop.permute.xlu0 %803
        %805 = vrot.lane.b32.xlu0 %v170, 109
        %v806 = vpop.permute.xlu0 %805
        %807 = vrot.lane.b32.xlu0 %v171, 109
        %v808 = vpop.permute.xlu0 %807
        %vm809 = vcmask 891904
        %v810 = vsel %vm809, %v804, %v806
        %v811 = vsel %vm809, %v806, %v808
        %v816 = vsel %vm190, %v802, 0
        %818 = vmatprep.subr.mxu0 %v811
        %819 = vmatpush1.msra.mxu0 %v810
        %820 = vmatprep.subr.mxu0 0.0
        %821 = vmatpush1.msra.mxu0 0.0
        %822 = vmatprep.subr.mxu0 0.0
        %823 = vmatpush1.msra.mxu0 0.0
        %824 = vmatprep.subr.mxu0 0.0
        %825 = vmatpush1.msra.mxu0 0.0
        %826 = vmatprep.subr.mxu0 0.0
        %827 = vmatpush1.msra.mxu0 0.0
        %828 = vmatprep.subr.mxu0 0.0
        %829 = vmatpush1.msra.mxu0 0.0
        %830 = vmatprep.subr.mxu0 0.0
        %831 = vmatpush1.msra.mxu0 0.0
        %832 = vmatprep.subr.mxu0 0.0
        %833 = vmatpush1.msra.mxu0 0.0
        %834 = vmatprep.subr.mxu0 0.0
        %835 = vmatpush1.msra.mxu0 0.0
        %836 = vmatprep.subr.mxu0 0.0
        %837 = vmatpush1.msra.mxu0 0.0
        %838 = vmatprep.subr.mxu0 0.0
        %839 = vmatpush1.msra.mxu0 0.0
        %840 = vmatprep.subr.mxu0 0.0
        %841 = vmatpush1.msra.mxu0 0.0
        %842 = vmatprep.subr.mxu0 0.0
        %843 = vmatpush1.msra.mxu0 0.0
        %844 = vmatprep.subr.mxu0 0.0
        %845 = vmatpush1.msra.mxu0 0.0
        %846 = vmatprep.subr.mxu0 0.0
        %847 = vmatpush1.msra.mxu0 0.0
        %848 = vmatprep.subr.mxu0 0.0
        %849 = vmatpush1.msra.mxu0 0.0
        %850 = vmatprep.subr.mxu0 0.0
        %851 = vmatpush1.msra.mxu0 0.0
        %852 = vmatprep.subr.mxu0 0.0
        %853 = vmatpush1.msra.mxu0 0.0
        %854 = vmatprep.subr.mxu0 0.0
        %855 = vmatpush1.msra.mxu0 0.0
        %856 = vmatprep.subr.mxu0 0.0
        %857 = vmatpush1.msra.mxu0 0.0
        %858 = vmatprep.subr.mxu0 0.0
        %859 = vmatpush1.msra.mxu0 0.0
        %860 = vmatprep.subr.mxu0 0.0
        %861 = vmatpush1.msra.mxu0 0.0
        %862 = vmatprep.subr.mxu0 0.0
        %863 = vmatpush1.msra.mxu0 0.0
        %864 = vmatprep.subr.mxu0 0.0
        %865 = vmatpush1.msra.mxu0 0.0
        %866 = vmatprep.subr.mxu0 0.0
        %867 = vmatpush1.msra.mxu0 0.0
        %868 = vmatprep.subr.mxu0 0.0
        %869 = vmatpush1.msra.mxu0 0.0
        %870 = vmatprep.subr.mxu0 0.0
        %871 = vmatpush1.msra.mxu0 0.0
        %872 = vmatprep.subr.mxu0 0.0
        %873 = vmatpush1.msra.mxu0 0.0
        %874 = vmatprep.subr.mxu0 0.0
        %875 = vmatpush1.msra.mxu0 0.0
        %876 = vmatprep.subr.mxu0 0.0
        %877 = vmatpush1.msra.mxu0 0.0
        %878 = vmatprep.subr.mxu0 0.0
        %879 = vmatpush1.msra.mxu0 0.0
        %880 = vmatprep.subr.mxu0 0.0
        %881 = vmatpush1.msra.mxu0 0.0
        %882 = vmatprep.mubr.f32.mxu0 0.0
        %883 = vmatmul.mubr.f32.gmra.mrb[0].mxu0 %v816
        %v884 = vpop.f32.mrb[0].mxu0
        %v885 = vadd.f32 0.0, %v884
        %v886 = vpop.f32.mrb[0].mxu0
        %v887 = vadd.f32 0.0, %v886
        %888 = vdwg.mxu0
        %889 = vmatprep.subr.mxu0 0.0
        %890 = vmatpush1.msra.mxu0 %v808
        %891 = vmatprep.subr.mxu0 0.0
        %892 = vmatpush1.msra.mxu0 0.0
        %893 = vmatprep.subr.mxu0 0.0
        %894 = vmatpush1.msra.mxu0 0.0
        %895 = vmatprep.subr.mxu0 0.0
        %896 = vmatpush1.msra.mxu0 0.0
        %897 = vmatprep.subr.mxu0 0.0
        %898 = vmatpush1.msra.mxu0 0.0
        %899 = vmatprep.subr.mxu0 0.0
        %900 = vmatpush1.msra.mxu0 0.0
        %901 = vmatprep.subr.mxu0 0.0
        %902 = vmatpush1.msra.mxu0 0.0
        %903 = vmatprep.subr.mxu0 0.0
        %904 = vmatpush1.msra.mxu0 0.0
        %905 = vmatprep.subr.mxu0 0.0
        %906 = vmatpush1.msra.mxu0 0.0
        %907 = vmatprep.subr.mxu0 0.0
        %908 = vmatpush1.msra.mxu0 0.0
        %909 = vmatprep.subr.mxu0 0.0
        %910 = vmatpush1.msra.mxu0 0.0
        %911 = vmatprep.subr.mxu0 0.0
        %912 = vmatpush1.msra.mxu0 0.0
        %913 = vmatprep.subr.mxu0 0.0
        %914 = vmatpush1.msra.mxu0 0.0
        %915 = vmatprep.subr.mxu0 0.0
        %916 = vmatpush1.msra.mxu0 0.0
        %917 = vmatprep.subr.mxu0 0.0
        %918 = vmatpush1.msra.mxu0 0.0
        %919 = vmatprep.subr.mxu0 0.0
        %920 = vmatpush1.msra.mxu0 0.0
        %921 = vmatprep.subr.mxu0 0.0
        %922 = vmatpush1.msra.mxu0 0.0
        %923 = vmatprep.subr.mxu0 0.0
        %924 = vmatpush1.msra.mxu0 0.0
        %925 = vmatprep.subr.mxu0 0.0
        %926 = vmatpush1.msra.mxu0 0.0
        %927 = vmatprep.subr.mxu0 0.0
        %928 = vmatpush1.msra.mxu0 0.0
        %929 = vmatprep.subr.mxu0 0.0
        %930 = vmatpush1.msra.mxu0 0.0
        %931 = vmatprep.subr.mxu0 0.0
        %932 = vmatpush1.msra.mxu0 0.0
        %933 = vmatprep.subr.mxu0 0.0
        %934 = vmatpush1.msra.mxu0 0.0
        %935 = vmatprep.subr.mxu0 0.0
        %936 = vmatpush1.msra.mxu0 0.0
        %937 = vmatprep.subr.mxu0 0.0
        %938 = vmatpush1.msra.mxu0 0.0
        %939 = vmatprep.subr.mxu0 0.0
        %940 = vmatpush1.msra.mxu0 0.0
        %941 = vmatprep.subr.mxu0 0.0
        %942 = vmatpush1.msra.mxu0 0.0
        %943 = vmatprep.subr.mxu0 0.0
        %944 = vmatpush1.msra.mxu0 0.0
        %945 = vmatprep.subr.mxu0 0.0
        %946 = vmatpush1.msra.mxu0 0.0
        %947 = vmatprep.subr.mxu0 0.0
        %948 = vmatpush1.msra.mxu0 0.0
        %949 = vmatprep.subr.mxu0 0.0
        %950 = vmatpush1.msra.mxu0 0.0
        %951 = vmatprep.subr.mxu0 0.0
        %952 = vmatpush1.msra.mxu0 0.0
        %953 = vmatprep.mubr.f32.mxu0 0.0
        %954 = vmatmul.mubr.f32.gmra.mrb[0].mxu0 %v816
        %v955 = vpop.f32.mrb[0].mxu0
        %v956 = vadd.f32 0.0, %v955
        %v957 = vpop.f32.mrb[0].mxu0
        %958 = vdwg.mxu0
        %v959 = vadd.f32 %v798, %v885
        %v960 = vadd.f32 %v799, %v887
        %v961 = vadd.f32 %v800, %v956
        %s962 = scalar_lea.vmem %s0, 40
        %v963 = vld [vmem:[%s962] sm:$0xff]
        %964 = vrot.lane.b32.xlu0 %v169, 108
        %v965 = vpop.permute.xlu0 %964
        %966 = vrot.lane.b32.xlu0 %v170, 108
        %v967 = vpop.permute.xlu0 %966
        %968 = vrot.lane.b32.xlu0 %v171, 108
        %v969 = vpop.permute.xlu0 %968
        %vm970 = vcmask 883712
        %v971 = vsel %vm970, %v965, %v967
        %v972 = vsel %vm970, %v967, %v969
        %v977 = vsel %vm190, %v963, 0
        %979 = vmatprep.subr.mxu0 %v972
        %980 = vmatpush1.msra.mxu0 %v971
        %981 = vmatprep.subr.mxu0 0.0
        %982 = vmatpush1.msra.mxu0 0.0
        %983 = vmatprep.subr.mxu0 0.0
        %984 = vmatpush1.msra.mxu0 0.0
        %985 = vmatprep.subr.mxu0 0.0
        %986 = vmatpush1.msra.mxu0 0.0
        %987 = vmatprep.subr.mxu0 0.0
        %988 = vmatpush1.msra.mxu0 0.0
        %989 = vmatprep.subr.mxu0 0.0
        %990 = vmatpush1.msra.mxu0 0.0
        %991 = vmatprep.subr.mxu0 0.0
        %992 = vmatpush1.msra.mxu0 0.0
        %993 = vmatprep.subr.mxu0 0.0
        %994 = vmatpush1.msra.mxu0 0.0
        %995 = vmatprep.subr.mxu0 0.0
        %996 = vmatpush1.msra.mxu0 0.0
        %997 = vmatprep.subr.mxu0 0.0
        %998 = vmatpush1.msra.mxu0 0.0
        %999 = vmatprep.subr.mxu0 0.0
        %1000 = vmatpush1.msra.mxu0 0.0
        %1001 = vmatprep.subr.mxu0 0.0
        %1002 = vmatpush1.msra.mxu0 0.0
        %1003 = vmatprep.subr.mxu0 0.0
        %1004 = vmatpush1.msra.mxu0 0.0
        %1005 = vmatprep.subr.mxu0 0.0
        %1006 = vmatpush1.msra.mxu0 0.0
        %1007 = vmatprep.subr.mxu0 0.0
        %1008 = vmatpush1.msra.mxu0 0.0
        %1009 = vmatprep.subr.mxu0 0.0
        %1010 = vmatpush1.msra.mxu0 0.0
        %1011 = vmatprep.subr.mxu0 0.0
        %1012 = vmatpush1.msra.mxu0 0.0
        %1013 = vmatprep.subr.mxu0 0.0
        %1014 = vmatpush1.msra.mxu0 0.0
        %1015 = vmatprep.subr.mxu0 0.0
        %1016 = vmatpush1.msra.mxu0 0.0
        %1017 = vmatprep.subr.mxu0 0.0
        %1018 = vmatpush1.msra.mxu0 0.0
        %1019 = vmatprep.subr.mxu0 0.0
        %1020 = vmatpush1.msra.mxu0 0.0
        %1021 = vmatprep.subr.mxu0 0.0
        %1022 = vmatpush1.msra.mxu0 0.0
        %1023 = vmatprep.subr.mxu0 0.0
        %1024 = vmatpush1.msra.mxu0 0.0
        %1025 = vmatprep.subr.mxu0 0.0
        %1026 = vmatpush1.msra.mxu0 0.0
        %1027 = vmatprep.subr.mxu0 0.0
        %1028 = vmatpush1.msra.mxu0 0.0
        %1029 = vmatprep.subr.mxu0 0.0
        %1030 = vmatpush1.msra.mxu0 0.0
        %1031 = vmatprep.subr.mxu0 0.0
        %1032 = vmatpush1.msra.mxu0 0.0
        %1033 = vmatprep.subr.mxu0 0.0
        %1034 = vmatpush1.msra.mxu0 0.0
        %1035 = vmatprep.subr.mxu0 0.0
        %1036 = vmatpush1.msra.mxu0 0.0
        %1037 = vmatprep.subr.mxu0 0.0
        %1038 = vmatpush1.msra.mxu0 0.0
        %1039 = vmatprep.subr.mxu0 0.0
        %1040 = vmatpush1.msra.mxu0 0.0
        %1041 = vmatprep.subr.mxu0 0.0
        %1042 = vmatpush1.msra.mxu0 0.0
        %1043 = vmatprep.mubr.f32.mxu0 0.0
        %1044 = vmatmul.mubr.f32.gmra.mrb[0].mxu0 %v977
        %v1045 = vpop.f32.mrb[0].mxu0
        %v1046 = vadd.f32 0.0, %v1045
        %v1047 = vpop.f32.mrb[0].mxu0
        %v1048 = vadd.f32 0.0, %v1047
        %1049 = vdwg.mxu0
        %1050 = vmatprep.subr.mxu0 0.0
        %1051 = vmatpush1.msra.mxu0 %v969
        %1052 = vmatprep.subr.mxu0 0.0
        %1053 = vmatpush1.msra.mxu0 0.0
        %1054 = vmatprep.subr.mxu0 0.0
        %1055 = vmatpush1.msra.mxu0 0.0
        %1056 = vmatprep.subr.mxu0 0.0
        %1057 = vmatpush1.msra.mxu0 0.0
        %1058 = vmatprep.subr.mxu0 0.0
        %1059 = vmatpush1.msra.mxu0 0.0
        %1060 = vmatprep.subr.mxu0 0.0
        %1061 = vmatpush1.msra.mxu0 0.0
        %1062 = vmatprep.subr.mxu0 0.0
        %1063 = vmatpush1.msra.mxu0 0.0
        %1064 = vmatprep.subr.mxu0 0.0
        %1065 = vmatpush1.msra.mxu0 0.0
        %1066 = vmatprep.subr.mxu0 0.0
        %1067 = vmatpush1.msra.mxu0 0.0
        %1068 = vmatprep.subr.mxu0 0.0
        %1069 = vmatpush1.msra.mxu0 0.0
        %1070 = vmatprep.subr.mxu0 0.0
        %1071 = vmatpush1.msra.mxu0 0.0
        %1072 = vmatprep.subr.mxu0 0.0
        %1073 = vmatpush1.msra.mxu0 0.0
        %1074 = vmatprep.subr.mxu0 0.0
        %1075 = vmatpush1.msra.mxu0 0.0
        %1076 = vmatprep.subr.mxu0 0.0
        %1077 = vmatpush1.msra.mxu0 0.0
        %1078 = vmatprep.subr.mxu0 0.0
        %1079 = vmatpush1.msra.mxu0 0.0
        %1080 = vmatprep.subr.mxu0 0.0
        %1081 = vmatpush1.msra.mxu0 0.0
        %1082 = vmatprep.subr.mxu0 0.0
        %1083 = vmatpush1.msra.mxu0 0.0
        %1084 = vmatprep.subr.mxu0 0.0
        %1085 = vmatpush1.msra.mxu0 0.0
        %1086 = vmatprep.subr.mxu0 0.0
        %1087 = vmatpush1.msra.mxu0 0.0
        %1088 = vmatprep.subr.mxu0 0.0
        %1089 = vmatpush1.msra.mxu0 0.0
        %1090 = vmatprep.subr.mxu0 0.0
        %1091 = vmatpush1.msra.mxu0 0.0
        %1092 = vmatprep.subr.mxu0 0.0
        %1093 = vmatpush1.msra.mxu0 0.0
        %1094 = vmatprep.subr.mxu0 0.0
        %1095 = vmatpush1.msra.mxu0 0.0
        %1096 = vmatprep.subr.mxu0 0.0
        %1097 = vmatpush1.msra.mxu0 0.0
        %1098 = vmatprep.subr.mxu0 0.0
        %1099 = vmatpush1.msra.mxu0 0.0
        %1100 = vmatprep.subr.mxu0 0.0
        %1101 = vmatpush1.msra.mxu0 0.0
        %1102 = vmatprep.subr.mxu0 0.0
        %1103 = vmatpush1.msra.mxu0 0.0
        %1104 = vmatprep.subr.mxu0 0.0
        %1105 = vmatpush1.msra.mxu0 0.0
        %1106 = vmatprep.subr.mxu0 0.0
        %1107 = vmatpush1.msra.mxu0 0.0
        %1108 = vmatprep.subr.mxu0 0.0
        %1109 = vmatpush1.msra.mxu0 0.0
        %1110 = vmatprep.subr.mxu0 0.0
        %1111 = vmatpush1.msra.mxu0 0.0
        %1112 = vmatprep.subr.mxu0 0.0
        %1113 = vmatpush1.msra.mxu0 0.0
        %1114 = vmatprep.mubr.f32.mxu0 0.0
        %1115 = vmatmul.mubr.f32.gmra.mrb[0].mxu0 %v977
        %v1116 = vpop.f32.mrb[0].mxu0
        %v1117 = vadd.f32 0.0, %v1116
        %v1118 = vpop.f32.mrb[0].mxu0
        %1119 = vdwg.mxu0
        %v1120 = vadd.f32 %v959, %v1046
        %v1121 = vadd.f32 %v960, %v1048
        %v1122 = vadd.f32 %v961, %v1117
        %s1123 = scalar_lea.vmem %s0, 48
        %v1124 = vld [vmem:[%s1123] sm:$0xff]
        %1125 = vrot.lane.b32.xlu0 %v169, 92
        %v1126 = vpop.permute.xlu0 %1125
        %1127 = vrot.lane.b32.xlu0 %v170, 92
        %v1128 = vpop.permute.xlu0 %1127
        %1129 = vrot.lane.b32.xlu0 %v171, 92
        %v1130 = vpop.permute.xlu0 %1129
        %vm1131 = vcmask 752640
        %v1132 = vsel %vm1131, %v1126, %v1128
        %v1133 = vsel %vm1131, %v1128, %v1130
        %v1138 = vsel %vm190, %v1124, 0
        %1140 = vmatprep.subr.mxu0 %v1133
        %1141 = vmatpush1.msra.mxu0 %v1132
        %1142 = vmatprep.subr.mxu0 0.0
        %1143 = vmatpush1.msra.mxu0 0.0
        %1144 = vmatprep.subr.mxu0 0.0
        %1145 = vmatpush1.msra.mxu0 0.0
        %1146 = vmatprep.subr.mxu0 0.0
        %1147 = vmatpush1.msra.mxu0 0.0
        %1148 = vmatprep.subr.mxu0 0.0
        %1149 = vmatpush1.msra.mxu0 0.0
        %1150 = vmatprep.subr.mxu0 0.0
        %1151 = vmatpush1.msra.mxu0 0.0
        %1152 = vmatprep.subr.mxu0 0.0
        %1153 = vmatpush1.msra.mxu0 0.0
        %1154 = vmatprep.subr.mxu0 0.0
        %1155 = vmatpush1.msra.mxu0 0.0
        %1156 = vmatprep.subr.mxu0 0.0
        %1157 = vmatpush1.msra.mxu0 0.0
        %1158 = vmatprep.subr.mxu0 0.0
        %1159 = vmatpush1.msra.mxu0 0.0
        %1160 = vmatprep.subr.mxu0 0.0
        %1161 = vmatpush1.msra.mxu0 0.0
        %1162 = vmatprep.subr.mxu0 0.0
        %1163 = vmatpush1.msra.mxu0 0.0
        %1164 = vmatprep.subr.mxu0 0.0
        %1165 = vmatpush1.msra.mxu0 0.0
        %1166 = vmatprep.subr.mxu0 0.0
        %1167 = vmatpush1.msra.mxu0 0.0
        %1168 = vmatprep.subr.mxu0 0.0
        %1169 = vmatpush1.msra.mxu0 0.0
        %1170 = vmatprep.subr.mxu0 0.0
        %1171 = vmatpush1.msra.mxu0 0.0
        %1172 = vmatprep.subr.mxu0 0.0
        %1173 = vmatpush1.msra.mxu0 0.0
        %1174 = vmatprep.subr.mxu0 0.0
        %1175 = vmatpush1.msra.mxu0 0.0
        %1176 = vmatprep.subr.mxu0 0.0
        %1177 = vmatpush1.msra.mxu0 0.0
        %1178 = vmatprep.subr.mxu0 0.0
        %1179 = vmatpush1.msra.mxu0 0.0
        %1180 = vmatprep.subr.mxu0 0.0
        %1181 = vmatpush1.msra.mxu0 0.0
        %1182 = vmatprep.subr.mxu0 0.0
        %1183 = vmatpush1.msra.mxu0 0.0
        %1184 = vmatprep.subr.mxu0 0.0
        %1185 = vmatpush1.msra.mxu0 0.0
        %1186 = vmatprep.subr.mxu0 0.0
        %1187 = vmatpush1.msra.mxu0 0.0
        %1188 = vmatprep.subr.mxu0 0.0
        %1189 = vmatpush1.msra.mxu0 0.0
        %1190 = vmatprep.subr.mxu0 0.0
        %1191 = vmatpush1.msra.mxu0 0.0
        %1192 = vmatprep.subr.mxu0 0.0
        %1193 = vmatpush1.msra.mxu0 0.0
        %1194 = vmatprep.subr.mxu0 0.0
        %1195 = vmatpush1.msra.mxu0 0.0
        %1196 = vmatprep.subr.mxu0 0.0
        %1197 = vmatpush1.msra.mxu0 0.0
        %1198 = vmatprep.subr.mxu0 0.0
        %1199 = vmatpush1.msra.mxu0 0.0
        %1200 = vmatprep.subr.mxu0 0.0
        %1201 = vmatpush1.msra.mxu0 0.0
        %1202 = vmatprep.subr.mxu0 0.0
        %1203 = vmatpush1.msra.mxu0 0.0
        %1204 = vmatprep.mubr.f32.mxu0 0.0
        %1205 = vmatmul.mubr.f32.gmra.mrb[0].mxu0 %v1138
        %v1206 = vpop.f32.mrb[0].mxu0
        %v1207 = vadd.f32 0.0, %v1206
        %v1208 = vpop.f32.mrb[0].mxu0
        %v1209 = vadd.f32 0.0, %v1208
        %1210 = vdwg.mxu0
        %1211 = vmatprep.subr.mxu0 0.0
        %1212 = vmatpush1.msra.mxu0 %v1130
        %1213 = vmatprep.subr.mxu0 0.0
        %1214 = vmatpush1.msra.mxu0 0.0
        %1215 = vmatprep.subr.mxu0 0.0
        %1216 = vmatpush1.msra.mxu0 0.0
        %1217 = vmatprep.subr.mxu0 0.0
        %1218 = vmatpush1.msra.mxu0 0.0
        %1219 = vmatprep.subr.mxu0 0.0
        %1220 = vmatpush1.msra.mxu0 0.0
        %1221 = vmatprep.subr.mxu0 0.0
        %1222 = vmatpush1.msra.mxu0 0.0
        %1223 = vmatprep.subr.mxu0 0.0
        %1224 = vmatpush1.msra.mxu0 0.0
        %1225 = vmatprep.subr.mxu0 0.0
        %1226 = vmatpush1.msra.mxu0 0.0
        %1227 = vmatprep.subr.mxu0 0.0
        %1228 = vmatpush1.msra.mxu0 0.0
        %1229 = vmatprep.subr.mxu0 0.0
        %1230 = vmatpush1.msra.mxu0 0.0
        %1231 = vmatprep.subr.mxu0 0.0
        %1232 = vmatpush1.msra.mxu0 0.0
        %1233 = vmatprep.subr.mxu0 0.0
        %1234 = vmatpush1.msra.mxu0 0.0
        %1235 = vmatprep.subr.mxu0 0.0
        %1236 = vmatpush1.msra.mxu0 0.0
        %1237 = vmatprep.subr.mxu0 0.0
        %1238 = vmatpush1.msra.mxu0 0.0
        %1239 = vmatprep.subr.mxu0 0.0
        %1240 = vmatpush1.msra.mxu0 0.0
        %1241 = vmatprep.subr.mxu0 0.0
        %1242 = vmatpush1.msra.mxu0 0.0
        %1243 = vmatprep.subr.mxu0 0.0
        %1244 = vmatpush1.msra.mxu0 0.0
        %1245 = vmatprep.subr.mxu0 0.0
        %1246 = vmatpush1.msra.mxu0 0.0
        %1247 = vmatprep.subr.mxu0 0.0
        %1248 = vmatpush1.msra.mxu0 0.0
        %1249 = vmatprep.subr.mxu0 0.0
        %1250 = vmatpush1.msra.mxu0 0.0
        %1251 = vmatprep.subr.mxu0 0.0
        %1252 = vmatpush1.msra.mxu0 0.0
        %1253 = vmatprep.subr.mxu0 0.0
        %1254 = vmatpush1.msra.mxu0 0.0
        %1255 = vmatprep.subr.mxu0 0.0
        %1256 = vmatpush1.msra.mxu0 0.0
        %1257 = vmatprep.subr.mxu0 0.0
        %1258 = vmatpush1.msra.mxu0 0.0
        %1259 = vmatprep.subr.mxu0 0.0
        %1260 = vmatpush1.msra.mxu0 0.0
        %1261 = vmatprep.subr.mxu0 0.0
        %1262 = vmatpush1.msra.mxu0 0.0
        %1263 = vmatprep.subr.mxu0 0.0
        %1264 = vmatpush1.msra.mxu0 0.0
        %1265 = vmatprep.subr.mxu0 0.0
        %1266 = vmatpush1.msra.mxu0 0.0
        %1267 = vmatprep.subr.mxu0 0.0
        %1268 = vmatpush1.msra.mxu0 0.0
        %1269 = vmatprep.subr.mxu0 0.0
        %1270 = vmatpush1.msra.mxu0 0.0
        %1271 = vmatprep.subr.mxu0 0.0
        %1272 = vmatpush1.msra.mxu0 0.0
        %1273 = vmatprep.subr.mxu0 0.0
        %1274 = vmatpush1.msra.mxu0 0.0
        %1275 = vmatprep.mubr.f32.mxu0 0.0
        %1276 = vmatmul.mubr.f32.gmra.mrb[0].mxu0 %v1138
        %v1277 = vpop.f32.mrb[0].mxu0
        %v1278 = vadd.f32 0.0, %v1277
        %v1279 = vpop.f32.mrb[0].mxu0
        %1280 = vdwg.mxu0
        %v1281 = vadd.f32 %v1120, %v1207
        %v1282 = vadd.f32 %v1121, %v1209
        %v1283 = vadd.f32 %v1122, %v1278
        %s1284 = scalar_lea.vmem %s0, 56
        %v1285 = vld [vmem:[%s1284] sm:$0xff]
        %1286 = vrot.lane.b32.xlu0 %v169, 91
        %v1287 = vpop.permute.xlu0 %1286
        %1288 = vrot.lane.b32.xlu0 %v170, 91
        %v1289 = vpop.permute.xlu0 %1288
        %1290 = vrot.lane.b32.xlu0 %v171, 91
        %v1291 = vpop.permute.xlu0 %1290
        %vm1292 = vcmask 744448
        %v1293 = vsel %vm1292, %v1287, %v1289
        %v1294 = vsel %vm1292, %v1289, %v1291
        %v1299 = vsel %vm190, %v1285, 0
        %1301 = vmatprep.subr.mxu0 %v1294
        %1302 = vmatpush1.msra.mxu0 %v1293
        %1303 = vmatprep.subr.mxu0 0.0
        %1304 = vmatpush1.msra.mxu0 0.0
        %1305 = vmatprep.subr.mxu0 0.0
        %1306 = vmatpush1.msra.mxu0 0.0
        %1307 = vmatprep.subr.mxu0 0.0
        %1308 = vmatpush1.msra.mxu0 0.0
        %1309 = vmatprep.subr.mxu0 0.0
        %1310 = vmatpush1.msra.mxu0 0.0
        %1311 = vmatprep.subr.mxu0 0.0
        %1312 = vmatpush1.msra.mxu0 0.0
        %1313 = vmatprep.subr.mxu0 0.0
        %1314 = vmatpush1.msra.mxu0 0.0
        %1315 = vmatprep.subr.mxu0 0.0
        %1316 = vmatpush1.msra.mxu0 0.0
        %1317 = vmatprep.subr.mxu0 0.0
        %1318 = vmatpush1.msra.mxu0 0.0
        %1319 = vmatprep.subr.mxu0 0.0
        %1320 = vmatpush1.msra.mxu0 0.0
        %1321 = vmatprep.subr.mxu0 0.0
        %1322 = vmatpush1.msra.mxu0 0.0
        %1323 = vmatprep.subr.mxu0 0.0
        %1324 = vmatpush1.msra.mxu0 0.0
        %1325 = vmatprep.subr.mxu0 0.0
        %1326 = vmatpush1.msra.mxu0 0.0
        %1327 = vmatprep.subr.mxu0 0.0
        %1328 = vmatpush1.msra.mxu0 0.0
        %1329 = vmatprep.subr.mxu0 0.0
        %1330 = vmatpush1.msra.mxu0 0.0
        %1331 = vmatprep.subr.mxu0 0.0
        %1332 = vmatpush1.msra.mxu0 0.0
        %1333 = vmatprep.subr.mxu0 0.0
        %1334 = vmatpush1.msra.mxu0 0.0
        %1335 = vmatprep.subr.mxu0 0.0
        %1336 = vmatpush1.msra.mxu0 0.0
        %1337 = vmatprep.subr.mxu0 0.0
        %1338 = vmatpush1.msra.mxu0 0.0
        %1339 = vmatprep.subr.mxu0 0.0
        %1340 = vmatpush1.msra.mxu0 0.0
        %1341 = vmatprep.subr.mxu0 0.0
        %1342 = vmatpush1.msra.mxu0 0.0
        %1343 = vmatprep.subr.mxu0 0.0
        %1344 = vmatpush1.msra.mxu0 0.0
        %1345 = vmatprep.subr.mxu0 0.0
        %1346 = vmatpush1.msra.mxu0 0.0
        %1347 = vmatprep.subr.mxu0 0.0
        %1348 = vmatpush1.msra.mxu0 0.0
        %1349 = vmatprep.subr.mxu0 0.0
        %1350 = vmatpush1.msra.mxu0 0.0
        %1351 = vmatprep.subr.mxu0 0.0
        %1352 = vmatpush1.msra.mxu0 0.0
        %1353 = vmatprep.subr.mxu0 0.0
        %1354 = vmatpush1.msra.mxu0 0.0
        %1355 = vmatprep.subr.mxu0 0.0
        %1356 = vmatpush1.msra.mxu0 0.0
        %1357 = vmatprep.subr.mxu0 0.0
        %1358 = vmatpush1.msra.mxu0 0.0
        %1359 = vmatprep.subr.mxu0 0.0
        %1360 = vmatpush1.msra.mxu0 0.0
        %1361 = vmatprep.subr.mxu0 0.0
        %1362 = vmatpush1.msra.mxu0 0.0
        %1363 = vmatprep.subr.mxu0 0.0
        %1364 = vmatpush1.msra.mxu0 0.0
        %1365 = vmatprep.mubr.f32.mxu0 0.0
        %1366 = vmatmul.mubr.f32.gmra.mrb[0].mxu0 %v1299
        %v1367 = vpop.f32.mrb[0].mxu0
        %v1368 = vadd.f32 0.0, %v1367
        %v1369 = vpop.f32.mrb[0].mxu0
        %v1370 = vadd.f32 0.0, %v1369
        %1371 = vdwg.mxu0
        %1372 = vmatprep.subr.mxu0 0.0
        %1373 = vmatpush1.msra.mxu0 %v1291
        %1374 = vmatprep.subr.mxu0 0.0
        %1375 = vmatpush1.msra.mxu0 0.0
        %1376 = vmatprep.subr.mxu0 0.0
        %1377 = vmatpush1.msra.mxu0 0.0
        %1378 = vmatprep.subr.mxu0 0.0
        %1379 = vmatpush1.msra.mxu0 0.0
        %1380 = vmatprep.subr.mxu0 0.0
        %1381 = vmatpush1.msra.mxu0 0.0
        %1382 = vmatprep.subr.mxu0 0.0
        %1383 = vmatpush1.msra.mxu0 0.0
        %1384 = vmatprep.subr.mxu0 0.0
        %1385 = vmatpush1.msra.mxu0 0.0
        %1386 = vmatprep.subr.mxu0 0.0
        %1387 = vmatpush1.msra.mxu0 0.0
        %1388 = vmatprep.subr.mxu0 0.0
        %1389 = vmatpush1.msra.mxu0 0.0
        %1390 = vmatprep.subr.mxu0 0.0
        %1391 = vmatpush1.msra.mxu0 0.0
        %1392 = vmatprep.subr.mxu0 0.0
        %1393 = vmatpush1.msra.mxu0 0.0
        %1394 = vmatprep.subr.mxu0 0.0
        %1395 = vmatpush1.msra.mxu0 0.0
        %1396 = vmatprep.subr.mxu0 0.0
        %1397 = vmatpush1.msra.mxu0 0.0
        %1398 = vmatprep.subr.mxu0 0.0
        %1399 = vmatpush1.msra.mxu0 0.0
        %1400 = vmatprep.subr.mxu0 0.0
        %1401 = vmatpush1.msra.mxu0 0.0
        %1402 = vmatprep.subr.mxu0 0.0
        %1403 = vmatpush1.msra.mxu0 0.0
        %1404 = vmatprep.subr.mxu0 0.0
        %1405 = vmatpush1.msra.mxu0 0.0
        %1406 = vmatprep.subr.mxu0 0.0
        %1407 = vmatpush1.msra.mxu0 0.0
        %1408 = vmatprep.subr.mxu0 0.0
        %1409 = vmatpush1.msra.mxu0 0.0
        %1410 = vmatprep.subr.mxu0 0.0
        %1411 = vmatpush1.msra.mxu0 0.0
        %1412 = vmatprep.subr.mxu0 0.0
        %1413 = vmatpush1.msra.mxu0 0.0
        %1414 = vmatprep.subr.mxu0 0.0
        %1415 = vmatpush1.msra.mxu0 0.0
        %1416 = vmatprep.subr.mxu0 0.0
        %1417 = vmatpush1.msra.mxu0 0.0
        %1418 = vmatprep.subr.mxu0 0.0
        %1419 = vmatpush1.msra.mxu0 0.0
        %1420 = vmatprep.subr.mxu0 0.0
        %1421 = vmatpush1.msra.mxu0 0.0
        %1422 = vmatprep.subr.mxu0 0.0
        %1423 = vmatpush1.msra.mxu0 0.0
        %1424 = vmatprep.subr.mxu0 0.0
        %1425 = vmatpush1.msra.mxu0 0.0
        %1426 = vmatprep.subr.mxu0 0.0
        %1427 = vmatpush1.msra.mxu0 0.0
        %1428 = vmatprep.subr.mxu0 0.0
        %1429 = vmatpush1.msra.mxu0 0.0
        %1430 = vmatprep.subr.mxu0 0.0
        %1431 = vmatpush1.msra.mxu0 0.0
        %1432 = vmatprep.subr.mxu0 0.0
        %1433 = vmatpush1.msra.mxu0 0.0
        %1434 = vmatprep.subr.mxu0 0.0
        %1435 = vmatpush1.msra.mxu0 0.0
        %1436 = vmatprep.mubr.f32.mxu0 0.0
        %1437 = vmatmul.mubr.f32.gmra.mrb[0].mxu0 %v1299
        %v1438 = vpop.f32.mrb[0].mxu0
        %v1439 = vadd.f32 0.0, %v1438
        %v1440 = vpop.f32.mrb[0].mxu0
        %1441 = vdwg.mxu0
        %v1442 = vadd.f32 %v1281, %v1368
        %v1443 = vadd.f32 %v1282, %v1370
        %v1444 = vadd.f32 %v1283, %v1439
        %s1445 = scalar_lea.vmem %s0, 64
        %v1446 = vld [vmem:[%s1445] sm:$0xff]
        %1447 = vrot.lane.b32.xlu0 %v169, 90
        %v1448 = vpop.permute.xlu0 %1447
        %1449 = vrot.lane.b32.xlu0 %v170, 90
        %v1450 = vpop.permute.xlu0 %1449
        %1451 = vrot.lane.b32.xlu0 %v171, 90
        %v1452 = vpop.permute.xlu0 %1451
        %vm1453 = vcmask 736256
        %v1454 = vsel %vm1453, %v1448, %v1450
        %v1455 = vsel %vm1453, %v1450, %v1452
        %v1460 = vsel %vm190, %v1446, 0
        %1462 = vmatprep.subr.mxu0 %v1455
        %1463 = vmatpush1.msra.mxu0 %v1454
        %1464 = vmatprep.subr.mxu0 0.0
        %1465 = vmatpush1.msra.mxu0 0.0
        %1466 = vmatprep.subr.mxu0 0.0
        %1467 = vmatpush1.msra.mxu0 0.0
        %1468 = vmatprep.subr.mxu0 0.0
        %1469 = vmatpush1.msra.mxu0 0.0
        %1470 = vmatprep.subr.mxu0 0.0
        %1471 = vmatpush1.msra.mxu0 0.0
        %1472 = vmatprep.subr.mxu0 0.0
        %1473 = vmatpush1.msra.mxu0 0.0
        %1474 = vmatprep.subr.mxu0 0.0
        %1475 = vmatpush1.msra.mxu0 0.0
        %1476 = vmatprep.subr.mxu0 0.0
        %1477 = vmatpush1.msra.mxu0 0.0
        %1478 = vmatprep.subr.mxu0 0.0
        %1479 = vmatpush1.msra.mxu0 0.0
        %1480 = vmatprep.subr.mxu0 0.0
        %1481 = vmatpush1.msra.mxu0 0.0
        %1482 = vmatprep.subr.mxu0 0.0
        %1483 = vmatpush1.msra.mxu0 0.0
        %1484 = vmatprep.subr.mxu0 0.0
        %1485 = vmatpush1.msra.mxu0 0.0
        %1486 = vmatprep.subr.mxu0 0.0
        %1487 = vmatpush1.msra.mxu0 0.0
        %1488 = vmatprep.subr.mxu0 0.0
        %1489 = vmatpush1.msra.mxu0 0.0
        %1490 = vmatprep.subr.mxu0 0.0
        %1491 = vmatpush1.msra.mxu0 0.0
        %1492 = vmatprep.subr.mxu0 0.0
        %1493 = vmatpush1.msra.mxu0 0.0
        %1494 = vmatprep.subr.mxu0 0.0
        %1495 = vmatpush1.msra.mxu0 0.0
        %1496 = vmatprep.subr.mxu0 0.0
        %1497 = vmatpush1.msra.mxu0 0.0
        %1498 = vmatprep.subr.mxu0 0.0
        %1499 = vmatpush1.msra.mxu0 0.0
        %1500 = vmatprep.subr.mxu0 0.0
        %1501 = vmatpush1.msra.mxu0 0.0
        %1502 = vmatprep.subr.mxu0 0.0
        %1503 = vmatpush1.msra.mxu0 0.0
        %1504 = vmatprep.subr.mxu0 0.0
        %1505 = vmatpush1.msra.mxu0 0.0
        %1506 = vmatprep.subr.mxu0 0.0
        %1507 = vmatpush1.msra.mxu0 0.0
        %1508 = vmatprep.subr.mxu0 0.0
        %1509 = vmatpush1.msra.mxu0 0.0
        %1510 = vmatprep.subr.mxu0 0.0
        %1511 = vmatpush1.msra.mxu0 0.0
        %1512 = vmatprep.subr.mxu0 0.0
        %1513 = vmatpush1.msra.mxu0 0.0
        %1514 = vmatprep.subr.mxu0 0.0
        %1515 = vmatpush1.msra.mxu0 0.0
        %1516 = vmatprep.subr.mxu0 0.0
        %1517 = vmatpush1.msra.mxu0 0.0
        %1518 = vmatprep.subr.mxu0 0.0
        %1519 = vmatpush1.msra.mxu0 0.0
        %1520 = vmatprep.subr.mxu0 0.0
        %1521 = vmatpush1.msra.mxu0 0.0
        %1522 = vmatprep.subr.mxu0 0.0
        %1523 = vmatpush1.msra.mxu0 0.0
        %1524 = vmatprep.subr.mxu0 0.0
        %1525 = vmatpush1.msra.mxu0 0.0
        %1526 = vmatprep.mubr.f32.mxu0 0.0
        %1527 = vmatmul.mubr.f32.gmra.mrb[0].mxu0 %v1460
        %v1528 = vpop.f32.mrb[0].mxu0
        %v1529 = vadd.f32 0.0, %v1528
        %v1530 = vpop.f32.mrb[0].mxu0
        %v1531 = vadd.f32 0.0, %v1530
        %1532 = vdwg.mxu0
        %1533 = vmatprep.subr.mxu0 0.0
        %1534 = vmatpush1.msra.mxu0 %v1452
        %1535 = vmatprep.subr.mxu0 0.0
        %1536 = vmatpush1.msra.mxu0 0.0
        %1537 = vmatprep.subr.mxu0 0.0
        %1538 = vmatpush1.msra.mxu0 0.0
        %1539 = vmatprep.subr.mxu0 0.0
        %1540 = vmatpush1.msra.mxu0 0.0
        %1541 = vmatprep.subr.mxu0 0.0
        %1542 = vmatpush1.msra.mxu0 0.0
        %1543 = vmatprep.subr.mxu0 0.0
        %1544 = vmatpush1.msra.mxu0 0.0
        %1545 = vmatprep.subr.mxu0 0.0
        %1546 = vmatpush1.msra.mxu0 0.0
        %1547 = vmatprep.subr.mxu0 0.0
        %1548 = vmatpush1.msra.mxu0 0.0
        %1549 = vmatprep.subr.mxu0 0.0
        %1550 = vmatpush1.msra.mxu0 0.0
        %1551 = vmatprep.subr.mxu0 0.0
        %1552 = vmatpush1.msra.mxu0 0.0
        %1553 = vmatprep.subr.mxu0 0.0
        %1554 = vmatpush1.msra.mxu0 0.0
        %1555 = vmatprep.subr.mxu0 0.0
        %1556 = vmatpush1.msra.mxu0 0.0
        %1557 = vmatprep.subr.mxu0 0.0
        %1558 = vmatpush1.msra.mxu0 0.0
        %1559 = vmatprep.subr.mxu0 0.0
        %1560 = vmatpush1.msra.mxu0 0.0
        %1561 = vmatprep.subr.mxu0 0.0
        %1562 = vmatpush1.msra.mxu0 0.0
        %1563 = vmatprep.subr.mxu0 0.0
        %1564 = vmatpush1.msra.mxu0 0.0
        %1565 = vmatprep.subr.mxu0 0.0
        %1566 = vmatpush1.msra.mxu0 0.0
        %1567 = vmatprep.subr.mxu0 0.0
        %1568 = vmatpush1.msra.mxu0 0.0
        %1569 = vmatprep.subr.mxu0 0.0
        %1570 = vmatpush1.msra.mxu0 0.0
        %1571 = vmatprep.subr.mxu0 0.0
        %1572 = vmatpush1.msra.mxu0 0.0
        %1573 = vmatprep.subr.mxu0 0.0
        %1574 = vmatpush1.msra.mxu0 0.0
        %1575 = vmatprep.subr.mxu0 0.0
        %1576 = vmatpush1.msra.mxu0 0.0
        %1577 = vmatprep.subr.mxu0 0.0
        %1578 = vmatpush1.msra.mxu0 0.0
        %1579 = vmatprep.subr.mxu0 0.0
        %1580 = vmatpush1.msra.mxu0 0.0
        %1581 = vmatprep.subr.mxu0 0.0
        %1582 = vmatpush1.msra.mxu0 0.0
        %1583 = vmatprep.subr.mxu0 0.0
        %1584 = vmatpush1.msra.mxu0 0.0
        %1585 = vmatprep.subr.mxu0 0.0
        %1586 = vmatpush1.msra.mxu0 0.0
        %1587 = vmatprep.subr.mxu0 0.0
        %1588 = vmatpush1.msra.mxu0 0.0
        %1589 = vmatprep.subr.mxu0 0.0
        %1590 = vmatpush1.msra.mxu0 0.0
        %1591 = vmatprep.subr.mxu0 0.0
        %1592 = vmatpush1.msra.mxu0 0.0
        %1593 = vmatprep.subr.mxu0 0.0
        %1594 = vmatpush1.msra.mxu0 0.0
        %1595 = vmatprep.subr.mxu0 0.0
        %1596 = vmatpush1.msra.mxu0 0.0
        %1597 = vmatprep.mubr.f32.mxu0 0.0
        %1598 = vmatmul.mubr.f32.gmra.mrb[0].mxu0 %v1460
        %v1599 = vpop.f32.mrb[0].mxu0
        %v1600 = vadd.f32 0.0, %v1599
        %v1601 = vpop.f32.mrb[0].mxu0
        %1602 = vdwg.mxu0
        %v1603 = vadd.f32 %v1442, %v1529
        %v1604 = vadd.f32 %v1443, %v1531
        %v1605 = vadd.f32 %v1444, %v1600
        %v1606 = vld [vmem:[%s1] sm:$0xff]
        %1608 = vset.pattern.permute.xlu0 0
        %1609 = vperm.xlu0 %1608, %v1606
        %v1610 = vpop.permute.xlu0 %1609
        %v1612 = vadd.f32 %v1603, %v1610
        %v1613 = vadd.f32 %v1604, %v1610
        %v1614 = vadd.f32 %v1605, %v1610
        %v1615 = vmax.f32 %v1612, 0.0
        %v1616 = vmax.f32 %v1613, 0.0
        %v1617 = vmax.f32 %v1614, 0.0
        %v1618 = vadd.f32 %v1615, %v810
        %v1619 = vadd.f32 %v1616, %v811
        %v1620 = vadd.f32 %v1617, %v808
        %1621 = vst [vmem:[%s163] sm:$0xff] %v1618
        %1622 = vst [vmem:[%s163 + $0x8] sm:$0xff] %v1619
        %vm1623 = vcmask 261120
        %1624 = vst.msk [vmem:[%s163 + $0x10] sm:$0xff] %vm1623, %v1620
        %s1625 = sand.u32 %s93, 1
        %s1626 = scalar_lea.sflag [#allocation3], %s1625
        %s1627 = sand.u32 %s93, 1
        %s1628 = smul.addr %s1627, 24
        %s1629 = scalar_lea.vmem [#allocation2], %s1628
        // Predicated region
        $region33: #{tpu_custom_call.1} parent=31 // pred_check
          %p1630 = pneg %p103
        $region34: #{tpu_custom_call.1} parent=31 // pred_check_branch
          %1632 = sbr.rel (%p1630) target = $region36
        $region35: #{tpu_custom_call.1} parent=31 // pred_region
          %s1634 = ssub.s32 384, 384
          %1635 = vsyncadd %s1626, %s1634
          %s1636 = smul.addr %s17, 3
          %s1637 = smul.addr %s1636, 128
          %s1638 = scalar_lea.hbm %s3, %s1637
          %s1640 = sshll.u32 %s1629, 4
          %s1641 = int_to_ptr.vmem [resolvable:$true] %s1640
          %1643 = dma.vmem_to_hbm [thread:$0]  %s1641, 384, %s1638, %s1626
        $region36: #{tpu_custom_call.1} parent=31 // pred_fallthru
          _
      $region32: #{tpu_custom_call.1} parent=5 // pred_fallthru
        _
      %p1644 = scmp.le.s32.totalorder 2, %s12
      // Predicated region
      $region37: #{tpu_custom_call.1} parent=5 // pred_check
        %p1645 = pneg %p1644
      $region38: #{tpu_custom_call.1} parent=5 // pred_check_branch
        %1647 = sbr.rel (%p1645) target = $region40
      $region39: #{tpu_custom_call.1} parent=5 // pred_region
        %s1648 = ssub.s32 %s12, 2
        // Predicated region
        $region41: #{tpu_custom_call.1} parent=39 // pred_check
          %p1649 = pneg %p109
        $region42: #{tpu_custom_call.1} parent=39 // pred_check_branch
          %1651 = sbr.rel (%p1649) target = $region44
        $region43: #{tpu_custom_call.1} parent=39 // pred_region
          %s1652 = sand.u32 %s94, 1
          %s1653 = scalar_lea.sflag [#allocation3], %s1652
          %s1654 = sand.u32 %s94, 1
          %s1655 = smul.addr %s1654, 24
          %s1656 = scalar_lea.vmem [#allocation2], %s1655
          %1657 = dma.done %s1653, 384
        $region44: #{tpu_custom_call.1} parent=39 // pred_fallthru
          _
      $region40: #{tpu_custom_call.1} parent=5 // pred_fallthru
        _
    $region6: #{tpu_custom_call.1} parent=1 // loop_footer
      %s16 = sadd.s32 1, %s12
    $region7: #{tpu_custom_call.1} parent=1 // loop_footer_branch
      %11 = sbr.rel target = $region3
    $region8: #{tpu_custom_call.1} parent=1 // loop_exit
      _
    %1658 = vsyncpa [#allocation3], 1
    %s1659 = scalar_lea.sflag [#allocation3], 1
    %1660 = vsyncpa %s1659, 1

</llo_original>
